<compile_context>
chip_gen: v7x
topology: tpu7x:2x2x1
jax: 0.10.0
libtpu: 0.0.40
codegen_flags: <defaults>
</compile_context>

<pallas_src>
import functools

import numpy as np
import jax
import jax.numpy as jnp
from jax import lax
from jax.experimental import pallas as pl
from jax.experimental.pallas import tpu as pltpu

LANE = 128        # padded hidden / output width (one f32 lane tile per gate)
SUBLANE = 8       # f32 sublane count; batch is padded up to a multiple of this
MAX_TIME_CHUNK = 128   # timesteps held resident per grid iteration (VMEM-safe on v7x)


def rnn_chunk_kernel(x_ref, h0_ref,
                     w1_ref, b1_ref,
                     wih_ref, bih_ref,
                     whh_ref, bhh_ref,
                     w2_ref, b2_ref,
                     a_ref, hout_ref,
                     gi_scr, hall_scr,
                     *, unroll):
    """One T-chunk per grid iteration; recurrence runs in an in-kernel fori_loop."""
    c = pl.program_id(0)
    TC, BP, S = x_ref.shape
    HP = hout_ref.shape[-1]          # padded hidden (== LANE)
    AP = a_ref.shape[-1]             # padded output (== LANE)

    # Chunk 0: seed the resident hidden-state block from h0; afterwards hout_ref
    # carries h across chunks (constant out index_map -> VMEM-resident).
    @pl.when(c == 0)
    def _():
        hout_ref[...] = h0_ref[...]

    # ---- Non-recurrent projections, batched over all TC timesteps ----------------
    x = x_ref[...].reshape(TC * BP, S)
    x = jnp.dot(x, w1_ref[...], preferred_element_type=jnp.float32) + b1_ref[...]
    x = jnp.maximum(x, 0.0)                                           # fc1 + ReLU
    gi = jnp.dot(x, wih_ref[...], preferred_element_type=jnp.float32) + bih_ref[...]
    gi_scr[...] = gi.reshape(TC, BP, 3 * HP)                          # per-step input gates

    # Hoisted bias broadcast (kept out of the recurrent loop).
    bhh = jnp.broadcast_to(bhh_ref[...], (BP, 3 * HP))

    # ---- Serial recurrence: one MXU matmul per step -------------------------------
    def step(t, h):
        gi_t = gi_scr[t]                                              # (BP, 3*HP)
        gh = jnp.dot(h, whh_ref[...], preferred_element_type=jnp.float32) + bhh
        r = jax.nn.sigmoid(gi_t[:, 0:HP] + gh[:, 0:HP])
        z = jax.nn.sigmoid(gi_t[:, HP:2 * HP] + gh[:, HP:2 * HP])
        n = jnp.tanh(gi_t[:, 2 * HP:3 * HP] + r * gh[:, 2 * HP:3 * HP])
        h_new = (1.0 - z) * n + z * h
        hall_scr[t] = h_new                                           # stash for batched fc2
        return h_new

    h_final = lax.fori_loop(0, TC, step, hout_ref[...], unroll=unroll)
    hout_ref[...] = h_final

    # ---- fc2 for all timesteps of the chunk in one batched matmul -----------------
    h_all = hall_scr[...].reshape(TC * BP, HP)
    a = jnp.dot(h_all, w2_ref[...], preferred_element_type=jnp.float32) + b2_ref[...]
    a_ref[...] = a.reshape(TC, BP, AP).astype(a_ref.dtype)


def prepare_tpu_params(params, hp=LANE, ap=LANE):
    """PyTorch-layout params -> transposed, zero-padded, gate-tile-aligned TPU layout."""
    w1, b1, wih, bih, whh, bhh, w2, b2 = params
    H, S = w1.shape
    A = w2.shape[0]
    assert H <= hp and A <= ap
    f32 = jnp.float32

    w1p = jnp.zeros((S, hp), f32).at[:, :H].set(w1.T)
    b1p = jnp.zeros((1, hp), f32).at[0, :H].set(b1)

    wihp = jnp.zeros((hp, 3 * hp), f32)
    whhp = jnp.zeros((hp, 3 * hp), f32)
    bihp = jnp.zeros((1, 3 * hp), f32)
    bhhp = jnp.zeros((1, 3 * hp), f32)
    for g in range(3):  # gate order (r, z, n); one 128-lane tile per gate
        wihp = wihp.at[:H, g * hp:g * hp + H].set(wih[g * H:(g + 1) * H, :].T)
        whhp = whhp.at[:H, g * hp:g * hp + H].set(whh[g * H:(g + 1) * H, :].T)
        bihp = bihp.at[0, g * hp:g * hp + H].set(bih[g * H:(g + 1) * H])
        bhhp = bhhp.at[0, g * hp:g * hp + H].set(bhh[g * H:(g + 1) * H])

    w2p = jnp.zeros((hp, ap), f32).at[:H, :A].set(w2.T)
    b2p = jnp.zeros((1, ap), f32).at[0, :A].set(b2)
    return (w1p, b1p, wihp, bihp, whhp, bhhp, w2p, b2p)


def _choose_time_chunk(T, max_chunk=MAX_TIME_CHUNK):
    """Largest chunk <= max_chunk that divides T (whole sequence for small T)."""
    if T <= max_chunk:
        return T
    for tc in range(max_chunk, 0, -1):
        if T % tc == 0:
            return tc
    return T


def rnn_model_forward_seq(inputs_seq, hidden_state, tpu_params, *, hidden, n_out):
    """inputs_seq: (T, B, state_dim), hidden_state: (B, hidden) ->
       (a_seq (T, B, n_out), h_T (B, hidden))."""
    T, B, S = inputs_seq.shape
    hp = ap = LANE
    BP = max(SUBLANE, ((B + SUBLANE - 1) // SUBLANE) * SUBLANE)
    TC = _choose_time_chunk(T)
    num_chunks = T // TC
    unroll = True if TC <= 32 else 8

    hidden_state = hidden_state.reshape(-1, hidden)  # mirrors h_in = hidden_state.reshape(-1, H)

    # Pad batch to full sublanes and hidden/output to a full lane tile; padded hidden
    # lanes stay zero through the recurrence, padded batch rows are sliced off below.
    x_pad = jnp.zeros((T, BP, S), jnp.float32).at[:, :B, :].set(inputs_seq)
    h_pad = jnp.zeros((BP, hp), jnp.float32).at[:B, :hidden].set(hidden_state)

    def resident(arr):  # weight stays in VMEM for the whole grid
        nd = arr.ndim
        return pl.BlockSpec(arr.shape, lambda c, nd=nd: (0,) * nd)

    kernel = functools.partial(rnn_chunk_kernel, unroll=unroll)

    a_seq, h_out = pl.pallas_call(
        kernel,
        grid=(num_chunks,),
        in_specs=[pl.BlockSpec((TC, BP, S), lambda c: (c, 0, 0)),   # stream x per chunk
                  pl.BlockSpec((BP, hp), lambda c: (0, 0))]         # h0 (read once)
                 + [resident(w) for w in tpu_params],
        out_specs=(pl.BlockSpec((TC, BP, ap), lambda c: (c, 0, 0)),  # a per chunk
                   pl.BlockSpec((BP, hp), lambda c: (0, 0))),        # final h (resident)
        out_shape=(jax.ShapeDtypeStruct((T, BP, ap), jnp.float32),
                   jax.ShapeDtypeStruct((BP, hp), jnp.float32)),
        scratch_shapes=[pltpu.VMEM((TC, BP, 3 * hp), jnp.float32),   # precomputed gi
                        pltpu.VMEM((TC, BP, hp), jnp.float32)],      # per-step h (for batched fc2)
        input_output_aliases={1: 1},                                 # reuse h0 buffer for h_out
        compiler_params=pltpu.CompilerParams(
            dimension_semantics=("arbitrary",)),                     # recurrence -> sequential
    )(x_pad, h_pad, *tpu_params)

    return a_seq[:, :B, :n_out], h_out[:B, :hidden]


def rnn_model_forward(inputs, hidden_state, tpu_params, *, hidden, n_out):
    """Single step, identical to RNNModel.forward(inputs, hidden_state) -> (a, h)."""
    a_seq, h = rnn_model_forward_seq(inputs[None], hidden_state, tpu_params,
                                     hidden=hidden, n_out=n_out)
    return a_seq[0], h


def make_params(key, state_dim, hidden, n_out):
    """PyTorch-layout parameters (weight: (out, in)), deterministic uniform init."""
    ks = jax.random.split(key, 8)

    def u(k, shape, fan_in):
        bound = 1.0 / np.sqrt(fan_in)
        return jax.random.uniform(k, shape, jnp.float32, -bound, bound)

    w1 = u(ks[0], (hidden, state_dim), state_dim)
    b1 = u(ks[1], (hidden,), state_dim)
    wih = u(ks[2], (3 * hidden, hidden), hidden)
    bih = u(ks[3], (3 * hidden,), hidden)
    whh = u(ks[4], (3 * hidden, hidden), hidden)
    bhh = u(ks[5], (3 * hidden,), hidden)
    w2 = u(ks[6], (n_out, hidden), hidden)
    b2 = u(ks[7], (n_out,), hidden)
    return (w1, b1, wih, bih, whh, bhh, w2, b2)


def reference_step(inputs, h, params):
    """Pure-JAX replica of PyTorch Linear + GRUCell + Linear (one step)."""
    w1, b1, wih, bih, whh, bhh, w2, b2 = params
    H = h.shape[-1]
    x = jnp.maximum(inputs @ w1.T + b1, 0.0)
    gi = x @ wih.T + bih
    gh = h @ whh.T + bhh
    r = jax.nn.sigmoid(gi[:, :H] + gh[:, :H])
    z = jax.nn.sigmoid(gi[:, H:2 * H] + gh[:, H:2 * H])
    n = jnp.tanh(gi[:, 2 * H:] + r * gh[:, 2 * H:])
    h_new = (1.0 - z) * n + z * h
    a = h_new @ w2.T + b2
    return a, h_new


if __name__ == "__main__":
    # args.state_shape = (4, 4) -> state_dim = 16; rnn_hidden_dim = 32;
    # n_agents = 4, n_actions = 8 -> fc2 output dim = 32.  T steps share one kernel launch.
    batch = 2
    state_dim = 16
    hidden = 32
    n_agents, n_actions = 4, 8
    n_out = n_agents * n_actions
    T = 8

    key = jax.random.PRNGKey(0)
    k_x, k_h, k_p = jax.random.split(key, 3)

    inputs_seq = jax.random.normal(k_x, (T, batch, state_dim), jnp.float32)
    h0 = jax.random.normal(k_h, (batch, hidden), jnp.float32)
    params = make_params(k_p, state_dim, hidden, n_out)
    tpu_params = prepare_tpu_params(params)

    # Sequence mode: whole time loop inside one grid step.
    a_seq, h_T = rnn_model_forward_seq(inputs_seq, h0, tpu_params, hidden=hidden, n_out=n_out)
    jax.block_until_ready((a_seq, h_T))
    assert a_seq.shape == (T, batch, n_out) and h_T.shape == (batch, hidden)

    # Reference: step the pure-JAX cell T times.
    h_ref = h0
    a_refs = []
    for t in range(T):
        a_t, h_ref = reference_step(inputs_seq[t], h_ref, params)
        a_refs.append(a_t)
    a_ref = jnp.stack(a_refs, axis=0)

    # Tolerance absorbs MXU f32 pass/accumulation-order differences over the recurrence.
    np.testing.assert_allclose(np.asarray(a_seq), np.asarray(a_ref), rtol=1e-4, atol=1e-4)
    np.testing.assert_allclose(np.asarray(h_T), np.asarray(h_ref), rtol=1e-4, atol=1e-4)

    # Single-step mode (matches RNNModel.forward exactly).
    a1, h1 = rnn_model_forward(inputs_seq[0], h0, tpu_params, hidden=hidden, n_out=n_out)
    jax.block_until_ready((a1, h1))
    a1_ref, h1_ref = reference_step(inputs_seq[0], h0, params)
    np.testing.assert_allclose(np.asarray(a1), np.asarray(a1_ref), rtol=1e-4, atol=1e-4)
    np.testing.assert_allclose(np.asarray(h1), np.asarray(h1_ref), rtol=1e-4, atol=1e-4)

    print("KERNEL_OK")
</pallas_src>

<mosaic_0001>
module attributes {stable_mosaic.version = 11 : i64} {
  func.func @rnn_chunk_kernel(%arg0: i32, %arg1: memref<8x8x16xf32, #tpu.memory_space<vmem>>, %arg2: memref<8x128xf32, #tpu.memory_space<vmem>>, %arg3: memref<16x128xf32, #tpu.memory_space<vmem>>, %arg4: memref<1x128xf32, #tpu.memory_space<vmem>>, %arg5: memref<128x384xf32, #tpu.memory_space<vmem>>, %arg6: memref<1x384xf32, #tpu.memory_space<vmem>>, %arg7: memref<128x384xf32, #tpu.memory_space<vmem>>, %arg8: memref<1x384xf32, #tpu.memory_space<vmem>>, %arg9: memref<128x128xf32, #tpu.memory_space<vmem>>, %arg10: memref<1x128xf32, #tpu.memory_space<vmem>>, %arg11: memref<8x8x128xf32, #tpu.memory_space<vmem>>, %arg12: memref<8x128xf32, #tpu.memory_space<vmem>>, %arg13: memref<8x8x384xf32, #tpu.memory_space<vmem>>, %arg14: memref<8x8x128xf32, #tpu.memory_space<vmem>>) attributes {dimension_semantics = [#tpu.dimension_semantics<arbitrary>], iteration_bounds = array<i64: 1>, scalar_prefetch = 0 : i64, scratch_operands = 2 : i64, tpu.core_type = #tpu.core_type<tc>, window_params = [{transform_indices = @transform_0, window_bounds = array<i64: 8, 8, 16>}, {pipeline_mode = #tpu.pipeline_mode<synchronous>, transform_indices = @transform_1, window_bounds = array<i64: 8, 128>}, {pipeline_mode = #tpu.pipeline_mode<synchronous>, transform_indices = @transform_2, window_bounds = array<i64: 16, 128>}, {pipeline_mode = #tpu.pipeline_mode<synchronous>, transform_indices = @transform_3, window_bounds = array<i64: 1, 128>}, {pipeline_mode = #tpu.pipeline_mode<synchronous>, transform_indices = @transform_4, window_bounds = array<i64: 128, 384>}, {pipeline_mode = #tpu.pipeline_mode<synchronous>, transform_indices = @transform_5, window_bounds = array<i64: 1, 384>}, {pipeline_mode = #tpu.pipeline_mode<synchronous>, transform_indices = @transform_6, window_bounds = array<i64: 128, 384>}, {pipeline_mode = #tpu.pipeline_mode<synchronous>, transform_indices = @transform_7, window_bounds = array<i64: 1, 384>}, {pipeline_mode = #tpu.pipeline_mode<synchronous>, transform_indices = @transform_8, window_bounds = array<i64: 128, 128>}, {pipeline_mode = #tpu.pipeline_mode<synchronous>, transform_indices = @transform_9, window_bounds = array<i64: 1, 128>}, {transform_indices = @transform_10, window_bounds = array<i64: 8, 8, 128>}, {pipeline_mode = #tpu.pipeline_mode<synchronous>, transform_indices = @transform_11, window_bounds = array<i64: 8, 128>}]} {
    %c0_i32 = arith.constant 0 : i32
    %0 = arith.cmpi eq, %arg0, %c0_i32 : i32
    %1 = arith.extui %0 : i1 to i32
    %c0_i32_0 = arith.constant 0 : i32
    %2 = arith.cmpi ne, %1, %c0_i32_0 : i32
    scf.if %2 {
      %c0_114 = arith.constant 0 : index
      %c0_115 = arith.constant 0 : index
      %321 = vector.load %arg2[%c0_114, %c0_115] : memref<8x128xf32, #tpu.memory_space<vmem>>, vector<8x128xf32>
      %c0_116 = arith.constant 0 : index
      %c0_117 = arith.constant 0 : index
      %322 = vector.load %arg12[%c0_116, %c0_117] : memref<8x128xf32, #tpu.memory_space<vmem>>, vector<8x128xf32>
      tpu.vector_store %arg12[%c0_116, %c0_117], %321 {strides = array<i32>} : memref<8x128xf32, #tpu.memory_space<vmem>>, vector<8x128xf32>,
    } else {
    }
    %c0 = arith.constant 0 : index
    %c0_1 = arith.constant 0 : index
    %c0_2 = arith.constant 0 : index
    %3 = vector.load %arg1[%c0, %c0_1, %c0_2] : memref<8x8x16xf32, #tpu.memory_space<vmem>>, vector<8x8x16xf32>
    %4 = vector.shape_cast %3 : vector<8x8x16xf32> to vector<64x16xf32>
    %c0_3 = arith.constant 0 : index
    %c0_4 = arith.constant 0 : index
    %5 = vector.load %arg3[%c0_3, %c0_4] : memref<16x128xf32, #tpu.memory_space<vmem>>, vector<16x128xf32>
    %cst = arith.constant dense<0.000000e+00> : vector<64x128xf32>
    %6 = tpu.matmul %4, %5, %cst {dimension_numbers = #tpu.dot_dimension_numbers<[1], [0], [0], [1], [0, 0, 1, 1], [], []>} : vector<64x16xf32>, vector<16x128xf32>, vector<64x128xf32> -> vector<64x128xf32>
    %c0_5 = arith.constant 0 : index
    %c0_6 = arith.constant 0 : index
    %7 = vector.load %arg4[%c0_5, %c0_6] : memref<1x128xf32, #tpu.memory_space<vmem>>, vector<1x128xf32>
    %8 = vector.broadcast %7 : vector<1x128xf32> to vector<64x128xf32>
    %9 = arith.addf %6, %8 : vector<64x128xf32>
    %cst_7 = arith.constant 0.000000e+00 : f32
    %10 = vector.broadcast %cst_7 : f32 to vector<64x128xf32>
    %11 = arith.maximumf %9, %10 : vector<64x128xf32>
    %c0_8 = arith.constant 0 : index
    %c0_9 = arith.constant 0 : index
    %12 = vector.load %arg5[%c0_8, %c0_9] : memref<128x384xf32, #tpu.memory_space<vmem>>, vector<128x384xf32>
    %cst_10 = arith.constant dense<0.000000e+00> : vector<64x384xf32>
    %13 = tpu.matmul %11, %12, %cst_10 {dimension_numbers = #tpu.dot_dimension_numbers<[1], [0], [0], [1], [0, 0, 1, 1], [], []>} : vector<64x128xf32>, vector<128x384xf32>, vector<64x384xf32> -> vector<64x384xf32>
    %c0_11 = arith.constant 0 : index
    %c0_12 = arith.constant 0 : index
    %14 = vector.load %arg6[%c0_11, %c0_12] : memref<1x384xf32, #tpu.memory_space<vmem>>, vector<1x384xf32>
    %15 = vector.broadcast %14 : vector<1x384xf32> to vector<64x384xf32>
    %16 = arith.addf %13, %15 : vector<64x384xf32>
    %17 = vector.shape_cast %16 : vector<64x384xf32> to vector<8x8x384xf32>
    %c0_13 = arith.constant 0 : index
    %c0_14 = arith.constant 0 : index
    %c0_15 = arith.constant 0 : index
    %18 = vector.load %arg13[%c0_13, %c0_14, %c0_15] : memref<8x8x384xf32, #tpu.memory_space<vmem>>, vector<8x8x384xf32>
    tpu.vector_store %arg13[%c0_13, %c0_14, %c0_15], %17 {strides = array<i32>} : memref<8x8x384xf32, #tpu.memory_space<vmem>>, vector<8x8x384xf32>,
    %c0_16 = arith.constant 0 : index
    %c0_17 = arith.constant 0 : index
    %19 = vector.load %arg8[%c0_16, %c0_17] : memref<1x384xf32, #tpu.memory_space<vmem>>, vector<1x384xf32>
    %20 = vector.shape_cast %19 : vector<1x384xf32> to vector<1x384xf32>
    %21 = vector.broadcast %20 : vector<1x384xf32> to vector<8x384xf32>
    %c0_18 = arith.constant 0 : index
    %c0_19 = arith.constant 0 : index
    %22 = vector.load %arg12[%c0_18, %c0_19] : memref<8x128xf32, #tpu.memory_space<vmem>>, vector<8x128xf32>
    %c0_i32_20 = arith.constant 0 : i32
    %23 = arith.index_cast %c0_i32_20 : i32 to index
    %c0_21 = arith.constant 0 : index
    %c0_22 = arith.constant 0 : index
    %24 = vector.load %arg13[%23, %c0_21, %c0_22] : memref<8x8x384xf32, #tpu.memory_space<vmem>>, vector<1x8x384xf32>
    %25 = vector.shape_cast %24 : vector<1x8x384xf32> to vector<8x384xf32>
    %c0_23 = arith.constant 0 : index
    %c0_24 = arith.constant 0 : index
    %26 = vector.load %arg7[%c0_23, %c0_24] : memref<128x384xf32, #tpu.memory_space<vmem>>, vector<128x384xf32>
    %cst_25 = arith.constant dense<0.000000e+00> : vector<8x384xf32>
    %27 = tpu.matmul %22, %26, %cst_25 {dimension_numbers = #tpu.dot_dimension_numbers<[1], [0], [0], [1], [0, 0, 1, 1], [], []>} : vector<8x128xf32>, vector<128x384xf32>, vector<8x384xf32> -> vector<8x384xf32>
    %28 = arith.addf %27, %21 : vector<8x384xf32>
    %29 = vector.extract_strided_slice %25 {offsets = [0, 0], sizes = [8, 128], strides = [1, 1]} : vector<8x384xf32> to vector<8x128xf32>
    %30 = vector.extract_strided_slice %28 {offsets = [0, 0], sizes = [8, 128], strides = [1, 1]} : vector<8x384xf32> to vector<8x128xf32>
    %31 = arith.addf %29, %30 : vector<8x128xf32>
    %32 = arith.negf %31 : vector<8x128xf32>
    %33 = math.exp %32 : vector<8x128xf32>
    %cst_26 = arith.constant 1.000000e+00 : f32
    %34 = vector.broadcast %cst_26 : f32 to vector<8x128xf32>
    %35 = arith.addf %34, %33 : vector<8x128xf32>
    %36 = arith.divf %34, %35 : vector<8x128xf32>
    %37 = vector.extract_strided_slice %25 {offsets = [0, 128], sizes = [8, 128], strides = [1, 1]} : vector<8x384xf32> to vector<8x128xf32>
    %38 = vector.extract_strided_slice %28 {offsets = [0, 128], sizes = [8, 128], strides = [1, 1]} : vector<8x384xf32> to vector<8x128xf32>
    %39 = arith.addf %37, %38 : vector<8x128xf32>
    %40 = arith.negf %39 : vector<8x128xf32>
    %41 = math.exp %40 : vector<8x128xf32>
    %cst_27 = arith.constant 1.000000e+00 : f32
    %42 = vector.broadcast %cst_27 : f32 to vector<8x128xf32>
    %43 = arith.addf %42, %41 : vector<8x128xf32>
    %44 = arith.divf %42, %43 : vector<8x128xf32>
    %45 = vector.extract_strided_slice %25 {offsets = [0, 256], sizes = [8, 128], strides = [1, 1]} : vector<8x384xf32> to vector<8x128xf32>
    %46 = vector.extract_strided_slice %28 {offsets = [0, 256], sizes = [8, 128], strides = [1, 1]} : vector<8x384xf32> to vector<8x128xf32>
    %47 = arith.mulf %36, %46 : vector<8x128xf32>
    %48 = arith.addf %45, %47 : vector<8x128xf32>
    %49 = math.tanh %48 : vector<8x128xf32>
    %cst_28 = arith.constant 1.000000e+00 : f32
    %50 = vector.broadcast %cst_28 : f32 to vector<8x128xf32>
    %51 = arith.subf %50, %44 : vector<8x128xf32>
    %52 = arith.mulf %51, %49 : vector<8x128xf32>
    %53 = arith.mulf %44, %22 : vector<8x128xf32>
    %54 = arith.addf %52, %53 : vector<8x128xf32>
    %55 = arith.index_cast %c0_i32_20 : i32 to index
    %c0_29 = arith.constant 0 : index
    %c0_30 = arith.constant 0 : index
    %56 = vector.load %arg14[%55, %c0_29, %c0_30] : memref<8x8x128xf32, #tpu.memory_space<vmem>>, vector<1x8x128xf32>
    %57 = vector.shape_cast %56 : vector<1x8x128xf32> to vector<8x128xf32>
    %58 = vector.shape_cast %54 : vector<8x128xf32> to vector<1x8x128xf32>
    tpu.vector_store %arg14[%55, %c0_29, %c0_30], %58 {strides = array<i32>} : memref<8x8x128xf32, #tpu.memory_space<vmem>>, vector<1x8x128xf32>,
    %c1_i32 = arith.constant 1 : i32
    %59 = arith.index_cast %c1_i32 : i32 to index
    %c0_31 = arith.constant 0 : index
    %c0_32 = arith.constant 0 : index
    %60 = vector.load %arg13[%59, %c0_31, %c0_32] : memref<8x8x384xf32, #tpu.memory_space<vmem>>, vector<1x8x384xf32>
    %61 = vector.shape_cast %60 : vector<1x8x384xf32> to vector<8x384xf32>
    %c0_33 = arith.constant 0 : index
    %c0_34 = arith.constant 0 : index
    %62 = vector.load %arg7[%c0_33, %c0_34] : memref<128x384xf32, #tpu.memory_space<vmem>>, vector<128x384xf32>
    %cst_35 = arith.constant dense<0.000000e+00> : vector<8x384xf32>
    %63 = tpu.matmul %54, %62, %cst_35 {dimension_numbers = #tpu.dot_dimension_numbers<[1], [0], [0], [1], [0, 0, 1, 1], [], []>} : vector<8x128xf32>, vector<128x384xf32>, vector<8x384xf32> -> vector<8x384xf32>
    %64 = arith.addf %63, %21 : vector<8x384xf32>
    %65 = vector.extract_strided_slice %61 {offsets = [0, 0], sizes = [8, 128], strides = [1, 1]} : vector<8x384xf32> to vector<8x128xf32>
    %66 = vector.extract_strided_slice %64 {offsets = [0, 0], sizes = [8, 128], strides = [1, 1]} : vector<8x384xf32> to vector<8x128xf32>
    %67 = arith.addf %65, %66 : vector<8x128xf32>
    %68 = arith.negf %67 : vector<8x128xf32>
    %69 = math.exp %68 : vector<8x128xf32>
    %cst_36 = arith.constant 1.000000e+00 : f32
    %70 = vector.broadcast %cst_36 : f32 to vector<8x128xf32>
    %71 = arith.addf %70, %69 : vector<8x128xf32>
    %72 = arith.divf %70, %71 : vector<8x128xf32>
    %73 = vector.extract_strided_slice %61 {offsets = [0, 128], sizes = [8, 128], strides = [1, 1]} : vector<8x384xf32> to vector<8x128xf32>
    %74 = vector.extract_strided_slice %64 {offsets = [0, 128], sizes = [8, 128], strides = [1, 1]} : vector<8x384xf32> to vector<8x128xf32>
    %75 = arith.addf %73, %74 : vector<8x128xf32>
    %76 = arith.negf %75 : vector<8x128xf32>
    %77 = math.exp %76 : vector<8x128xf32>
    %cst_37 = arith.constant 1.000000e+00 : f32
    %78 = vector.broadcast %cst_37 : f32 to vector<8x128xf32>
    %79 = arith.addf %78, %77 : vector<8x128xf32>
    %80 = arith.divf %78, %79 : vector<8x128xf32>
    %81 = vector.extract_strided_slice %61 {offsets = [0, 256], sizes = [8, 128], strides = [1, 1]} : vector<8x384xf32> to vector<8x128xf32>
    %82 = vector.extract_strided_slice %64 {offsets = [0, 256], sizes = [8, 128], strides = [1, 1]} : vector<8x384xf32> to vector<8x128xf32>
    %83 = arith.mulf %72, %82 : vector<8x128xf32>
    %84 = arith.addf %81, %83 : vector<8x128xf32>
    %85 = math.tanh %84 : vector<8x128xf32>
    %cst_38 = arith.constant 1.000000e+00 : f32
    %86 = vector.broadcast %cst_38 : f32 to vector<8x128xf32>
    %87 = arith.subf %86, %80 : vector<8x128xf32>
    %88 = arith.mulf %87, %85 : vector<8x128xf32>
    %89 = arith.mulf %80, %54 : vector<8x128xf32>
    %90 = arith.addf %88, %89 : vector<8x128xf32>
    %91 = arith.index_cast %c1_i32 : i32 to index
    %c0_39 = arith.constant 0 : index
    %c0_40 = arith.constant 0 : index
    %92 = vector.load %arg14[%91, %c0_39, %c0_40] : memref<8x8x128xf32, #tpu.memory_space<vmem>>, vector<1x8x128xf32>
    %93 = vector.shape_cast %92 : vector<1x8x128xf32> to vector<8x128xf32>
    %94 = vector.shape_cast %90 : vector<8x128xf32> to vector<1x8x128xf32>
    tpu.vector_store %arg14[%91, %c0_39, %c0_40], %94 {strides = array<i32>} : memref<8x8x128xf32, #tpu.memory_space<vmem>>, vector<1x8x128xf32>,
    %c2_i32 = arith.constant 2 : i32
    %95 = arith.index_cast %c2_i32 : i32 to index
    %c0_41 = arith.constant 0 : index
    %c0_42 = arith.constant 0 : index
    %96 = vector.load %arg13[%95, %c0_41, %c0_42] : memref<8x8x384xf32, #tpu.memory_space<vmem>>, vector<1x8x384xf32>
    %97 = vector.shape_cast %96 : vector<1x8x384xf32> to vector<8x384xf32>
    %c0_43 = arith.constant 0 : index
    %c0_44 = arith.constant 0 : index
    %98 = vector.load %arg7[%c0_43, %c0_44] : memref<128x384xf32, #tpu.memory_space<vmem>>, vector<128x384xf32>
    %cst_45 = arith.constant dense<0.000000e+00> : vector<8x384xf32>
    %99 = tpu.matmul %90, %98, %cst_45 {dimension_numbers = #tpu.dot_dimension_numbers<[1], [0], [0], [1], [0, 0, 1, 1], [], []>} : vector<8x128xf32>, vector<128x384xf32>, vector<8x384xf32> -> vector<8x384xf32>
    %100 = arith.addf %99, %21 : vector<8x384xf32>
    %101 = vector.extract_strided_slice %97 {offsets = [0, 0], sizes = [8, 128], strides = [1, 1]} : vector<8x384xf32> to vector<8x128xf32>
    %102 = vector.extract_strided_slice %100 {offsets = [0, 0], sizes = [8, 128], strides = [1, 1]} : vector<8x384xf32> to vector<8x128xf32>
    %103 = arith.addf %101, %102 : vector<8x128xf32>
    %104 = arith.negf %103 : vector<8x128xf32>
    %105 = math.exp %104 : vector<8x128xf32>
    %cst_46 = arith.constant 1.000000e+00 : f32
    %106 = vector.broadcast %cst_46 : f32 to vector<8x128xf32>
    %107 = arith.addf %106, %105 : vector<8x128xf32>
    %108 = arith.divf %106, %107 : vector<8x128xf32>
    %109 = vector.extract_strided_slice %97 {offsets = [0, 128], sizes = [8, 128], strides = [1, 1]} : vector<8x384xf32> to vector<8x128xf32>
    %110 = vector.extract_strided_slice %100 {offsets = [0, 128], sizes = [8, 128], strides = [1, 1]} : vector<8x384xf32> to vector<8x128xf32>
    %111 = arith.addf %109, %110 : vector<8x128xf32>
    %112 = arith.negf %111 : vector<8x128xf32>
    %113 = math.exp %112 : vector<8x128xf32>
    %cst_47 = arith.constant 1.000000e+00 : f32
    %114 = vector.broadcast %cst_47 : f32 to vector<8x128xf32>
    %115 = arith.addf %114, %113 : vector<8x128xf32>
    %116 = arith.divf %114, %115 : vector<8x128xf32>
    %117 = vector.extract_strided_slice %97 {offsets = [0, 256], sizes = [8, 128], strides = [1, 1]} : vector<8x384xf32> to vector<8x128xf32>
    %118 = vector.extract_strided_slice %100 {offsets = [0, 256], sizes = [8, 128], strides = [1, 1]} : vector<8x384xf32> to vector<8x128xf32>
    %119 = arith.mulf %108, %118 : vector<8x128xf32>
    %120 = arith.addf %117, %119 : vector<8x128xf32>
    %121 = math.tanh %120 : vector<8x128xf32>
    %cst_48 = arith.constant 1.000000e+00 : f32
    %122 = vector.broadcast %cst_48 : f32 to vector<8x128xf32>
    %123 = arith.subf %122, %116 : vector<8x128xf32>
    %124 = arith.mulf %123, %121 : vector<8x128xf32>
    %125 = arith.mulf %116, %90 : vector<8x128xf32>
    %126 = arith.addf %124, %125 : vector<8x128xf32>
    %127 = arith.index_cast %c2_i32 : i32 to index
    %c0_49 = arith.constant 0 : index
    %c0_50 = arith.constant 0 : index
    %128 = vector.load %arg14[%127, %c0_49, %c0_50] : memref<8x8x128xf32, #tpu.memory_space<vmem>>, vector<1x8x128xf32>
    %129 = vector.shape_cast %128 : vector<1x8x128xf32> to vector<8x128xf32>
    %130 = vector.shape_cast %126 : vector<8x128xf32> to vector<1x8x128xf32>
    tpu.vector_store %arg14[%127, %c0_49, %c0_50], %130 {strides = array<i32>} : memref<8x8x128xf32, #tpu.memory_space<vmem>>, vector<1x8x128xf32>,
    %c3_i32 = arith.constant 3 : i32
    %131 = arith.index_cast %c3_i32 : i32 to index
    %c0_51 = arith.constant 0 : index
    %c0_52 = arith.constant 0 : index
    %132 = vector.load %arg13[%131, %c0_51, %c0_52] : memref<8x8x384xf32, #tpu.memory_space<vmem>>, vector<1x8x384xf32>
    %133 = vector.shape_cast %132 : vector<1x8x384xf32> to vector<8x384xf32>
    %c0_53 = arith.constant 0 : index
    %c0_54 = arith.constant 0 : index
    %134 = vector.load %arg7[%c0_53, %c0_54] : memref<128x384xf32, #tpu.memory_space<vmem>>, vector<128x384xf32>
    %cst_55 = arith.constant dense<0.000000e+00> : vector<8x384xf32>
    %135 = tpu.matmul %126, %134, %cst_55 {dimension_numbers = #tpu.dot_dimension_numbers<[1], [0], [0], [1], [0, 0, 1, 1], [], []>} : vector<8x128xf32>, vector<128x384xf32>, vector<8x384xf32> -> vector<8x384xf32>
    %136 = arith.addf %135, %21 : vector<8x384xf32>
    %137 = vector.extract_strided_slice %133 {offsets = [0, 0], sizes = [8, 128], strides = [1, 1]} : vector<8x384xf32> to vector<8x128xf32>
    %138 = vector.extract_strided_slice %136 {offsets = [0, 0], sizes = [8, 128], strides = [1, 1]} : vector<8x384xf32> to vector<8x128xf32>
    %139 = arith.addf %137, %138 : vector<8x128xf32>
    %140 = arith.negf %139 : vector<8x128xf32>
    %141 = math.exp %140 : vector<8x128xf32>
    %cst_56 = arith.constant 1.000000e+00 : f32
    %142 = vector.broadcast %cst_56 : f32 to vector<8x128xf32>
    %143 = arith.addf %142, %141 : vector<8x128xf32>
    %144 = arith.divf %142, %143 : vector<8x128xf32>
    %145 = vector.extract_strided_slice %133 {offsets = [0, 128], sizes = [8, 128], strides = [1, 1]} : vector<8x384xf32> to vector<8x128xf32>
    %146 = vector.extract_strided_slice %136 {offsets = [0, 128], sizes = [8, 128], strides = [1, 1]} : vector<8x384xf32> to vector<8x128xf32>
    %147 = arith.addf %145, %146 : vector<8x128xf32>
    %148 = arith.negf %147 : vector<8x128xf32>
    %149 = math.exp %148 : vector<8x128xf32>
    %cst_57 = arith.constant 1.000000e+00 : f32
    %150 = vector.broadcast %cst_57 : f32 to vector<8x128xf32>
    %151 = arith.addf %150, %149 : vector<8x128xf32>
    %152 = arith.divf %150, %151 : vector<8x128xf32>
    %153 = vector.extract_strided_slice %133 {offsets = [0, 256], sizes = [8, 128], strides = [1, 1]} : vector<8x384xf32> to vector<8x128xf32>
    %154 = vector.extract_strided_slice %136 {offsets = [0, 256], sizes = [8, 128], strides = [1, 1]} : vector<8x384xf32> to vector<8x128xf32>
    %155 = arith.mulf %144, %154 : vector<8x128xf32>
    %156 = arith.addf %153, %155 : vector<8x128xf32>
    %157 = math.tanh %156 : vector<8x128xf32>
    %cst_58 = arith.constant 1.000000e+00 : f32
    %158 = vector.broadcast %cst_58 : f32 to vector<8x128xf32>
    %159 = arith.subf %158, %152 : vector<8x128xf32>
    %160 = arith.mulf %159, %157 : vector<8x128xf32>
    %161 = arith.mulf %152, %126 : vector<8x128xf32>
    %162 = arith.addf %160, %161 : vector<8x128xf32>
    %163 = arith.index_cast %c3_i32 : i32 to index
    %c0_59 = arith.constant 0 : index
    %c0_60 = arith.constant 0 : index
    %164 = vector.load %arg14[%163, %c0_59, %c0_60] : memref<8x8x128xf32, #tpu.memory_space<vmem>>, vector<1x8x128xf32>
    %165 = vector.shape_cast %164 : vector<1x8x128xf32> to vector<8x128xf32>
    %166 = vector.shape_cast %162 : vector<8x128xf32> to vector<1x8x128xf32>
    tpu.vector_store %arg14[%163, %c0_59, %c0_60], %166 {strides = array<i32>} : memref<8x8x128xf32, #tpu.memory_space<vmem>>, vector<1x8x128xf32>,
    %c4_i32 = arith.constant 4 : i32
    %167 = arith.index_cast %c4_i32 : i32 to index
    %c0_61 = arith.constant 0 : index
    %c0_62 = arith.constant 0 : index
    %168 = vector.load %arg13[%167, %c0_61, %c0_62] : memref<8x8x384xf32, #tpu.memory_space<vmem>>, vector<1x8x384xf32>
    %169 = vector.shape_cast %168 : vector<1x8x384xf32> to vector<8x384xf32>
    %c0_63 = arith.constant 0 : index
    %c0_64 = arith.constant 0 : index
    %170 = vector.load %arg7[%c0_63, %c0_64] : memref<128x384xf32, #tpu.memory_space<vmem>>, vector<128x384xf32>
    %cst_65 = arith.constant dense<0.000000e+00> : vector<8x384xf32>
    %171 = tpu.matmul %162, %170, %cst_65 {dimension_numbers = #tpu.dot_dimension_numbers<[1], [0], [0], [1], [0, 0, 1, 1], [], []>} : vector<8x128xf32>, vector<128x384xf32>, vector<8x384xf32> -> vector<8x384xf32>
    %172 = arith.addf %171, %21 : vector<8x384xf32>
    %173 = vector.extract_strided_slice %169 {offsets = [0, 0], sizes = [8, 128], strides = [1, 1]} : vector<8x384xf32> to vector<8x128xf32>
    %174 = vector.extract_strided_slice %172 {offsets = [0, 0], sizes = [8, 128], strides = [1, 1]} : vector<8x384xf32> to vector<8x128xf32>
    %175 = arith.addf %173, %174 : vector<8x128xf32>
    %176 = arith.negf %175 : vector<8x128xf32>
    %177 = math.exp %176 : vector<8x128xf32>
    %cst_66 = arith.constant 1.000000e+00 : f32
    %178 = vector.broadcast %cst_66 : f32 to vector<8x128xf32>
    %179 = arith.addf %178, %177 : vector<8x128xf32>
    %180 = arith.divf %178, %179 : vector<8x128xf32>
    %181 = vector.extract_strided_slice %169 {offsets = [0, 128], sizes = [8, 128], strides = [1, 1]} : vector<8x384xf32> to vector<8x128xf32>
    %182 = vector.extract_strided_slice %172 {offsets = [0, 128], sizes = [8, 128], strides = [1, 1]} : vector<8x384xf32> to vector<8x128xf32>
    %183 = arith.addf %181, %182 : vector<8x128xf32>
    %184 = arith.negf %183 : vector<8x128xf32>
    %185 = math.exp %184 : vector<8x128xf32>
    %cst_67 = arith.constant 1.000000e+00 : f32
    %186 = vector.broadcast %cst_67 : f32 to vector<8x128xf32>
    %187 = arith.addf %186, %185 : vector<8x128xf32>
    %188 = arith.divf %186, %187 : vector<8x128xf32>
    %189 = vector.extract_strided_slice %169 {offsets = [0, 256], sizes = [8, 128], strides = [1, 1]} : vector<8x384xf32> to vector<8x128xf32>
    %190 = vector.extract_strided_slice %172 {offsets = [0, 256], sizes = [8, 128], strides = [1, 1]} : vector<8x384xf32> to vector<8x128xf32>
    %191 = arith.mulf %180, %190 : vector<8x128xf32>
    %192 = arith.addf %189, %191 : vector<8x128xf32>
    %193 = math.tanh %192 : vector<8x128xf32>
    %cst_68 = arith.constant 1.000000e+00 : f32
    %194 = vector.broadcast %cst_68 : f32 to vector<8x128xf32>
    %195 = arith.subf %194, %188 : vector<8x128xf32>
    %196 = arith.mulf %195, %193 : vector<8x128xf32>
    %197 = arith.mulf %188, %162 : vector<8x128xf32>
    %198 = arith.addf %196, %197 : vector<8x128xf32>
    %199 = arith.index_cast %c4_i32 : i32 to index
    %c0_69 = arith.constant 0 : index
    %c0_70 = arith.constant 0 : index
    %200 = vector.load %arg14[%199, %c0_69, %c0_70] : memref<8x8x128xf32, #tpu.memory_space<vmem>>, vector<1x8x128xf32>
    %201 = vector.shape_cast %200 : vector<1x8x128xf32> to vector<8x128xf32>
    %202 = vector.shape_cast %198 : vector<8x128xf32> to vector<1x8x128xf32>
    tpu.vector_store %arg14[%199, %c0_69, %c0_70], %202 {strides = array<i32>} : memref<8x8x128xf32, #tpu.memory_space<vmem>>, vector<1x8x128xf32>,
    %c5_i32 = arith.constant 5 : i32
    %203 = arith.index_cast %c5_i32 : i32 to index
    %c0_71 = arith.constant 0 : index
    %c0_72 = arith.constant 0 : index
    %204 = vector.load %arg13[%203, %c0_71, %c0_72] : memref<8x8x384xf32, #tpu.memory_space<vmem>>, vector<1x8x384xf32>
    %205 = vector.shape_cast %204 : vector<1x8x384xf32> to vector<8x384xf32>
    %c0_73 = arith.constant 0 : index
    %c0_74 = arith.constant 0 : index
    %206 = vector.load %arg7[%c0_73, %c0_74] : memref<128x384xf32, #tpu.memory_space<vmem>>, vector<128x384xf32>
    %cst_75 = arith.constant dense<0.000000e+00> : vector<8x384xf32>
    %207 = tpu.matmul %198, %206, %cst_75 {dimension_numbers = #tpu.dot_dimension_numbers<[1], [0], [0], [1], [0, 0, 1, 1], [], []>} : vector<8x128xf32>, vector<128x384xf32>, vector<8x384xf32> -> vector<8x384xf32>
    %208 = arith.addf %207, %21 : vector<8x384xf32>
    %209 = vector.extract_strided_slice %205 {offsets = [0, 0], sizes = [8, 128], strides = [1, 1]} : vector<8x384xf32> to vector<8x128xf32>
    %210 = vector.extract_strided_slice %208 {offsets = [0, 0], sizes = [8, 128], strides = [1, 1]} : vector<8x384xf32> to vector<8x128xf32>
    %211 = arith.addf %209, %210 : vector<8x128xf32>
    %212 = arith.negf %211 : vector<8x128xf32>
    %213 = math.exp %212 : vector<8x128xf32>
    %cst_76 = arith.constant 1.000000e+00 : f32
    %214 = vector.broadcast %cst_76 : f32 to vector<8x128xf32>
    %215 = arith.addf %214, %213 : vector<8x128xf32>
    %216 = arith.divf %214, %215 : vector<8x128xf32>
    %217 = vector.extract_strided_slice %205 {offsets = [0, 128], sizes = [8, 128], strides = [1, 1]} : vector<8x384xf32> to vector<8x128xf32>
    %218 = vector.extract_strided_slice %208 {offsets = [0, 128], sizes = [8, 128], strides = [1, 1]} : vector<8x384xf32> to vector<8x128xf32>
    %219 = arith.addf %217, %218 : vector<8x128xf32>
    %220 = arith.negf %219 : vector<8x128xf32>
    %221 = math.exp %220 : vector<8x128xf32>
    %cst_77 = arith.constant 1.000000e+00 : f32
    %222 = vector.broadcast %cst_77 : f32 to vector<8x128xf32>
    %223 = arith.addf %222, %221 : vector<8x128xf32>
    %224 = arith.divf %222, %223 : vector<8x128xf32>
    %225 = vector.extract_strided_slice %205 {offsets = [0, 256], sizes = [8, 128], strides = [1, 1]} : vector<8x384xf32> to vector<8x128xf32>
    %226 = vector.extract_strided_slice %208 {offsets = [0, 256], sizes = [8, 128], strides = [1, 1]} : vector<8x384xf32> to vector<8x128xf32>
    %227 = arith.mulf %216, %226 : vector<8x128xf32>
    %228 = arith.addf %225, %227 : vector<8x128xf32>
    %229 = math.tanh %228 : vector<8x128xf32>
    %cst_78 = arith.constant 1.000000e+00 : f32
    %230 = vector.broadcast %cst_78 : f32 to vector<8x128xf32>
    %231 = arith.subf %230, %224 : vector<8x128xf32>
    %232 = arith.mulf %231, %229 : vector<8x128xf32>
    %233 = arith.mulf %224, %198 : vector<8x128xf32>
    %234 = arith.addf %232, %233 : vector<8x128xf32>
    %235 = arith.index_cast %c5_i32 : i32 to index
    %c0_79 = arith.constant 0 : index
    %c0_80 = arith.constant 0 : index
    %236 = vector.load %arg14[%235, %c0_79, %c0_80] : memref<8x8x128xf32, #tpu.memory_space<vmem>>, vector<1x8x128xf32>
    %237 = vector.shape_cast %236 : vector<1x8x128xf32> to vector<8x128xf32>
    %238 = vector.shape_cast %234 : vector<8x128xf32> to vector<1x8x128xf32>
    tpu.vector_store %arg14[%235, %c0_79, %c0_80], %238 {strides = array<i32>} : memref<8x8x128xf32, #tpu.memory_space<vmem>>, vector<1x8x128xf32>,
    %c6_i32 = arith.constant 6 : i32
    %239 = arith.index_cast %c6_i32 : i32 to index
    %c0_81 = arith.constant 0 : index
    %c0_82 = arith.constant 0 : index
    %240 = vector.load %arg13[%239, %c0_81, %c0_82] : memref<8x8x384xf32, #tpu.memory_space<vmem>>, vector<1x8x384xf32>
    %241 = vector.shape_cast %240 : vector<1x8x384xf32> to vector<8x384xf32>
    %c0_83 = arith.constant 0 : index
    %c0_84 = arith.constant 0 : index
    %242 = vector.load %arg7[%c0_83, %c0_84] : memref<128x384xf32, #tpu.memory_space<vmem>>, vector<128x384xf32>
    %cst_85 = arith.constant dense<0.000000e+00> : vector<8x384xf32>
    %243 = tpu.matmul %234, %242, %cst_85 {dimension_numbers = #tpu.dot_dimension_numbers<[1], [0], [0], [1], [0, 0, 1, 1], [], []>} : vector<8x128xf32>, vector<128x384xf32>, vector<8x384xf32> -> vector<8x384xf32>
    %244 = arith.addf %243, %21 : vector<8x384xf32>
    %245 = vector.extract_strided_slice %241 {offsets = [0, 0], sizes = [8, 128], strides = [1, 1]} : vector<8x384xf32> to vector<8x128xf32>
    %246 = vector.extract_strided_slice %244 {offsets = [0, 0], sizes = [8, 128], strides = [1, 1]} : vector<8x384xf32> to vector<8x128xf32>
    %247 = arith.addf %245, %246 : vector<8x128xf32>
    %248 = arith.negf %247 : vector<8x128xf32>
    %249 = math.exp %248 : vector<8x128xf32>
    %cst_86 = arith.constant 1.000000e+00 : f32
    %250 = vector.broadcast %cst_86 : f32 to vector<8x128xf32>
    %251 = arith.addf %250, %249 : vector<8x128xf32>
    %252 = arith.divf %250, %251 : vector<8x128xf32>
    %253 = vector.extract_strided_slice %241 {offsets = [0, 128], sizes = [8, 128], strides = [1, 1]} : vector<8x384xf32> to vector<8x128xf32>
    %254 = vector.extract_strided_slice %244 {offsets = [0, 128], sizes = [8, 128], strides = [1, 1]} : vector<8x384xf32> to vector<8x128xf32>
    %255 = arith.addf %253, %254 : vector<8x128xf32>
    %256 = arith.negf %255 : vector<8x128xf32>
    %257 = math.exp %256 : vector<8x128xf32>
    %cst_87 = arith.constant 1.000000e+00 : f32
    %258 = vector.broadcast %cst_87 : f32 to vector<8x128xf32>
    %259 = arith.addf %258, %257 : vector<8x128xf32>
    %260 = arith.divf %258, %259 : vector<8x128xf32>
    %261 = vector.extract_strided_slice %241 {offsets = [0, 256], sizes = [8, 128], strides = [1, 1]} : vector<8x384xf32> to vector<8x128xf32>
    %262 = vector.extract_strided_slice %244 {offsets = [0, 256], sizes = [8, 128], strides = [1, 1]} : vector<8x384xf32> to vector<8x128xf32>
    %263 = arith.mulf %252, %262 : vector<8x128xf32>
    %264 = arith.addf %261, %263 : vector<8x128xf32>
    %265 = math.tanh %264 : vector<8x128xf32>
    %cst_88 = arith.constant 1.000000e+00 : f32
    %266 = vector.broadcast %cst_88 : f32 to vector<8x128xf32>
    %267 = arith.subf %266, %260 : vector<8x128xf32>
    %268 = arith.mulf %267, %265 : vector<8x128xf32>
    %269 = arith.mulf %260, %234 : vector<8x128xf32>
    %270 = arith.addf %268, %269 : vector<8x128xf32>
    %271 = arith.index_cast %c6_i32 : i32 to index
    %c0_89 = arith.constant 0 : index
    %c0_90 = arith.constant 0 : index
    %272 = vector.load %arg14[%271, %c0_89, %c0_90] : memref<8x8x128xf32, #tpu.memory_space<vmem>>, vector<1x8x128xf32>
    %273 = vector.shape_cast %272 : vector<1x8x128xf32> to vector<8x128xf32>
    %274 = vector.shape_cast %270 : vector<8x128xf32> to vector<1x8x128xf32>
    tpu.vector_store %arg14[%271, %c0_89, %c0_90], %274 {strides = array<i32>} : memref<8x8x128xf32, #tpu.memory_space<vmem>>, vector<1x8x128xf32>,
    %c7_i32 = arith.constant 7 : i32
    %275 = arith.index_cast %c7_i32 : i32 to index
    %c0_91 = arith.constant 0 : index
    %c0_92 = arith.constant 0 : index
    %276 = vector.load %arg13[%275, %c0_91, %c0_92] : memref<8x8x384xf32, #tpu.memory_space<vmem>>, vector<1x8x384xf32>
    %277 = vector.shape_cast %276 : vector<1x8x384xf32> to vector<8x384xf32>
    %c0_93 = arith.constant 0 : index
    %c0_94 = arith.constant 0 : index
    %278 = vector.load %arg7[%c0_93, %c0_94] : memref<128x384xf32, #tpu.memory_space<vmem>>, vector<128x384xf32>
    %cst_95 = arith.constant dense<0.000000e+00> : vector<8x384xf32>
    %279 = tpu.matmul %270, %278, %cst_95 {dimension_numbers = #tpu.dot_dimension_numbers<[1], [0], [0], [1], [0, 0, 1, 1], [], []>} : vector<8x128xf32>, vector<128x384xf32>, vector<8x384xf32> -> vector<8x384xf32>
    %280 = arith.addf %279, %21 : vector<8x384xf32>
    %281 = vector.extract_strided_slice %277 {offsets = [0, 0], sizes = [8, 128], strides = [1, 1]} : vector<8x384xf32> to vector<8x128xf32>
    %282 = vector.extract_strided_slice %280 {offsets = [0, 0], sizes = [8, 128], strides = [1, 1]} : vector<8x384xf32> to vector<8x128xf32>
    %283 = arith.addf %281, %282 : vector<8x128xf32>
    %284 = arith.negf %283 : vector<8x128xf32>
    %285 = math.exp %284 : vector<8x128xf32>
    %cst_96 = arith.constant 1.000000e+00 : f32
    %286 = vector.broadcast %cst_96 : f32 to vector<8x128xf32>
    %287 = arith.addf %286, %285 : vector<8x128xf32>
    %288 = arith.divf %286, %287 : vector<8x128xf32>
    %289 = vector.extract_strided_slice %277 {offsets = [0, 128], sizes = [8, 128], strides = [1, 1]} : vector<8x384xf32> to vector<8x128xf32>
    %290 = vector.extract_strided_slice %280 {offsets = [0, 128], sizes = [8, 128], strides = [1, 1]} : vector<8x384xf32> to vector<8x128xf32>
    %291 = arith.addf %289, %290 : vector<8x128xf32>
    %292 = arith.negf %291 : vector<8x128xf32>
    %293 = math.exp %292 : vector<8x128xf32>
    %cst_97 = arith.constant 1.000000e+00 : f32
    %294 = vector.broadcast %cst_97 : f32 to vector<8x128xf32>
    %295 = arith.addf %294, %293 : vector<8x128xf32>
    %296 = arith.divf %294, %295 : vector<8x128xf32>
    %297 = vector.extract_strided_slice %277 {offsets = [0, 256], sizes = [8, 128], strides = [1, 1]} : vector<8x384xf32> to vector<8x128xf32>
    %298 = vector.extract_strided_slice %280 {offsets = [0, 256], sizes = [8, 128], strides = [1, 1]} : vector<8x384xf32> to vector<8x128xf32>
    %299 = arith.mulf %288, %298 : vector<8x128xf32>
    %300 = arith.addf %297, %299 : vector<8x128xf32>
    %301 = math.tanh %300 : vector<8x128xf32>
    %cst_98 = arith.constant 1.000000e+00 : f32
    %302 = vector.broadcast %cst_98 : f32 to vector<8x128xf32>
    %303 = arith.subf %302, %296 : vector<8x128xf32>
    %304 = arith.mulf %303, %301 : vector<8x128xf32>
    %305 = arith.mulf %296, %270 : vector<8x128xf32>
    %306 = arith.addf %304, %305 : vector<8x128xf32>
    %307 = arith.index_cast %c7_i32 : i32 to index
    %c0_99 = arith.constant 0 : index
    %c0_100 = arith.constant 0 : index
    %308 = vector.load %arg14[%307, %c0_99, %c0_100] : memref<8x8x128xf32, #tpu.memory_space<vmem>>, vector<1x8x128xf32>
    %309 = vector.shape_cast %308 : vector<1x8x128xf32> to vector<8x128xf32>
    %310 = vector.shape_cast %306 : vector<8x128xf32> to vector<1x8x128xf32>
    tpu.vector_store %arg14[%307, %c0_99, %c0_100], %310 {strides = array<i32>} : memref<8x8x128xf32, #tpu.memory_space<vmem>>, vector<1x8x128xf32>,
    %c8_i32 = arith.constant 8 : i32
    %c0_101 = arith.constant 0 : index
    %c0_102 = arith.constant 0 : index
    %311 = vector.load %arg12[%c0_101, %c0_102] : memref<8x128xf32, #tpu.memory_space<vmem>>, vector<8x128xf32>
    tpu.vector_store %arg12[%c0_101, %c0_102], %306 {strides = array<i32>} : memref<8x128xf32, #tpu.memory_space<vmem>>, vector<8x128xf32>,
    %c0_103 = arith.constant 0 : index
    %c0_104 = arith.constant 0 : index
    %c0_105 = arith.constant 0 : index
    %312 = vector.load %arg14[%c0_103, %c0_104, %c0_105] : memref<8x8x128xf32, #tpu.memory_space<vmem>>, vector<8x8x128xf32>
    %313 = vector.shape_cast %312 : vector<8x8x128xf32> to vector<64x128xf32>
    %c0_106 = arith.constant 0 : index
    %c0_107 = arith.constant 0 : index
    %314 = vector.load %arg9[%c0_106, %c0_107] : memref<128x128xf32, #tpu.memory_space<vmem>>, vector<128x128xf32>
    %cst_108 = arith.constant dense<0.000000e+00> : vector<64x128xf32>
    %315 = tpu.matmul %313, %314, %cst_108 {dimension_numbers = #tpu.dot_dimension_numbers<[1], [0], [0], [1], [0, 0, 1, 1], [], []>} : vector<64x128xf32>, vector<128x128xf32>, vector<64x128xf32> -> vector<64x128xf32>
    %c0_109 = arith.constant 0 : index
    %c0_110 = arith.constant 0 : index
    %316 = vector.load %arg10[%c0_109, %c0_110] : memref<1x128xf32, #tpu.memory_space<vmem>>, vector<1x128xf32>
    %317 = vector.broadcast %316 : vector<1x128xf32> to vector<64x128xf32>
    %318 = arith.addf %315, %317 : vector<64x128xf32>
    %319 = vector.shape_cast %318 : vector<64x128xf32> to vector<8x8x128xf32>
    %c0_111 = arith.constant 0 : index
    %c0_112 = arith.constant 0 : index
    %c0_113 = arith.constant 0 : index
    %320 = vector.load %arg11[%c0_111, %c0_112, %c0_113] : memref<8x8x128xf32, #tpu.memory_space<vmem>>, vector<8x8x128xf32>
    tpu.vector_store %arg11[%c0_111, %c0_112, %c0_113], %319 {strides = array<i32>} : memref<8x8x128xf32, #tpu.memory_space<vmem>>, vector<8x8x128xf32>,
    return
  }
  func.func @transform_0(%arg0: i32) -> (i32, i32, i32) {
    %c0_i32 = arith.constant 0 : i32
    %c0_i32_0 = arith.constant 0 : i32
    %c0_i32_1 = arith.constant 0 : i32
    return %arg0, %c0_i32, %c0_i32_0 : i32, i32, i32
  }
  func.func @transform_1(%arg0: i32) -> (i32, i32) {
    %c0_i32 = arith.constant 0 : i32
    %c0_i32_0 = arith.constant 0 : i32
    %c0_i32_1 = arith.constant 0 : i32
    return %c0_i32, %c0_i32_0 : i32, i32
  }
  func.func @transform_2(%arg0: i32) -> (i32, i32) {
    %c0_i32 = arith.constant 0 : i32
    %c0_i32_0 = arith.constant 0 : i32
    %c0_i32_1 = arith.constant 0 : i32
    return %c0_i32, %c0_i32_0 : i32, i32
  }
  func.func @transform_3(%arg0: i32) -> (i32, i32) {
    %c0_i32 = arith.constant 0 : i32
    %c0_i32_0 = arith.constant 0 : i32
    %c0_i32_1 = arith.constant 0 : i32
    return %c0_i32, %c0_i32_0 : i32, i32
  }
  func.func @transform_4(%arg0: i32) -> (i32, i32) {
    %c0_i32 = arith.constant 0 : i32
    %c0_i32_0 = arith.constant 0 : i32
    %c0_i32_1 = arith.constant 0 : i32
    return %c0_i32, %c0_i32_0 : i32, i32
  }
  func.func @transform_5(%arg0: i32) -> (i32, i32) {
    %c0_i32 = arith.constant 0 : i32
    %c0_i32_0 = arith.constant 0 : i32
    %c0_i32_1 = arith.constant 0 : i32
    return %c0_i32, %c0_i32_0 : i32, i32
  }
  func.func @transform_6(%arg0: i32) -> (i32, i32) {
    %c0_i32 = arith.constant 0 : i32
    %c0_i32_0 = arith.constant 0 : i32
    %c0_i32_1 = arith.constant 0 : i32
    return %c0_i32, %c0_i32_0 : i32, i32
  }
  func.func @transform_7(%arg0: i32) -> (i32, i32) {
    %c0_i32 = arith.constant 0 : i32
    %c0_i32_0 = arith.constant 0 : i32
    %c0_i32_1 = arith.constant 0 : i32
    return %c0_i32, %c0_i32_0 : i32, i32
  }
  func.func @transform_8(%arg0: i32) -> (i32, i32) {
    %c0_i32 = arith.constant 0 : i32
    %c0_i32_0 = arith.constant 0 : i32
    %c0_i32_1 = arith.constant 0 : i32
    return %c0_i32, %c0_i32_0 : i32, i32
  }
  func.func @transform_9(%arg0: i32) -> (i32, i32) {
    %c0_i32 = arith.constant 0 : i32
    %c0_i32_0 = arith.constant 0 : i32
    %c0_i32_1 = arith.constant 0 : i32
    return %c0_i32, %c0_i32_0 : i32, i32
  }
  func.func @transform_10(%arg0: i32) -> (i32, i32, i32) {
    %c0_i32 = arith.constant 0 : i32
    %c0_i32_0 = arith.constant 0 : i32
    %c0_i32_1 = arith.constant 0 : i32
    return %arg0, %c0_i32, %c0_i32_0 : i32, i32, i32
  }
  func.func @transform_11(%arg0: i32) -> (i32, i32) {
    %c0_i32 = arith.constant 0 : i32
    %c0_i32_0 = arith.constant 0 : i32
    %c0_i32_1 = arith.constant 0 : i32
    return %c0_i32, %c0_i32_0 : i32, i32
  }
}

</mosaic_0001>

<llo_original>
// kernel: tpu_custom_call.1
$region0: #{tpu_custom_call.1}
  #allocation0 [shape = 'u32[]', space=smem, size = 0x4, offset = 0x4, fixed_abs, tag = 'smem constant byte address 0x4 - core index']
  #allocation1 [shape = 'u32[144,128]{1,0:T(1,128)}', space=vmem, size = 0x12000, scoped, tag = 'internal scratch']
  #allocation2 [shape = 'f32[8,8,384]{2,1,0:T(8,128)}', space=vmem, size = 0x18000, scoped, tag = 'scratch operand']
  #allocation3 [shape = 'f32[8,8,128]{2,1,0:T(8,128)}', space=vmem, size = 0x8000, scoped, tag = 'scratch operand']
  %s0 = inlined_call_operand.hbm [shape: f32[8,8,16], index: 0, kind: input, shape index: {}]
  %s1 = inlined_call_operand.hbm [shape: f32[8,128], index: 1, kind: input, shape index: {}, may-alias: {1,11}]
  %s2 = inlined_call_operand.vmem [shape: f32[16,128], index: 2, kind: input, shape index: {}]
  %s3 = inlined_call_operand.vmem [shape: f32[1,128], index: 3, kind: input, shape index: {}]
  %s4 = inlined_call_operand.hbm [shape: f32[128,384], index: 4, kind: input, shape index: {}]
  %s5 = inlined_call_operand.vmem [shape: f32[1,384], index: 5, kind: input, shape index: {}]
  %s6 = inlined_call_operand.hbm [shape: f32[128,384], index: 6, kind: input, shape index: {}]
  %s7 = inlined_call_operand.vmem [shape: f32[1,384], index: 7, kind: input, shape index: {}]
  %s8 = inlined_call_operand.hbm [shape: f32[128,128], index: 8, kind: input, shape index: {}]
  %s9 = inlined_call_operand.vmem [shape: f32[1,128], index: 9, kind: input, shape index: {}]
  %s10 = inlined_call_operand.hbm [shape: f32[8,8,128], index: 10, kind: output, shape index: {0}]
  %s11 = inlined_call_operand.hbm [shape: f32[8,128], index: 11, kind: output, shape index: {1}, may-alias: {1,11}]
  %12 = xla_tuple %s10, %s11
  %s13 = sld [smem:[#allocation0]]
  $region82: #{tpu_custom_call.1} parent=0
    _
  %s15 = ssub.s32 1, %s13
  %s16 = scalar_select 0, %s15, %s13
  $region1: #{tpu_custom_call.1} parent=0
    #allocation4 [shape = 'u8[32768]{0}', space=vmem, size = 0x8000, scoped, tag = 'input window, operand 0, single buffered']
    #allocation5 [shape = 's32[1]{0}', space=sflag, size = 0x4, scoped, tag = 'scoped memory for tpu_custom_call.1']
    #allocation6 [shape = 's32[1]{0}', space=sflag, size = 0x4, scoped, tag = 'scoped memory for tpu_custom_call.1']
    #allocation7 [shape = 'u8[4096]{0}', space=vmem, size = 0x1000, scoped, tag = 'input window, operand 1, single buffered']
    #allocation8 [shape = 's32[1]{0}', space=sflag, size = 0x4, scoped, tag = 'scoped memory for tpu_custom_call.1']
    #allocation9 [shape = 'u8[196608]{0}', space=vmem, size = 0x30000, scoped, tag = 'input window, operand 4, single buffered']
    #allocation10 [shape = 'u8[196608]{0}', space=vmem, size = 0x30000, scoped, tag = 'input window, operand 6, single buffered']
    #allocation11 [shape = 's32[1]{0}', space=sflag, size = 0x4, scoped, tag = 'scoped memory for tpu_custom_call.1']
    #allocation12 [shape = 'u8[65536]{0}', space=vmem, size = 0x10000, scoped, tag = 'input window, operand 8, single buffered']
    #allocation13 [shape = 'u8[32768]{0}', space=vmem, size = 0x8000, scoped, tag = 'output window, operand 0, single buffered']
    #allocation14 [shape = 'u8[4096]{0}', space=vmem, size = 0x1000, scoped, tag = 'output window, operand 1, single buffered']
    #allocation15 [shape = 's32[1]{0}', space=sflag, size = 0x4, scoped, tag = 'scoped memory for tpu_custom_call.1']
    %17 = vsyncpa [#allocation5], 0
    %18 = vsyncpa [#allocation8], 0
    %19 = vsyncpa [#allocation11], 0
    %20 = vsyncpa [#allocation6], 0
    %21 = vsyncpa [#allocation15], 0
    // Predicated region
    $region2: #{tpu_custom_call.1} parent=1 // pred_check
      _
    $region3: #{tpu_custom_call.1} parent=1 // pred_check_branch
      %23 = sbr.rel (0) target = $region5
    $region4: #{tpu_custom_call.1} parent=1 // pred_region
      %s25 = ssub.s32 1024, 1024
      %26 = vsyncadd [#allocation5], %s25
      %s27 = sshll.u32 [#allocation4], 4
      %s28 = int_to_ptr.vmem [resolvable:$true] %s27
      %33 = dma.hbm_to_vmem [thread:$0]  %s0, 1024, %s28, [#allocation5], 128, 128, 8
    $region5: #{tpu_custom_call.1} parent=1 // pred_fallthru
      _
    // Predicated region
    $region6: #{tpu_custom_call.1} parent=1 // pred_check
      _
    $region7: #{tpu_custom_call.1} parent=1 // pred_check_branch
      %35 = sbr.rel (0) target = $region9
    $region8: #{tpu_custom_call.1} parent=1 // pred_region
      %s37 = ssub.s32 128, 128
      %38 = vsyncadd [#allocation8], %s37
      %s40 = sshll.u32 [#allocation7], 4
      %s41 = int_to_ptr.vmem [resolvable:$true] %s40
      %43 = dma.hbm_to_vmem [thread:$0]  %s1, 128, %s41, [#allocation8]
    $region9: #{tpu_custom_call.1} parent=1 // pred_fallthru
      _
    // Predicated region
    $region10: #{tpu_custom_call.1} parent=1 // pred_check
      _
    $region11: #{tpu_custom_call.1} parent=1 // pred_check_branch
      %45 = sbr.rel (0) target = $region13
    $region12: #{tpu_custom_call.1} parent=1 // pred_region
      _
    $region13: #{tpu_custom_call.1} parent=1 // pred_fallthru
      _
    // Predicated region
    $region14: #{tpu_custom_call.1} parent=1 // pred_check
      _
    $region15: #{tpu_custom_call.1} parent=1 // pred_check_branch
      %47 = sbr.rel (0) target = $region17
    $region16: #{tpu_custom_call.1} parent=1 // pred_region
      _
    $region17: #{tpu_custom_call.1} parent=1 // pred_fallthru
      _
    // Predicated region
    $region18: #{tpu_custom_call.1} parent=1 // pred_check
      _
    $region19: #{tpu_custom_call.1} parent=1 // pred_check_branch
      %49 = sbr.rel (0) target = $region21
    $region20: #{tpu_custom_call.1} parent=1 // pred_region
      %s51 = ssub.s32 6144, 6144
      %52 = vsyncadd [#allocation8], %s51
      %s53 = sshll.u32 [#allocation9], 4
      %s54 = int_to_ptr.vmem [resolvable:$true] %s53
      %59 = dma.hbm_to_vmem [thread:$0]  %s4, 6144, %s54, [#allocation8], 384, 384, 24
    $region21: #{tpu_custom_call.1} parent=1 // pred_fallthru
      _
    // Predicated region
    $region22: #{tpu_custom_call.1} parent=1 // pred_check
      _
    $region23: #{tpu_custom_call.1} parent=1 // pred_check_branch
      %61 = sbr.rel (0) target = $region25
    $region24: #{tpu_custom_call.1} parent=1 // pred_region
      _
    $region25: #{tpu_custom_call.1} parent=1 // pred_fallthru
      _
    // Predicated region
    $region26: #{tpu_custom_call.1} parent=1 // pred_check
      _
    $region27: #{tpu_custom_call.1} parent=1 // pred_check_branch
      %63 = sbr.rel (0) target = $region29
    $region28: #{tpu_custom_call.1} parent=1 // pred_region
      %s65 = ssub.s32 6144, 6144
      %66 = vsyncadd [#allocation11], %s65
      %s67 = sshll.u32 [#allocation10], 4
      %s68 = int_to_ptr.vmem [resolvable:$true] %s67
      %73 = dma.hbm_to_vmem [thread:$0]  %s6, 6144, %s68, [#allocation11], 384, 384, 24
    $region29: #{tpu_custom_call.1} parent=1 // pred_fallthru
      _
    // Predicated region
    $region30: #{tpu_custom_call.1} parent=1 // pred_check
      _
    $region31: #{tpu_custom_call.1} parent=1 // pred_check_branch
      %75 = sbr.rel (0) target = $region33
    $region32: #{tpu_custom_call.1} parent=1 // pred_region
      _
    $region33: #{tpu_custom_call.1} parent=1 // pred_fallthru
      _
    // Predicated region
    $region34: #{tpu_custom_call.1} parent=1 // pred_check
      _
    $region35: #{tpu_custom_call.1} parent=1 // pred_check_branch
      %77 = sbr.rel (0) target = $region37
    $region36: #{tpu_custom_call.1} parent=1 // pred_region
      %s79 = ssub.s32 2048, 2048
      %80 = vsyncadd [#allocation11], %s79
      %s81 = sshll.u32 [#allocation12], 4
      %s82 = int_to_ptr.vmem [resolvable:$true] %s81
      %87 = dma.hbm_to_vmem [thread:$0]  %s8, 2048, %s82, [#allocation11], 128, 128, 8
    $region37: #{tpu_custom_call.1} parent=1 // pred_fallthru
      _
    // Predicated region
    $region38: #{tpu_custom_call.1} parent=1 // pred_check
      _
    $region39: #{tpu_custom_call.1} parent=1 // pred_check_branch
      %89 = sbr.rel (0) target = $region41
    $region40: #{tpu_custom_call.1} parent=1 // pred_region
      _
    $region41: #{tpu_custom_call.1} parent=1 // pred_fallthru
      _
    // Predicated region
    $region42: #{tpu_custom_call.1} parent=1 // pred_check
      _
    $region43: #{tpu_custom_call.1} parent=1 // pred_check_branch
      %91 = sbr.rel (0) target = $region45
    $region44: #{tpu_custom_call.1} parent=1 // pred_region
      %92 = dma.done [#allocation5], 1024
    $region45: #{tpu_custom_call.1} parent=1 // pred_fallthru
      _
    // Predicated region
    $region46: #{tpu_custom_call.1} parent=1 // pred_check
      _
    $region47: #{tpu_custom_call.1} parent=1 // pred_check_branch
      %94 = sbr.rel (0) target = $region49
    $region48: #{tpu_custom_call.1} parent=1 // pred_region
      %95 = dma.done [#allocation8], 128
    $region49: #{tpu_custom_call.1} parent=1 // pred_fallthru
      _
    // Predicated region
    $region50: #{tpu_custom_call.1} parent=1 // pred_check
      _
    $region51: #{tpu_custom_call.1} parent=1 // pred_check_branch
      %97 = sbr.rel (0) target = $region53
    $region52: #{tpu_custom_call.1} parent=1 // pred_region
      %98 = dma.done [#allocation8], 6144
    $region53: #{tpu_custom_call.1} parent=1 // pred_fallthru
      _
    // Predicated region
    $region54: #{tpu_custom_call.1} parent=1 // pred_check
      _
    $region55: #{tpu_custom_call.1} parent=1 // pred_check_branch
      %100 = sbr.rel (0) target = $region57
    $region56: #{tpu_custom_call.1} parent=1 // pred_region
      %101 = dma.done [#allocation11], 6144
    $region57: #{tpu_custom_call.1} parent=1 // pred_fallthru
      _
    // Predicated region
    $region58: #{tpu_custom_call.1} parent=1 // pred_check
      _
    $region59: #{tpu_custom_call.1} parent=1 // pred_check_branch
      %103 = sbr.rel (0) target = $region61
    $region60: #{tpu_custom_call.1} parent=1 // pred_region
      %104 = dma.done [#allocation11], 2048
    $region61: #{tpu_custom_call.1} parent=1 // pred_fallthru
      _
    %p105 = scmp.eq.s32.totalorder 0, 0
    // Predicated region
    $region62: #{tpu_custom_call.1} parent=1 // pred_check
      %p106 = pneg %p105
    $region63: #{tpu_custom_call.1} parent=1 // pred_check_branch
      %108 = sbr.rel (%p106) target = $region65
    $region64: #{tpu_custom_call.1} parent=1 // pred_region
      %v109 = vld [vmem:[#allocation7] sm:$0xff]
      %110 = vst [vmem:[#allocation14] sm:$0xff] %v109
    $region65: #{tpu_custom_call.1} parent=1 // pred_fallthru
      _
    %v111 = vld [vmem:[#allocation4] sm:$0xff]
    %v112 = vld [vmem:[#allocation4 + $0x8] sm:$0xff]
    %v113 = vld [vmem:[#allocation4 + $0x10] sm:$0xff]
    %v114 = vld [vmem:[#allocation4 + $0x18] sm:$0xff]
    %v115 = vld [vmem:[#allocation4 + $0x20] sm:$0xff]
    %v116 = vld [vmem:[#allocation4 + $0x28] sm:$0xff]
    %v117 = vld [vmem:[#allocation4 + $0x30] sm:$0xff]
    %v118 = vld [vmem:[#allocation4 + $0x38] sm:$0xff]
    %v119 = vld [vmem:[%s2] sm:$0xff]
    %v120 = vld [vmem:[%s2 + $0x8] sm:$0xff]
    %v121 = vld [vmem:[%s3] sm:$0x1]
    %v123 = vlaneseq
    %v124 = vshrl.u32 %v123, 7
    %v125 = vsub.s32 0, %v124
    %v126 = vrot.slane %v121, %v125
    %vm128 = vcmask 130048
    %v130 = vsel %vm128, %v111, 0
    %v133 = vsel %vm128, %v112, 0
    %v136 = vsel %vm128, %v113, 0
    %v139 = vsel %vm128, %v114, 0
    %v142 = vsel %vm128, %v115, 0
    %v145 = vsel %vm128, %v116, 0
    %v148 = vsel %vm128, %v117, 0
    %v151 = vsel %vm128, %v118, 0
    %153 = vmatprep.subr.mxu0 0.0
    %154 = vmatpush1.msra.mxu0 %v119
    %155 = vmatprep.subr.mxu0 0.0
    %156 = vmatpush1.msra.mxu0 %v120
    %157 = vmatprep.subr.mxu0 0.0
    %158 = vmatpush1.msra.mxu0 0.0
    %159 = vmatprep.subr.mxu0 0.0
    %160 = vmatpush1.msra.mxu0 0.0
    %161 = vmatprep.subr.mxu0 0.0
    %162 = vmatpush1.msra.mxu0 0.0
    %163 = vmatprep.subr.mxu0 0.0
    %164 = vmatpush1.msra.mxu0 0.0
    %165 = vmatprep.subr.mxu0 0.0
    %166 = vmatpush1.msra.mxu0 0.0
    %167 = vmatprep.subr.mxu0 0.0
    %168 = vmatpush1.msra.mxu0 0.0
    %169 = vmatprep.subr.mxu0 0.0
    %170 = vmatpush1.msra.mxu0 0.0
    %171 = vmatprep.subr.mxu0 0.0
    %172 = vmatpush1.msra.mxu0 0.0
    %173 = vmatprep.subr.mxu0 0.0
    %174 = vmatpush1.msra.mxu0 0.0
    %175 = vmatprep.subr.mxu0 0.0
    %176 = vmatpush1.msra.mxu0 0.0
    %177 = vmatprep.subr.mxu0 0.0
    %178 = vmatpush1.msra.mxu0 0.0
    %179 = vmatprep.subr.mxu0 0.0
    %180 = vmatpush1.msra.mxu0 0.0
    %181 = vmatprep.subr.mxu0 0.0
    %182 = vmatpush1.msra.mxu0 0.0
    %183 = vmatprep.subr.mxu0 0.0
    %184 = vmatpush1.msra.mxu0 0.0
    %185 = vmatprep.subr.mxu0 0.0
    %186 = vmatpush1.msra.mxu0 0.0
    %187 = vmatprep.subr.mxu0 0.0
    %188 = vmatpush1.msra.mxu0 0.0
    %189 = vmatprep.subr.mxu0 0.0
    %190 = vmatpush1.msra.mxu0 0.0
    %191 = vmatprep.subr.mxu0 0.0
    %192 = vmatpush1.msra.mxu0 0.0
    %193 = vmatprep.subr.mxu0 0.0
    %194 = vmatpush1.msra.mxu0 0.0
    %195 = vmatprep.subr.mxu0 0.0
    %196 = vmatpush1.msra.mxu0 0.0
    %197 = vmatprep.subr.mxu0 0.0
    %198 = vmatpush1.msra.mxu0 0.0
    %199 = vmatprep.subr.mxu0 0.0
    %200 = vmatpush1.msra.mxu0 0.0
    %201 = vmatprep.subr.mxu0 0.0
    %202 = vmatpush1.msra.mxu0 0.0
    %203 = vmatprep.subr.mxu0 0.0
    %204 = vmatpush1.msra.mxu0 0.0
    %205 = vmatprep.subr.mxu0 0.0
    %206 = vmatpush1.msra.mxu0 0.0
    %207 = vmatprep.subr.mxu0 0.0
    %208 = vmatpush1.msra.mxu0 0.0
    %209 = vmatprep.subr.mxu0 0.0
    %210 = vmatpush1.msra.mxu0 0.0
    %211 = vmatprep.subr.mxu0 0.0
    %212 = vmatpush1.msra.mxu0 0.0
    %213 = vmatprep.subr.mxu0 0.0
    %214 = vmatpush1.msra.mxu0 0.0
    %215 = vmatprep.subr.mxu0 0.0
    %216 = vmatpush1.msra.mxu0 0.0
    %217 = vmatprep.mubr.f32.mxu0 0.0
    %218 = vmatmul.mubr.f32.gmra.mrb[0].mxu0 %v130
    %v219 = vpop.f32.mrb[0].mxu0
    %v220 = vadd.f32 %v126, %v219
    %v221 = vpop.f32.mrb[0].mxu0
    %222 = vmatprep.mubr.f32.mxu0 0.0
    %223 = vmatmul.mubr.f32.gmra.mrb[0].mxu0 %v133
    %v224 = vpop.f32.mrb[0].mxu0
    %v225 = vadd.f32 %v126, %v224
    %v226 = vpop.f32.mrb[0].mxu0
    %227 = vmatprep.mubr.f32.mxu0 0.0
    %228 = vmatmul.mubr.f32.gmra.mrb[0].mxu0 %v136
    %v229 = vpop.f32.mrb[0].mxu0
    %v230 = vadd.f32 %v126, %v229
    %v231 = vpop.f32.mrb[0].mxu0
    %232 = vmatprep.mubr.f32.mxu0 0.0
    %233 = vmatmul.mubr.f32.gmra.mrb[0].mxu0 %v139
    %v234 = vpop.f32.mrb[0].mxu0
    %v235 = vadd.f32 %v126, %v234
    %v236 = vpop.f32.mrb[0].mxu0
    %237 = vmatprep.mubr.f32.mxu0 0.0
    %238 = vmatmul.mubr.f32.gmra.mrb[0].mxu0 %v142
    %v239 = vpop.f32.mrb[0].mxu0
    %v240 = vadd.f32 %v126, %v239
    %v241 = vpop.f32.mrb[0].mxu0
    %242 = vmatprep.mubr.f32.mxu0 0.0
    %243 = vmatmul.mubr.f32.gmra.mrb[0].mxu0 %v145
    %v244 = vpop.f32.mrb[0].mxu0
    %v245 = vadd.f32 %v126, %v244
    %v246 = vpop.f32.mrb[0].mxu0
    %247 = vmatprep.mubr.f32.mxu0 0.0
    %248 = vmatmul.mubr.f32.gmra.mrb[0].mxu0 %v148
    %v249 = vpop.f32.mrb[0].mxu0
    %v250 = vadd.f32 %v126, %v249
    %v251 = vpop.f32.mrb[0].mxu0
    %252 = vmatprep.mubr.f32.mxu0 0.0
    %253 = vmatmul.mubr.f32.gmra.mrb[0].mxu0 %v151
    %v254 = vpop.f32.mrb[0].mxu0
    %v255 = vadd.f32 %v126, %v254
    %v256 = vpop.f32.mrb[0].mxu0
    %257 = vdwg.mxu0
    %v258 = vmax.f32 %v220, 0.0
    %v259 = vmax.f32 %v225, 0.0
    %v260 = vmax.f32 %v230, 0.0
    %v261 = vmax.f32 %v235, 0.0
    %v262 = vmax.f32 %v240, 0.0
    %v263 = vmax.f32 %v245, 0.0
    %v264 = vmax.f32 %v250, 0.0
    %v265 = vmax.f32 %v255, 0.0
    %v266 = vld [vmem:[#allocation9] sm:$0xff]
    %v267 = vld [vmem:[#allocation9 + $0x8] sm:$0xff]
    %v268 = vld [vmem:[#allocation9 + $0x10] sm:$0xff]
    %v269 = vld [vmem:[#allocation9 + $0x18] sm:$0xff]
    %v270 = vld [vmem:[#allocation9 + $0x20] sm:$0xff]
    %v271 = vld [vmem:[#allocation9 + $0x28] sm:$0xff]
    %v272 = vld [vmem:[#allocation9 + $0x30] sm:$0xff]
    %v273 = vld [vmem:[#allocation9 + $0x38] sm:$0xff]
    %v274 = vld [vmem:[#allocation9 + $0x40] sm:$0xff]
    %v275 = vld [vmem:[#allocation9 + $0x48] sm:$0xff]
    %v276 = vld [vmem:[#allocation9 + $0x50] sm:$0xff]
    %v277 = vld [vmem:[#allocation9 + $0x58] sm:$0xff]
    %v278 = vld [vmem:[#allocation9 + $0x60] sm:$0xff]
    %v279 = vld [vmem:[#allocation9 + $0x68] sm:$0xff]
    %v280 = vld [vmem:[#allocation9 + $0x70] sm:$0xff]
    %v281 = vld [vmem:[#allocation9 + $0x78] sm:$0xff]
    %v282 = vld [vmem:[#allocation9 + $0x80] sm:$0xff]
    %v283 = vld [vmem:[#allocation9 + $0x88] sm:$0xff]
    %v284 = vld [vmem:[#allocation9 + $0x90] sm:$0xff]
    %v285 = vld [vmem:[#allocation9 + $0x98] sm:$0xff]
    %v286 = vld [vmem:[#allocation9 + $0xa0] sm:$0xff]
    %v287 = vld [vmem:[#allocation9 + $0xa8] sm:$0xff]
    %v288 = vld [vmem:[#allocation9 + $0xb0] sm:$0xff]
    %v289 = vld [vmem:[#allocation9 + $0xb8] sm:$0xff]
    %v290 = vld [vmem:[#allocation9 + $0xc0] sm:$0xff]
    %v291 = vld [vmem:[#allocation9 + $0xc8] sm:$0xff]
    %v292 = vld [vmem:[#allocation9 + $0xd0] sm:$0xff]
    %v293 = vld [vmem:[#allocation9 + $0xd8] sm:$0xff]
    %v294 = vld [vmem:[#allocation9 + $0xe0] sm:$0xff]
    %v295 = vld [vmem:[#allocation9 + $0xe8] sm:$0xff]
    %v296 = vld [vmem:[#allocation9 + $0xf0] sm:$0xff]
    %v297 = vld [vmem:[#allocation9 + $0xf8] sm:$0xff]
    %v298 = vld [vmem:[#allocation9 + $0x100] sm:$0xff]
    %v299 = vld [vmem:[#allocation9 + $0x108] sm:$0xff]
    %v300 = vld [vmem:[#allocation9 + $0x110] sm:$0xff]
    %v301 = vld [vmem:[#allocation9 + $0x118] sm:$0xff]
    %v302 = vld [vmem:[#allocation9 + $0x120] sm:$0xff]
    %v303 = vld [vmem:[#allocation9 + $0x128] sm:$0xff]
    %v304 = vld [vmem:[#allocation9 + $0x130] sm:$0xff]
    %v305 = vld [vmem:[#allocation9 + $0x138] sm:$0xff]
    %v306 = vld [vmem:[#allocation9 + $0x140] sm:$0xff]
    %v307 = vld [vmem:[#allocation9 + $0x148] sm:$0xff]
    %v308 = vld [vmem:[#allocation9 + $0x150] sm:$0xff]
    %v309 = vld [vmem:[#allocation9 + $0x158] sm:$0xff]
    %v310 = vld [vmem:[#allocation9 + $0x160] sm:$0xff]
    %v311 = vld [vmem:[#allocation9 + $0x168] sm:$0xff]
    %v312 = vld [vmem:[#allocation9 + $0x170] sm:$0xff]
    %v313 = vld [vmem:[#allocation9 + $0x178] sm:$0xff]
    %v314 = vld [vmem:[%s5] sm:$0x7]
    %v316 = vlaneseq
    %v317 = vshrl.u32 %v316, 7
    %v318 = vsub.s32 0, %v317
    %v319 = vrot.slane %v314, %v318
    %v320 = vlaneseq
    %v321 = vshrl.u32 %v320, 7
    %v322 = vsub.s32 1, %v321
    %v323 = vrot.slane %v314, %v322
    %v324 = vlaneseq
    %v325 = vshrl.u32 %v324, 7
    %v326 = vsub.s32 2, %v325
    %v327 = vrot.slane %v314, %v326
    %331 = vmatprep.subr.mxu0 %v267
    %332 = vmatpush1.msra.mxu0 %v266
    %333 = vmatprep.subr.mxu0 %v270
    %334 = vmatpush1.msra.mxu0 %v269
    %335 = vmatprep.subr.mxu0 %v273
    %336 = vmatpush1.msra.mxu0 %v272
    %337 = vmatprep.subr.mxu0 %v276
    %338 = vmatpush1.msra.mxu0 %v275
    %339 = vmatprep.subr.mxu0 %v279
    %340 = vmatpush1.msra.mxu0 %v278
    %341 = vmatprep.subr.mxu0 %v282
    %342 = vmatpush1.msra.mxu0 %v281
    %343 = vmatprep.subr.mxu0 %v285
    %344 = vmatpush1.msra.mxu0 %v284
    %345 = vmatprep.subr.mxu0 %v288
    %346 = vmatpush1.msra.mxu0 %v287
    %347 = vmatprep.subr.mxu0 %v291
    %348 = vmatpush1.msra.mxu0 %v290
    %349 = vmatprep.subr.mxu0 %v294
    %350 = vmatpush1.msra.mxu0 %v293
    %351 = vmatprep.subr.mxu0 %v297
    %352 = vmatpush1.msra.mxu0 %v296
    %353 = vmatprep.subr.mxu0 %v300
    %354 = vmatpush1.msra.mxu0 %v299
    %355 = vmatprep.subr.mxu0 %v303
    %356 = vmatpush1.msra.mxu0 %v302
    %357 = vmatprep.subr.mxu0 %v306
    %358 = vmatpush1.msra.mxu0 %v305
    %359 = vmatprep.subr.mxu0 %v309
    %360 = vmatpush1.msra.mxu0 %v308
    %361 = vmatprep.subr.mxu0 %v312
    %362 = vmatpush1.msra.mxu0 %v311
    %363 = vmatprep.subr.mxu0 0.0
    %364 = vmatpush1.msra.mxu0 0.0
    %365 = vmatprep.subr.mxu0 0.0
    %366 = vmatpush1.msra.mxu0 0.0
    %367 = vmatprep.subr.mxu0 0.0
    %368 = vmatpush1.msra.mxu0 0.0
    %369 = vmatprep.subr.mxu0 0.0
    %370 = vmatpush1.msra.mxu0 0.0
    %371 = vmatprep.subr.mxu0 0.0
    %372 = vmatpush1.msra.mxu0 0.0
    %373 = vmatprep.subr.mxu0 0.0
    %374 = vmatpush1.msra.mxu0 0.0
    %375 = vmatprep.subr.mxu0 0.0
    %376 = vmatpush1.msra.mxu0 0.0
    %377 = vmatprep.subr.mxu0 0.0
    %378 = vmatpush1.msra.mxu0 0.0
    %379 = vmatprep.subr.mxu0 0.0
    %380 = vmatpush1.msra.mxu0 0.0
    %381 = vmatprep.subr.mxu0 0.0
    %382 = vmatpush1.msra.mxu0 0.0
    %383 = vmatprep.subr.mxu0 0.0
    %384 = vmatpush1.msra.mxu0 0.0
    %385 = vmatprep.subr.mxu0 0.0
    %386 = vmatpush1.msra.mxu0 0.0
    %387 = vmatprep.subr.mxu0 0.0
    %388 = vmatpush1.msra.mxu0 0.0
    %389 = vmatprep.subr.mxu0 0.0
    %390 = vmatpush1.msra.mxu0 0.0
    %391 = vmatprep.subr.mxu0 0.0
    %392 = vmatpush1.msra.mxu0 0.0
    %393 = vmatprep.subr.mxu0 0.0
    %394 = vmatpush1.msra.mxu0 0.0
    %395 = vmatprep.mubr.f32.mxu0 0.0
    %396 = vmatmul.mubr.f32.gmra.mrb[0].mxu0 %v258
    %v397 = vpop.f32.mrb[0].mxu0
    %v398 = vadd.f32 %v319, %v397
    %v399 = vpop.f32.mrb[0].mxu0
    %v400 = vadd.f32 %v323, %v399
    %401 = vmatprep.mubr.f32.mxu0 0.0
    %402 = vmatmul.mubr.f32.gmra.mrb[0].mxu0 %v259
    %v403 = vpop.f32.mrb[0].mxu0
    %v404 = vadd.f32 %v319, %v403
    %v405 = vpop.f32.mrb[0].mxu0
    %v406 = vadd.f32 %v323, %v405
    %407 = vmatprep.mubr.f32.mxu0 0.0
    %408 = vmatmul.mubr.f32.gmra.mrb[0].mxu0 %v260
    %v409 = vpop.f32.mrb[0].mxu0
    %v410 = vadd.f32 %v319, %v409
    %v411 = vpop.f32.mrb[0].mxu0
    %v412 = vadd.f32 %v323, %v411
    %413 = vmatprep.mubr.f32.mxu0 0.0
    %414 = vmatmul.mubr.f32.gmra.mrb[0].mxu0 %v261
    %v415 = vpop.f32.mrb[0].mxu0
    %v416 = vadd.f32 %v319, %v415
    %v417 = vpop.f32.mrb[0].mxu0
    %v418 = vadd.f32 %v323, %v417
    %419 = vmatprep.mubr.f32.mxu0 0.0
    %420 = vmatmul.mubr.f32.gmra.mrb[0].mxu0 %v262
    %v421 = vpop.f32.mrb[0].mxu0
    %v422 = vadd.f32 %v319, %v421
    %v423 = vpop.f32.mrb[0].mxu0
    %v424 = vadd.f32 %v323, %v423
    %425 = vmatprep.mubr.f32.mxu0 0.0
    %426 = vmatmul.mubr.f32.gmra.mrb[0].mxu0 %v263
    %v427 = vpop.f32.mrb[0].mxu0
    %v428 = vadd.f32 %v319, %v427
    %v429 = vpop.f32.mrb[0].mxu0
    %v430 = vadd.f32 %v323, %v429
    %431 = vmatprep.mubr.f32.mxu0 0.0
    %432 = vmatmul.mubr.f32.gmra.mrb[0].mxu0 %v264
    %v433 = vpop.f32.mrb[0].mxu0
    %v434 = vadd.f32 %v319, %v433
    %v435 = vpop.f32.mrb[0].mxu0
    %v436 = vadd.f32 %v323, %v435
    %437 = vmatprep.mubr.f32.mxu0 0.0
    %438 = vmatmul.mubr.f32.gmra.mrb[0].mxu0 %v265
    %v439 = vpop.f32.mrb[0].mxu0
    %v440 = vadd.f32 %v319, %v439
    %v441 = vpop.f32.mrb[0].mxu0
    %v442 = vadd.f32 %v323, %v441
    %443 = vdwg.mxu0
    %444 = vmatprep.subr.mxu0 0.0
    %445 = vmatpush1.msra.mxu0 %v268
    %446 = vmatprep.subr.mxu0 0.0
    %447 = vmatpush1.msra.mxu0 %v271
    %448 = vmatprep.subr.mxu0 0.0
    %449 = vmatpush1.msra.mxu0 %v274
    %450 = vmatprep.subr.mxu0 0.0
    %451 = vmatpush1.msra.mxu0 %v277
    %452 = vmatprep.subr.mxu0 0.0
    %453 = vmatpush1.msra.mxu0 %v280
    %454 = vmatprep.subr.mxu0 0.0
    %455 = vmatpush1.msra.mxu0 %v283
    %456 = vmatprep.subr.mxu0 0.0
    %457 = vmatpush1.msra.mxu0 %v286
    %458 = vmatprep.subr.mxu0 0.0
    %459 = vmatpush1.msra.mxu0 %v289
    %460 = vmatprep.subr.mxu0 0.0
    %461 = vmatpush1.msra.mxu0 %v292
    %462 = vmatprep.subr.mxu0 0.0
    %463 = vmatpush1.msra.mxu0 %v295
    %464 = vmatprep.subr.mxu0 0.0
    %465 = vmatpush1.msra.mxu0 %v298
    %466 = vmatprep.subr.mxu0 0.0
    %467 = vmatpush1.msra.mxu0 %v301
    %468 = vmatprep.subr.mxu0 0.0
    %469 = vmatpush1.msra.mxu0 %v304
    %470 = vmatprep.subr.mxu0 0.0
    %471 = vmatpush1.msra.mxu0 %v307
    %472 = vmatprep.subr.mxu0 0.0
    %473 = vmatpush1.msra.mxu0 %v310
    %474 = vmatprep.subr.mxu0 0.0
    %475 = vmatpush1.msra.mxu0 %v313
    %476 = vmatprep.subr.mxu0 0.0
    %477 = vmatpush1.msra.mxu0 0.0
    %478 = vmatprep.subr.mxu0 0.0
    %479 = vmatpush1.msra.mxu0 0.0
    %480 = vmatprep.subr.mxu0 0.0
    %481 = vmatpush1.msra.mxu0 0.0
    %482 = vmatprep.subr.mxu0 0.0
    %483 = vmatpush1.msra.mxu0 0.0
    %484 = vmatprep.subr.mxu0 0.0
    %485 = vmatpush1.msra.mxu0 0.0
    %486 = vmatprep.subr.mxu0 0.0
    %487 = vmatpush1.msra.mxu0 0.0
    %488 = vmatprep.subr.mxu0 0.0
    %489 = vmatpush1.msra.mxu0 0.0
    %490 = vmatprep.subr.mxu0 0.0
    %491 = vmatpush1.msra.mxu0 0.0
    %492 = vmatprep.subr.mxu0 0.0
    %493 = vmatpush1.msra.mxu0 0.0
    %494 = vmatprep.subr.mxu0 0.0
    %495 = vmatpush1.msra.mxu0 0.0
    %496 = vmatprep.subr.mxu0 0.0
    %497 = vmatpush1.msra.mxu0 0.0
    %498 = vmatprep.subr.mxu0 0.0
    %499 = vmatpush1.msra.mxu0 0.0
    %500 = vmatprep.subr.mxu0 0.0
    %501 = vmatpush1.msra.mxu0 0.0
    %502 = vmatprep.subr.mxu0 0.0
    %503 = vmatpush1.msra.mxu0 0.0
    %504 = vmatprep.subr.mxu0 0.0
    %505 = vmatpush1.msra.mxu0 0.0
    %506 = vmatprep.subr.mxu0 0.0
    %507 = vmatpush1.msra.mxu0 0.0
    %508 = vmatprep.mubr.f32.mxu0 0.0
    %509 = vmatmul.mubr.f32.gmra.mrb[0].mxu0 %v258
    %v510 = vpop.f32.mrb[0].mxu0
    %v511 = vadd.f32 %v327, %v510
    %v512 = vpop.f32.mrb[0].mxu0
    %513 = vmatprep.mubr.f32.mxu0 0.0
    %514 = vmatmul.mubr.f32.gmra.mrb[0].mxu0 %v259
    %v515 = vpop.f32.mrb[0].mxu0
    %v516 = vadd.f32 %v327, %v515
    %v517 = vpop.f32.mrb[0].mxu0
    %518 = vmatprep.mubr.f32.mxu0 0.0
    %519 = vmatmul.mubr.f32.gmra.mrb[0].mxu0 %v260
    %v520 = vpop.f32.mrb[0].mxu0
    %v521 = vadd.f32 %v327, %v520
    %v522 = vpop.f32.mrb[0].mxu0
    %523 = vmatprep.mubr.f32.mxu0 0.0
    %524 = vmatmul.mubr.f32.gmra.mrb[0].mxu0 %v261
    %v525 = vpop.f32.mrb[0].mxu0
    %v526 = vadd.f32 %v327, %v525
    %v527 = vpop.f32.mrb[0].mxu0
    %528 = vmatprep.mubr.f32.mxu0 0.0
    %529 = vmatmul.mubr.f32.gmra.mrb[0].mxu0 %v262
    %v530 = vpop.f32.mrb[0].mxu0
    %v531 = vadd.f32 %v327, %v530
    %v532 = vpop.f32.mrb[0].mxu0
    %533 = vmatprep.mubr.f32.mxu0 0.0
    %534 = vmatmul.mubr.f32.gmra.mrb[0].mxu0 %v263
    %v535 = vpop.f32.mrb[0].mxu0
    %v536 = vadd.f32 %v327, %v535
    %v537 = vpop.f32.mrb[0].mxu0
    %538 = vmatprep.mubr.f32.mxu0 0.0
    %539 = vmatmul.mubr.f32.gmra.mrb[0].mxu0 %v264
    %v540 = vpop.f32.mrb[0].mxu0
    %v541 = vadd.f32 %v327, %v540
    %v542 = vpop.f32.mrb[0].mxu0
    %543 = vmatprep.mubr.f32.mxu0 0.0
    %544 = vmatmul.mubr.f32.gmra.mrb[0].mxu0 %v265
    %v545 = vpop.f32.mrb[0].mxu0
    %v546 = vadd.f32 %v327, %v545
    %v547 = vpop.f32.mrb[0].mxu0
    %548 = vdwg.mxu0
    %549 = vst [vmem:[#allocation2] sm:$0xff] %v398
    %550 = vst [vmem:[#allocation2 + $0x8] sm:$0xff] %v400
    %551 = vst [vmem:[#allocation2 + $0x10] sm:$0xff] %v511
    %552 = vst [vmem:[#allocation2 + $0x18] sm:$0xff] %v404
    %553 = vst [vmem:[#allocation2 + $0x20] sm:$0xff] %v406
    %554 = vst [vmem:[#allocation2 + $0x28] sm:$0xff] %v516
    %555 = vst [vmem:[#allocation2 + $0x30] sm:$0xff] %v410
    %556 = vst [vmem:[#allocation2 + $0x38] sm:$0xff] %v412
    %557 = vst [vmem:[#allocation2 + $0x40] sm:$0xff] %v521
    %558 = vst [vmem:[#allocation2 + $0x48] sm:$0xff] %v416
    %559 = vst [vmem:[#allocation2 + $0x50] sm:$0xff] %v418
    %560 = vst [vmem:[#allocation2 + $0x58] sm:$0xff] %v526
    %561 = vst [vmem:[#allocation2 + $0x60] sm:$0xff] %v422
    %562 = vst [vmem:[#allocation2 + $0x68] sm:$0xff] %v424
    %563 = vst [vmem:[#allocation2 + $0x70] sm:$0xff] %v531
    %564 = vst [vmem:[#allocation2 + $0x78] sm:$0xff] %v428
    %565 = vst [vmem:[#allocation2 + $0x80] sm:$0xff] %v430
    %566 = vst [vmem:[#allocation2 + $0x88] sm:$0xff] %v536
    %567 = vst [vmem:[#allocation2 + $0x90] sm:$0xff] %v434
    %568 = vst [vmem:[#allocation2 + $0x98] sm:$0xff] %v436
    %569 = vst [vmem:[#allocation2 + $0xa0] sm:$0xff] %v541
    %570 = vst [vmem:[#allocation2 + $0xa8] sm:$0xff] %v440
    %571 = vst [vmem:[#allocation2 + $0xb0] sm:$0xff] %v442
    %572 = vst [vmem:[#allocation2 + $0xb8] sm:$0xff] %v546
    %v573 = vld [vmem:[%s7] sm:$0x7]
    %v575 = vlaneseq
    %v576 = vshrl.u32 %v575, 7
    %v577 = vsub.s32 0, %v576
    %v578 = vrot.slane %v573, %v577
    %v579 = vlaneseq
    %v580 = vshrl.u32 %v579, 7
    %v581 = vsub.s32 1, %v580
    %v582 = vrot.slane %v573, %v581
    %v583 = vlaneseq
    %v584 = vshrl.u32 %v583, 7
    %v585 = vsub.s32 2, %v584
    %v586 = vrot.slane %v573, %v585
    %v590 = vld [vmem:[#allocation14] sm:$0xff]
    %v591 = vld [vmem:[#allocation2] sm:$0xff]
    %v592 = vld [vmem:[#allocation2 + $0x8] sm:$0xff]
    %v593 = vld [vmem:[#allocation2 + $0x10] sm:$0xff]
    %v594 = vld [vmem:[#allocation10] sm:$0xff]
    %v595 = vld [vmem:[#allocation10 + $0x8] sm:$0xff]
    %v596 = vld [vmem:[#allocation10 + $0x10] sm:$0xff]
    %v597 = vld [vmem:[#allocation10 + $0x18] sm:$0xff]
    %v598 = vld [vmem:[#allocation10 + $0x20] sm:$0xff]
    %v599 = vld [vmem:[#allocation10 + $0x28] sm:$0xff]
    %v600 = vld [vmem:[#allocation10 + $0x30] sm:$0xff]
    %v601 = vld [vmem:[#allocation10 + $0x38] sm:$0xff]
    %v602 = vld [vmem:[#allocation10 + $0x40] sm:$0xff]
    %v603 = vld [vmem:[#allocation10 + $0x48] sm:$0xff]
    %v604 = vld [vmem:[#allocation10 + $0x50] sm:$0xff]
    %v605 = vld [vmem:[#allocation10 + $0x58] sm:$0xff]
    %v606 = vld [vmem:[#allocation10 + $0x60] sm:$0xff]
    %v607 = vld [vmem:[#allocation10 + $0x68] sm:$0xff]
    %v608 = vld [vmem:[#allocation10 + $0x70] sm:$0xff]
    %v609 = vld [vmem:[#allocation10 + $0x78] sm:$0xff]
    %v610 = vld [vmem:[#allocation10 + $0x80] sm:$0xff]
    %v611 = vld [vmem:[#allocation10 + $0x88] sm:$0xff]
    %v612 = vld [vmem:[#allocation10 + $0x90] sm:$0xff]
    %v613 = vld [vmem:[#allocation10 + $0x98] sm:$0xff]
    %v614 = vld [vmem:[#allocation10 + $0xa0] sm:$0xff]
    %v615 = vld [vmem:[#allocation10 + $0xa8] sm:$0xff]
    %v616 = vld [vmem:[#allocation10 + $0xb0] sm:$0xff]
    %v617 = vld [vmem:[#allocation10 + $0xb8] sm:$0xff]
    %v618 = vld [vmem:[#allocation10 + $0xc0] sm:$0xff]
    %v619 = vld [vmem:[#allocation10 + $0xc8] sm:$0xff]
    %v620 = vld [vmem:[#allocation10 + $0xd0] sm:$0xff]
    %v621 = vld [vmem:[#allocation10 + $0xd8] sm:$0xff]
    %v622 = vld [vmem:[#allocation10 + $0xe0] sm:$0xff]
    %v623 = vld [vmem:[#allocation10 + $0xe8] sm:$0xff]
    %v624 = vld [vmem:[#allocation10 + $0xf0] sm:$0xff]
    %v625 = vld [vmem:[#allocation10 + $0xf8] sm:$0xff]
    %v626 = vld [vmem:[#allocation10 + $0x100] sm:$0xff]
    %v627 = vld [vmem:[#allocation10 + $0x108] sm:$0xff]
    %v628 = vld [vmem:[#allocation10 + $0x110] sm:$0xff]
    %v629 = vld [vmem:[#allocation10 + $0x118] sm:$0xff]
    %v630 = vld [vmem:[#allocation10 + $0x120] sm:$0xff]
    %v631 = vld [vmem:[#allocation10 + $0x128] sm:$0xff]
    %v632 = vld [vmem:[#allocation10 + $0x130] sm:$0xff]
    %v633 = vld [vmem:[#allocation10 + $0x138] sm:$0xff]
    %v634 = vld [vmem:[#allocation10 + $0x140] sm:$0xff]
    %v635 = vld [vmem:[#allocation10 + $0x148] sm:$0xff]
    %v636 = vld [vmem:[#allocation10 + $0x150] sm:$0xff]
    %v637 = vld [vmem:[#allocation10 + $0x158] sm:$0xff]
    %v638 = vld [vmem:[#allocation10 + $0x160] sm:$0xff]
    %v639 = vld [vmem:[#allocation10 + $0x168] sm:$0xff]
    %v640 = vld [vmem:[#allocation10 + $0x170] sm:$0xff]
    %v641 = vld [vmem:[#allocation10 + $0x178] sm:$0xff]
    %642 = vmatprep.subr.mxu0 %v595
    %643 = vmatpush1.msra.mxu0 %v594
    %644 = vmatprep.subr.mxu0 %v598
    %645 = vmatpush1.msra.mxu0 %v597
    %646 = vmatprep.subr.mxu0 %v601
    %647 = vmatpush1.msra.mxu0 %v600
    %648 = vmatprep.subr.mxu0 %v604
    %649 = vmatpush1.msra.mxu0 %v603
    %650 = vmatprep.subr.mxu0 %v607
    %651 = vmatpush1.msra.mxu0 %v606
    %652 = vmatprep.subr.mxu0 %v610
    %653 = vmatpush1.msra.mxu0 %v609
    %654 = vmatprep.subr.mxu0 %v613
    %655 = vmatpush1.msra.mxu0 %v612
    %656 = vmatprep.subr.mxu0 %v616
    %657 = vmatpush1.msra.mxu0 %v615
    %658 = vmatprep.subr.mxu0 %v619
    %659 = vmatpush1.msra.mxu0 %v618
    %660 = vmatprep.subr.mxu0 %v622
    %661 = vmatpush1.msra.mxu0 %v621
    %662 = vmatprep.subr.mxu0 %v625
    %663 = vmatpush1.msra.mxu0 %v624
    %664 = vmatprep.subr.mxu0 %v628
    %665 = vmatpush1.msra.mxu0 %v627
    %666 = vmatprep.subr.mxu0 %v631
    %667 = vmatpush1.msra.mxu0 %v630
    %668 = vmatprep.subr.mxu0 %v634
    %669 = vmatpush1.msra.mxu0 %v633
    %670 = vmatprep.subr.mxu0 %v637
    %671 = vmatpush1.msra.mxu0 %v636
    %672 = vmatprep.subr.mxu0 %v640
    %673 = vmatpush1.msra.mxu0 %v639
    %674 = vmatprep.subr.mxu0 0.0
    %675 = vmatpush1.msra.mxu0 0.0
    %676 = vmatprep.subr.mxu0 0.0
    %677 = vmatpush1.msra.mxu0 0.0
    %678 = vmatprep.subr.mxu0 0.0
    %679 = vmatpush1.msra.mxu0 0.0
    %680 = vmatprep.subr.mxu0 0.0
    %681 = vmatpush1.msra.mxu0 0.0
    %682 = vmatprep.subr.mxu0 0.0
    %683 = vmatpush1.msra.mxu0 0.0
    %684 = vmatprep.subr.mxu0 0.0
    %685 = vmatpush1.msra.mxu0 0.0
    %686 = vmatprep.subr.mxu0 0.0
    %687 = vmatpush1.msra.mxu0 0.0
    %688 = vmatprep.subr.mxu0 0.0
    %689 = vmatpush1.msra.mxu0 0.0
    %690 = vmatprep.subr.mxu0 0.0
    %691 = vmatpush1.msra.mxu0 0.0
    %692 = vmatprep.subr.mxu0 0.0
    %693 = vmatpush1.msra.mxu0 0.0
    %694 = vmatprep.subr.mxu0 0.0
    %695 = vmatpush1.msra.mxu0 0.0
    %696 = vmatprep.subr.mxu0 0.0
    %697 = vmatpush1.msra.mxu0 0.0
    %698 = vmatprep.subr.mxu0 0.0
    %699 = vmatpush1.msra.mxu0 0.0
    %700 = vmatprep.subr.mxu0 0.0
    %701 = vmatpush1.msra.mxu0 0.0
    %702 = vmatprep.subr.mxu0 0.0
    %703 = vmatpush1.msra.mxu0 0.0
    %704 = vmatprep.subr.mxu0 0.0
    %705 = vmatpush1.msra.mxu0 0.0
    %706 = vmatprep.mubr.f32.mxu0 0.0
    %707 = vmatmul.mubr.f32.gmra.mrb[0].mxu0 %v590
    %v708 = vpop.f32.mrb[0].mxu0
    %v709 = vadd.f32 %v578, %v708
    %v710 = vpop.f32.mrb[0].mxu0
    %v711 = vadd.f32 %v582, %v710
    %712 = vdwg.mxu0
    %713 = vmatprep.subr.mxu0 0.0
    %714 = vmatpush1.msra.mxu0 %v596
    %715 = vmatprep.subr.mxu0 0.0
    %716 = vmatpush1.msra.mxu0 %v599
    %717 = vmatprep.subr.mxu0 0.0
    %718 = vmatpush1.msra.mxu0 %v602
    %719 = vmatprep.subr.mxu0 0.0
    %720 = vmatpush1.msra.mxu0 %v605
    %721 = vmatprep.subr.mxu0 0.0
    %722 = vmatpush1.msra.mxu0 %v608
    %723 = vmatprep.subr.mxu0 0.0
    %724 = vmatpush1.msra.mxu0 %v611
    %725 = vmatprep.subr.mxu0 0.0
    %726 = vmatpush1.msra.mxu0 %v614
    %727 = vmatprep.subr.mxu0 0.0
    %728 = vmatpush1.msra.mxu0 %v617
    %729 = vmatprep.subr.mxu0 0.0
    %730 = vmatpush1.msra.mxu0 %v620
    %731 = vmatprep.subr.mxu0 0.0
    %732 = vmatpush1.msra.mxu0 %v623
    %733 = vmatprep.subr.mxu0 0.0
    %734 = vmatpush1.msra.mxu0 %v626
    %735 = vmatprep.subr.mxu0 0.0
    %736 = vmatpush1.msra.mxu0 %v629
    %737 = vmatprep.subr.mxu0 0.0
    %738 = vmatpush1.msra.mxu0 %v632
    %739 = vmatprep.subr.mxu0 0.0
    %740 = vmatpush1.msra.mxu0 %v635
    %741 = vmatprep.subr.mxu0 0.0
    %742 = vmatpush1.msra.mxu0 %v638
    %743 = vmatprep.subr.mxu0 0.0
    %744 = vmatpush1.msra.mxu0 %v641
    %745 = vmatprep.subr.mxu0 0.0
    %746 = vmatpush1.msra.mxu0 0.0
    %747 = vmatprep.subr.mxu0 0.0
    %748 = vmatpush1.msra.mxu0 0.0
    %749 = vmatprep.subr.mxu0 0.0
    %750 = vmatpush1.msra.mxu0 0.0
    %751 = vmatprep.subr.mxu0 0.0
    %752 = vmatpush1.msra.mxu0 0.0
    %753 = vmatprep.subr.mxu0 0.0
    %754 = vmatpush1.msra.mxu0 0.0
    %755 = vmatprep.subr.mxu0 0.0
    %756 = vmatpush1.msra.mxu0 0.0
    %757 = vmatprep.subr.mxu0 0.0
    %758 = vmatpush1.msra.mxu0 0.0
    %759 = vmatprep.subr.mxu0 0.0
    %760 = vmatpush1.msra.mxu0 0.0
    %761 = vmatprep.subr.mxu0 0.0
    %762 = vmatpush1.msra.mxu0 0.0
    %763 = vmatprep.subr.mxu0 0.0
    %764 = vmatpush1.msra.mxu0 0.0
    %765 = vmatprep.subr.mxu0 0.0
    %766 = vmatpush1.msra.mxu0 0.0
    %767 = vmatprep.subr.mxu0 0.0
    %768 = vmatpush1.msra.mxu0 0.0
    %769 = vmatprep.subr.mxu0 0.0
    %770 = vmatpush1.msra.mxu0 0.0
    %771 = vmatprep.subr.mxu0 0.0
    %772 = vmatpush1.msra.mxu0 0.0
    %773 = vmatprep.subr.mxu0 0.0
    %774 = vmatpush1.msra.mxu0 0.0
    %775 = vmatprep.subr.mxu0 0.0
    %776 = vmatpush1.msra.mxu0 0.0
    %777 = vmatprep.mubr.f32.mxu0 0.0
    %778 = vmatmul.mubr.f32.gmra.mrb[0].mxu0 %v590
    %v779 = vpop.f32.mrb[0].mxu0
    %v780 = vadd.f32 %v586, %v779
    %v781 = vpop.f32.mrb[0].mxu0
    %782 = vdwg.mxu0
    %v783 = vadd.f32 %v591, %v709
    %v784 = vxor.u32 %v783, 2147483648
    %v785 = vmul.f32 %v784, 1.442695
    %v786 = vpow.pop %v785
    %v787 = vadd.f32 %v786, 1.0
    %v788 = vrcp.pop %v787
    %v789 = vmul.f32 1.0, %v788
    %v790 = vadd.f32 %v592, %v711
    %v791 = vxor.u32 %v790, 2147483648
    %v792 = vmul.f32 %v791, 1.442695
    %v793 = vpow.pop %v792
    %v794 = vadd.f32 %v793, 1.0
    %v795 = vrcp.pop %v794
    %v796 = vmul.f32 1.0, %v795
    %v797 = vmul.f32 %v789, %v780
    %v798 = vadd.f32 %v593, %v797
    %v799 = vtanh.pop %v798
    %v800 = vsub.f32 1.0, %v796
    %v801 = vmul.f32 %v800, %v799
    %v802 = vmul.f32 %v796, %v590
    %v803 = vadd.f32 %v801, %v802
    %804 = vst [vmem:[#allocation3] sm:$0xff] %v803
    %s805 = scalar_lea.vmem [#allocation2], 24
    %v806 = vld [vmem:[%s805] sm:$0xff]
    %v807 = vld [vmem:[%s805 + $0x8] sm:$0xff]
    %v808 = vld [vmem:[%s805 + $0x10] sm:$0xff]
    %v809 = vld [vmem:[#allocation10] sm:$0xff]
    %v810 = vld [vmem:[#allocation10 + $0x8] sm:$0xff]
    %v811 = vld [vmem:[#allocation10 + $0x10] sm:$0xff]
    %v812 = vld [vmem:[#allocation10 + $0x18] sm:$0xff]
    %v813 = vld [vmem:[#allocation10 + $0x20] sm:$0xff]
    %v814 = vld [vmem:[#allocation10 + $0x28] sm:$0xff]
    %v815 = vld [vmem:[#allocation10 + $0x30] sm:$0xff]
    %v816 = vld [vmem:[#allocation10 + $0x38] sm:$0xff]
    %v817 = vld [vmem:[#allocation10 + $0x40] sm:$0xff]
    %v818 = vld [vmem:[#allocation10 + $0x48] sm:$0xff]
    %v819 = vld [vmem:[#allocation10 + $0x50] sm:$0xff]
    %v820 = vld [vmem:[#allocation10 + $0x58] sm:$0xff]
    %v821 = vld [vmem:[#allocation10 + $0x60] sm:$0xff]
    %v822 = vld [vmem:[#allocation10 + $0x68] sm:$0xff]
    %v823 = vld [vmem:[#allocation10 + $0x70] sm:$0xff]
    %v824 = vld [vmem:[#allocation10 + $0x78] sm:$0xff]
    %v825 = vld [vmem:[#allocation10 + $0x80] sm:$0xff]
    %v826 = vld [vmem:[#allocation10 + $0x88] sm:$0xff]
    %v827 = vld [vmem:[#allocation10 + $0x90] sm:$0xff]
    %v828 = vld [vmem:[#allocation10 + $0x98] sm:$0xff]
    %v829 = vld [vmem:[#allocation10 + $0xa0] sm:$0xff]
    %v830 = vld [vmem:[#allocation10 + $0xa8] sm:$0xff]
    %v831 = vld [vmem:[#allocation10 + $0xb0] sm:$0xff]
    %v832 = vld [vmem:[#allocation10 + $0xb8] sm:$0xff]
    %v833 = vld [vmem:[#allocation10 + $0xc0] sm:$0xff]
    %v834 = vld [vmem:[#allocation10 + $0xc8] sm:$0xff]
    %v835 = vld [vmem:[#allocation10 + $0xd0] sm:$0xff]
    %v836 = vld [vmem:[#allocation10 + $0xd8] sm:$0xff]
    %v837 = vld [vmem:[#allocation10 + $0xe0] sm:$0xff]
    %v838 = vld [vmem:[#allocation10 + $0xe8] sm:$0xff]
    %v839 = vld [vmem:[#allocation10 + $0xf0] sm:$0xff]
    %v840 = vld [vmem:[#allocation10 + $0xf8] sm:$0xff]
    %v841 = vld [vmem:[#allocation10 + $0x100] sm:$0xff]
    %v842 = vld [vmem:[#allocation10 + $0x108] sm:$0xff]
    %v843 = vld [vmem:[#allocation10 + $0x110] sm:$0xff]
    %v844 = vld [vmem:[#allocation10 + $0x118] sm:$0xff]
    %v845 = vld [vmem:[#allocation10 + $0x120] sm:$0xff]
    %v846 = vld [vmem:[#allocation10 + $0x128] sm:$0xff]
    %v847 = vld [vmem:[#allocation10 + $0x130] sm:$0xff]
    %v848 = vld [vmem:[#allocation10 + $0x138] sm:$0xff]
    %v849 = vld [vmem:[#allocation10 + $0x140] sm:$0xff]
    %v850 = vld [vmem:[#allocation10 + $0x148] sm:$0xff]
    %v851 = vld [vmem:[#allocation10 + $0x150] sm:$0xff]
    %v852 = vld [vmem:[#allocation10 + $0x158] sm:$0xff]
    %v853 = vld [vmem:[#allocation10 + $0x160] sm:$0xff]
    %v854 = vld [vmem:[#allocation10 + $0x168] sm:$0xff]
    %v855 = vld [vmem:[#allocation10 + $0x170] sm:$0xff]
    %v856 = vld [vmem:[#allocation10 + $0x178] sm:$0xff]
    %857 = vmatprep.subr.mxu0 %v810
    %858 = vmatpush1.msra.mxu0 %v809
    %859 = vmatprep.subr.mxu0 %v813
    %860 = vmatpush1.msra.mxu0 %v812
    %861 = vmatprep.subr.mxu0 %v816
    %862 = vmatpush1.msra.mxu0 %v815
    %863 = vmatprep.subr.mxu0 %v819
    %864 = vmatpush1.msra.mxu0 %v818
    %865 = vmatprep.subr.mxu0 %v822
    %866 = vmatpush1.msra.mxu0 %v821
    %867 = vmatprep.subr.mxu0 %v825
    %868 = vmatpush1.msra.mxu0 %v824
    %869 = vmatprep.subr.mxu0 %v828
    %870 = vmatpush1.msra.mxu0 %v827
    %871 = vmatprep.subr.mxu0 %v831
    %872 = vmatpush1.msra.mxu0 %v830
    %873 = vmatprep.subr.mxu0 %v834
    %874 = vmatpush1.msra.mxu0 %v833
    %875 = vmatprep.subr.mxu0 %v837
    %876 = vmatpush1.msra.mxu0 %v836
    %877 = vmatprep.subr.mxu0 %v840
    %878 = vmatpush1.msra.mxu0 %v839
    %879 = vmatprep.subr.mxu0 %v843
    %880 = vmatpush1.msra.mxu0 %v842
    %881 = vmatprep.subr.mxu0 %v846
    %882 = vmatpush1.msra.mxu0 %v845
    %883 = vmatprep.subr.mxu0 %v849
    %884 = vmatpush1.msra.mxu0 %v848
    %885 = vmatprep.subr.mxu0 %v852
    %886 = vmatpush1.msra.mxu0 %v851
    %887 = vmatprep.subr.mxu0 %v855
    %888 = vmatpush1.msra.mxu0 %v854
    %889 = vmatprep.subr.mxu0 0.0
    %890 = vmatpush1.msra.mxu0 0.0
    %891 = vmatprep.subr.mxu0 0.0
    %892 = vmatpush1.msra.mxu0 0.0
    %893 = vmatprep.subr.mxu0 0.0
    %894 = vmatpush1.msra.mxu0 0.0
    %895 = vmatprep.subr.mxu0 0.0
    %896 = vmatpush1.msra.mxu0 0.0
    %897 = vmatprep.subr.mxu0 0.0
    %898 = vmatpush1.msra.mxu0 0.0
    %899 = vmatprep.subr.mxu0 0.0
    %900 = vmatpush1.msra.mxu0 0.0
    %901 = vmatprep.subr.mxu0 0.0
    %902 = vmatpush1.msra.mxu0 0.0
    %903 = vmatprep.subr.mxu0 0.0
    %904 = vmatpush1.msra.mxu0 0.0
    %905 = vmatprep.subr.mxu0 0.0
    %906 = vmatpush1.msra.mxu0 0.0
    %907 = vmatprep.subr.mxu0 0.0
    %908 = vmatpush1.msra.mxu0 0.0
    %909 = vmatprep.subr.mxu0 0.0
    %910 = vmatpush1.msra.mxu0 0.0
    %911 = vmatprep.subr.mxu0 0.0
    %912 = vmatpush1.msra.mxu0 0.0
    %913 = vmatprep.subr.mxu0 0.0
    %914 = vmatpush1.msra.mxu0 0.0
    %915 = vmatprep.subr.mxu0 0.0
    %916 = vmatpush1.msra.mxu0 0.0
    %917 = vmatprep.subr.mxu0 0.0
    %918 = vmatpush1.msra.mxu0 0.0
    %919 = vmatprep.subr.mxu0 0.0
    %920 = vmatpush1.msra.mxu0 0.0
    %921 = vmatprep.mubr.f32.mxu0 0.0
    %922 = vmatmul.mubr.f32.gmra.mrb[0].mxu0 %v803
    %v923 = vpop.f32.mrb[0].mxu0
    %v924 = vadd.f32 %v578, %v923
    %v925 = vpop.f32.mrb[0].mxu0
    %v926 = vadd.f32 %v582, %v925
    %927 = vdwg.mxu0
    %928 = vmatprep.subr.mxu0 0.0
    %929 = vmatpush1.msra.mxu0 %v811
    %930 = vmatprep.subr.mxu0 0.0
    %931 = vmatpush1.msra.mxu0 %v814
    %932 = vmatprep.subr.mxu0 0.0
    %933 = vmatpush1.msra.mxu0 %v817
    %934 = vmatprep.subr.mxu0 0.0
    %935 = vmatpush1.msra.mxu0 %v820
    %936 = vmatprep.subr.mxu0 0.0
    %937 = vmatpush1.msra.mxu0 %v823
    %938 = vmatprep.subr.mxu0 0.0
    %939 = vmatpush1.msra.mxu0 %v826
    %940 = vmatprep.subr.mxu0 0.0
    %941 = vmatpush1.msra.mxu0 %v829
    %942 = vmatprep.subr.mxu0 0.0
    %943 = vmatpush1.msra.mxu0 %v832
    %944 = vmatprep.subr.mxu0 0.0
    %945 = vmatpush1.msra.mxu0 %v835
    %946 = vmatprep.subr.mxu0 0.0
    %947 = vmatpush1.msra.mxu0 %v838
    %948 = vmatprep.subr.mxu0 0.0
    %949 = vmatpush1.msra.mxu0 %v841
    %950 = vmatprep.subr.mxu0 0.0
    %951 = vmatpush1.msra.mxu0 %v844
    %952 = vmatprep.subr.mxu0 0.0
    %953 = vmatpush1.msra.mxu0 %v847
    %954 = vmatprep.subr.mxu0 0.0
    %955 = vmatpush1.msra.mxu0 %v850
    %956 = vmatprep.subr.mxu0 0.0
    %957 = vmatpush1.msra.mxu0 %v853
    %958 = vmatprep.subr.mxu0 0.0
    %959 = vmatpush1.msra.mxu0 %v856
    %960 = vmatprep.subr.mxu0 0.0
    %961 = vmatpush1.msra.mxu0 0.0
    %962 = vmatprep.subr.mxu0 0.0
    %963 = vmatpush1.msra.mxu0 0.0
    %964 = vmatprep.subr.mxu0 0.0
    %965 = vmatpush1.msra.mxu0 0.0
    %966 = vmatprep.subr.mxu0 0.0
    %967 = vmatpush1.msra.mxu0 0.0
    %968 = vmatprep.subr.mxu0 0.0
    %969 = vmatpush1.msra.mxu0 0.0
    %970 = vmatprep.subr.mxu0 0.0
    %971 = vmatpush1.msra.mxu0 0.0
    %972 = vmatprep.subr.mxu0 0.0
    %973 = vmatpush1.msra.mxu0 0.0
    %974 = vmatprep.subr.mxu0 0.0
    %975 = vmatpush1.msra.mxu0 0.0
    %976 = vmatprep.subr.mxu0 0.0
    %977 = vmatpush1.msra.mxu0 0.0
    %978 = vmatprep.subr.mxu0 0.0
    %979 = vmatpush1.msra.mxu0 0.0
    %980 = vmatprep.subr.mxu0 0.0
    %981 = vmatpush1.msra.mxu0 0.0
    %982 = vmatprep.subr.mxu0 0.0
    %983 = vmatpush1.msra.mxu0 0.0
    %984 = vmatprep.subr.mxu0 0.0
    %985 = vmatpush1.msra.mxu0 0.0
    %986 = vmatprep.subr.mxu0 0.0
    %987 = vmatpush1.msra.mxu0 0.0
    %988 = vmatprep.subr.mxu0 0.0
    %989 = vmatpush1.msra.mxu0 0.0
    %990 = vmatprep.subr.mxu0 0.0
    %991 = vmatpush1.msra.mxu0 0.0
    %992 = vmatprep.mubr.f32.mxu0 0.0
    %993 = vmatmul.mubr.f32.gmra.mrb[0].mxu0 %v803
    %v994 = vpop.f32.mrb[0].mxu0
    %v995 = vadd.f32 %v586, %v994
    %v996 = vpop.f32.mrb[0].mxu0
    %997 = vdwg.mxu0
    %v998 = vadd.f32 %v806, %v924
    %v999 = vxor.u32 %v998, 2147483648
    %v1000 = vmul.f32 %v999, 1.442695
    %v1001 = vpow.pop %v1000
    %v1002 = vadd.f32 %v1001, 1.0
    %v1003 = vrcp.pop %v1002
    %v1004 = vmul.f32 1.0, %v1003
    %v1005 = vadd.f32 %v807, %v926
    %v1006 = vxor.u32 %v1005, 2147483648
    %v1007 = vmul.f32 %v1006, 1.442695
    %v1008 = vpow.pop %v1007
    %v1009 = vadd.f32 %v1008, 1.0
    %v1010 = vrcp.pop %v1009
    %v1011 = vmul.f32 1.0, %v1010
    %v1012 = vmul.f32 %v1004, %v995
    %v1013 = vadd.f32 %v808, %v1012
    %v1014 = vtanh.pop %v1013
    %v1015 = vsub.f32 1.0, %v1011
    %v1016 = vmul.f32 %v1015, %v1014
    %v1017 = vmul.f32 %v1011, %v803
    %v1018 = vadd.f32 %v1016, %v1017
    %s1019 = scalar_lea.vmem [#allocation3], 8
    %1020 = vst [vmem:[%s1019] sm:$0xff] %v1018
    %s1021 = scalar_lea.vmem [#allocation2], 48
    %v1022 = vld [vmem:[%s1021] sm:$0xff]
    %v1023 = vld [vmem:[%s1021 + $0x8] sm:$0xff]
    %v1024 = vld [vmem:[%s1021 + $0x10] sm:$0xff]
    %v1025 = vld [vmem:[#allocation10] sm:$0xff]
    %v1026 = vld [vmem:[#allocation10 + $0x8] sm:$0xff]
    %v1027 = vld [vmem:[#allocation10 + $0x10] sm:$0xff]
    %v1028 = vld [vmem:[#allocation10 + $0x18] sm:$0xff]
    %v1029 = vld [vmem:[#allocation10 + $0x20] sm:$0xff]
    %v1030 = vld [vmem:[#allocation10 + $0x28] sm:$0xff]
    %v1031 = vld [vmem:[#allocation10 + $0x30] sm:$0xff]
    %v1032 = vld [vmem:[#allocation10 + $0x38] sm:$0xff]
    %v1033 = vld [vmem:[#allocation10 + $0x40] sm:$0xff]
    %v1034 = vld [vmem:[#allocation10 + $0x48] sm:$0xff]
    %v1035 = vld [vmem:[#allocation10 + $0x50] sm:$0xff]
    %v1036 = vld [vmem:[#allocation10 + $0x58] sm:$0xff]
    %v1037 = vld [vmem:[#allocation10 + $0x60] sm:$0xff]
    %v1038 = vld [vmem:[#allocation10 + $0x68] sm:$0xff]
    %v1039 = vld [vmem:[#allocation10 + $0x70] sm:$0xff]
    %v1040 = vld [vmem:[#allocation10 + $0x78] sm:$0xff]
    %v1041 = vld [vmem:[#allocation10 + $0x80] sm:$0xff]
    %v1042 = vld [vmem:[#allocation10 + $0x88] sm:$0xff]
    %v1043 = vld [vmem:[#allocation10 + $0x90] sm:$0xff]
    %v1044 = vld [vmem:[#allocation10 + $0x98] sm:$0xff]
    %v1045 = vld [vmem:[#allocation10 + $0xa0] sm:$0xff]
    %v1046 = vld [vmem:[#allocation10 + $0xa8] sm:$0xff]
    %v1047 = vld [vmem:[#allocation10 + $0xb0] sm:$0xff]
    %v1048 = vld [vmem:[#allocation10 + $0xb8] sm:$0xff]
    %v1049 = vld [vmem:[#allocation10 + $0xc0] sm:$0xff]
    %v1050 = vld [vmem:[#allocation10 + $0xc8] sm:$0xff]
    %v1051 = vld [vmem:[#allocation10 + $0xd0] sm:$0xff]
    %v1052 = vld [vmem:[#allocation10 + $0xd8] sm:$0xff]
    %v1053 = vld [vmem:[#allocation10 + $0xe0] sm:$0xff]
    %v1054 = vld [vmem:[#allocation10 + $0xe8] sm:$0xff]
    %v1055 = vld [vmem:[#allocation10 + $0xf0] sm:$0xff]
    %v1056 = vld [vmem:[#allocation10 + $0xf8] sm:$0xff]
    %v1057 = vld [vmem:[#allocation10 + $0x100] sm:$0xff]
    %v1058 = vld [vmem:[#allocation10 + $0x108] sm:$0xff]
    %v1059 = vld [vmem:[#allocation10 + $0x110] sm:$0xff]
    %v1060 = vld [vmem:[#allocation10 + $0x118] sm:$0xff]
    %v1061 = vld [vmem:[#allocation10 + $0x120] sm:$0xff]
    %v1062 = vld [vmem:[#allocation10 + $0x128] sm:$0xff]
    %v1063 = vld [vmem:[#allocation10 + $0x130] sm:$0xff]
    %v1064 = vld [vmem:[#allocation10 + $0x138] sm:$0xff]
    %v1065 = vld [vmem:[#allocation10 + $0x140] sm:$0xff]
    %v1066 = vld [vmem:[#allocation10 + $0x148] sm:$0xff]
    %v1067 = vld [vmem:[#allocation10 + $0x150] sm:$0xff]
    %v1068 = vld [vmem:[#allocation10 + $0x158] sm:$0xff]
    %v1069 = vld [vmem:[#allocation10 + $0x160] sm:$0xff]
    %v1070 = vld [vmem:[#allocation10 + $0x168] sm:$0xff]
    %v1071 = vld [vmem:[#allocation10 + $0x170] sm:$0xff]
    %v1072 = vld [vmem:[#allocation10 + $0x178] sm:$0xff]
    %1073 = vmatprep.subr.mxu0 %v1026
    %1074 = vmatpush1.msra.mxu0 %v1025
    %1075 = vmatprep.subr.mxu0 %v1029
    %1076 = vmatpush1.msra.mxu0 %v1028
    %1077 = vmatprep.subr.mxu0 %v1032
    %1078 = vmatpush1.msra.mxu0 %v1031
    %1079 = vmatprep.subr.mxu0 %v1035
    %1080 = vmatpush1.msra.mxu0 %v1034
    %1081 = vmatprep.subr.mxu0 %v1038
    %1082 = vmatpush1.msra.mxu0 %v1037
    %1083 = vmatprep.subr.mxu0 %v1041
    %1084 = vmatpush1.msra.mxu0 %v1040
    %1085 = vmatprep.subr.mxu0 %v1044
    %1086 = vmatpush1.msra.mxu0 %v1043
    %1087 = vmatprep.subr.mxu0 %v1047
    %1088 = vmatpush1.msra.mxu0 %v1046
    %1089 = vmatprep.subr.mxu0 %v1050
    %1090 = vmatpush1.msra.mxu0 %v1049
    %1091 = vmatprep.subr.mxu0 %v1053
    %1092 = vmatpush1.msra.mxu0 %v1052
    %1093 = vmatprep.subr.mxu0 %v1056
    %1094 = vmatpush1.msra.mxu0 %v1055
    %1095 = vmatprep.subr.mxu0 %v1059
    %1096 = vmatpush1.msra.mxu0 %v1058
    %1097 = vmatprep.subr.mxu0 %v1062
    %1098 = vmatpush1.msra.mxu0 %v1061
    %1099 = vmatprep.subr.mxu0 %v1065
    %1100 = vmatpush1.msra.mxu0 %v1064
    %1101 = vmatprep.subr.mxu0 %v1068
    %1102 = vmatpush1.msra.mxu0 %v1067
    %1103 = vmatprep.subr.mxu0 %v1071
    %1104 = vmatpush1.msra.mxu0 %v1070
    %1105 = vmatprep.subr.mxu0 0.0
    %1106 = vmatpush1.msra.mxu0 0.0
    %1107 = vmatprep.subr.mxu0 0.0
    %1108 = vmatpush1.msra.mxu0 0.0
    %1109 = vmatprep.subr.mxu0 0.0
    %1110 = vmatpush1.msra.mxu0 0.0
    %1111 = vmatprep.subr.mxu0 0.0
    %1112 = vmatpush1.msra.mxu0 0.0
    %1113 = vmatprep.subr.mxu0 0.0
    %1114 = vmatpush1.msra.mxu0 0.0
    %1115 = vmatprep.subr.mxu0 0.0
    %1116 = vmatpush1.msra.mxu0 0.0
    %1117 = vmatprep.subr.mxu0 0.0
    %1118 = vmatpush1.msra.mxu0 0.0
    %1119 = vmatprep.subr.mxu0 0.0
    %1120 = vmatpush1.msra.mxu0 0.0
    %1121 = vmatprep.subr.mxu0 0.0
    %1122 = vmatpush1.msra.mxu0 0.0
    %1123 = vmatprep.subr.mxu0 0.0
    %1124 = vmatpush1.msra.mxu0 0.0
    %1125 = vmatprep.subr.mxu0 0.0
    %1126 = vmatpush1.msra.mxu0 0.0
    %1127 = vmatprep.subr.mxu0 0.0
    %1128 = vmatpush1.msra.mxu0 0.0
    %1129 = vmatprep.subr.mxu0 0.0
    %1130 = vmatpush1.msra.mxu0 0.0
    %1131 = vmatprep.subr.mxu0 0.0
    %1132 = vmatpush1.msra.mxu0 0.0
    %1133 = vmatprep.subr.mxu0 0.0
    %1134 = vmatpush1.msra.mxu0 0.0
    %1135 = vmatprep.subr.mxu0 0.0
    %1136 = vmatpush1.msra.mxu0 0.0
    %1137 = vmatprep.mubr.f32.mxu0 0.0
    %1138 = vmatmul.mubr.f32.gmra.mrb[0].mxu0 %v1018
    %v1139 = vpop.f32.mrb[0].mxu0
    %v1140 = vadd.f32 %v578, %v1139
    %v1141 = vpop.f32.mrb[0].mxu0
    %v1142 = vadd.f32 %v582, %v1141
    %1143 = vdwg.mxu0
    %1144 = vmatprep.subr.mxu0 0.0
    %1145 = vmatpush1.msra.mxu0 %v1027
    %1146 = vmatprep.subr.mxu0 0.0
    %1147 = vmatpush1.msra.mxu0 %v1030
    %1148 = vmatprep.subr.mxu0 0.0
    %1149 = vmatpush1.msra.mxu0 %v1033
    %1150 = vmatprep.subr.mxu0 0.0
    %1151 = vmatpush1.msra.mxu0 %v1036
    %1152 = vmatprep.subr.mxu0 0.0
    %1153 = vmatpush1.msra.mxu0 %v1039
    %1154 = vmatprep.subr.mxu0 0.0
    %1155 = vmatpush1.msra.mxu0 %v1042
    %1156 = vmatprep.subr.mxu0 0.0
    %1157 = vmatpush1.msra.mxu0 %v1045
    %1158 = vmatprep.subr.mxu0 0.0
    %1159 = vmatpush1.msra.mxu0 %v1048
    %1160 = vmatprep.subr.mxu0 0.0
    %1161 = vmatpush1.msra.mxu0 %v1051
    %1162 = vmatprep.subr.mxu0 0.0
    %1163 = vmatpush1.msra.mxu0 %v1054
    %1164 = vmatprep.subr.mxu0 0.0
    %1165 = vmatpush1.msra.mxu0 %v1057
    %1166 = vmatprep.subr.mxu0 0.0
    %1167 = vmatpush1.msra.mxu0 %v1060
    %1168 = vmatprep.subr.mxu0 0.0
    %1169 = vmatpush1.msra.mxu0 %v1063
    %1170 = vmatprep.subr.mxu0 0.0
    %1171 = vmatpush1.msra.mxu0 %v1066
    %1172 = vmatprep.subr.mxu0 0.0
    %1173 = vmatpush1.msra.mxu0 %v1069
    %1174 = vmatprep.subr.mxu0 0.0
    %1175 = vmatpush1.msra.mxu0 %v1072
    %1176 = vmatprep.subr.mxu0 0.0
    %1177 = vmatpush1.msra.mxu0 0.0
    %1178 = vmatprep.subr.mxu0 0.0
    %1179 = vmatpush1.msra.mxu0 0.0
    %1180 = vmatprep.subr.mxu0 0.0
    %1181 = vmatpush1.msra.mxu0 0.0
    %1182 = vmatprep.subr.mxu0 0.0
    %1183 = vmatpush1.msra.mxu0 0.0
    %1184 = vmatprep.subr.mxu0 0.0
    %1185 = vmatpush1.msra.mxu0 0.0
    %1186 = vmatprep.subr.mxu0 0.0
    %1187 = vmatpush1.msra.mxu0 0.0
    %1188 = vmatprep.subr.mxu0 0.0
    %1189 = vmatpush1.msra.mxu0 0.0
    %1190 = vmatprep.subr.mxu0 0.0
    %1191 = vmatpush1.msra.mxu0 0.0
    %1192 = vmatprep.subr.mxu0 0.0
    %1193 = vmatpush1.msra.mxu0 0.0
    %1194 = vmatprep.subr.mxu0 0.0
    %1195 = vmatpush1.msra.mxu0 0.0
    %1196 = vmatprep.subr.mxu0 0.0
    %1197 = vmatpush1.msra.mxu0 0.0
    %1198 = vmatprep.subr.mxu0 0.0
    %1199 = vmatpush1.msra.mxu0 0.0
    %1200 = vmatprep.subr.mxu0 0.0
    %1201 = vmatpush1.msra.mxu0 0.0
    %1202 = vmatprep.subr.mxu0 0.0
    %1203 = vmatpush1.msra.mxu0 0.0
    %1204 = vmatprep.subr.mxu0 0.0
    %1205 = vmatpush1.msra.mxu0 0.0
    %1206 = vmatprep.subr.mxu0 0.0
    %1207 = vmatpush1.msra.mxu0 0.0
    %1208 = vmatprep.mubr.f32.mxu0 0.0
    %1209 = vmatmul.mubr.f32.gmra.mrb[0].mxu0 %v1018
    %v1210 = vpop.f32.mrb[0].mxu0
    %v1211 = vadd.f32 %v586, %v1210
    %v1212 = vpop.f32.mrb[0].mxu0
    %1213 = vdwg.mxu0
    %v1214 = vadd.f32 %v1022, %v1140
    %v1215 = vxor.u32 %v1214, 2147483648
    %v1216 = vmul.f32 %v1215, 1.442695
    %v1217 = vpow.pop %v1216
    %v1218 = vadd.f32 %v1217, 1.0
    %v1219 = vrcp.pop %v1218
    %v1220 = vmul.f32 1.0, %v1219
    %v1221 = vadd.f32 %v1023, %v1142
    %v1222 = vxor.u32 %v1221, 2147483648
    %v1223 = vmul.f32 %v1222, 1.442695
    %v1224 = vpow.pop %v1223
    %v1225 = vadd.f32 %v1224, 1.0
    %v1226 = vrcp.pop %v1225
    %v1227 = vmul.f32 1.0, %v1226
    %v1228 = vmul.f32 %v1220, %v1211
    %v1229 = vadd.f32 %v1024, %v1228
    %v1230 = vtanh.pop %v1229
    %v1231 = vsub.f32 1.0, %v1227
    %v1232 = vmul.f32 %v1231, %v1230
    %v1233 = vmul.f32 %v1227, %v1018
    %v1234 = vadd.f32 %v1232, %v1233
    %s1235 = scalar_lea.vmem [#allocation3], 16
    %1236 = vst [vmem:[%s1235] sm:$0xff] %v1234
    %s1237 = scalar_lea.vmem [#allocation2], 72
    %v1238 = vld [vmem:[%s1237] sm:$0xff]
    %v1239 = vld [vmem:[%s1237 + $0x8] sm:$0xff]
    %v1240 = vld [vmem:[%s1237 + $0x10] sm:$0xff]
    %v1241 = vld [vmem:[#allocation10] sm:$0xff]
    %v1242 = vld [vmem:[#allocation10 + $0x8] sm:$0xff]
    %v1243 = vld [vmem:[#allocation10 + $0x10] sm:$0xff]
    %v1244 = vld [vmem:[#allocation10 + $0x18] sm:$0xff]
    %v1245 = vld [vmem:[#allocation10 + $0x20] sm:$0xff]
    %v1246 = vld [vmem:[#allocation10 + $0x28] sm:$0xff]
    %v1247 = vld [vmem:[#allocation10 + $0x30] sm:$0xff]
    %v1248 = vld [vmem:[#allocation10 + $0x38] sm:$0xff]
    %v1249 = vld [vmem:[#allocation10 + $0x40] sm:$0xff]
    %v1250 = vld [vmem:[#allocation10 + $0x48] sm:$0xff]
    %v1251 = vld [vmem:[#allocation10 + $0x50] sm:$0xff]
    %v1252 = vld [vmem:[#allocation10 + $0x58] sm:$0xff]
    %v1253 = vld [vmem:[#allocation10 + $0x60] sm:$0xff]
    %v1254 = vld [vmem:[#allocation10 + $0x68] sm:$0xff]
    %v1255 = vld [vmem:[#allocation10 + $0x70] sm:$0xff]
    %v1256 = vld [vmem:[#allocation10 + $0x78] sm:$0xff]
    %v1257 = vld [vmem:[#allocation10 + $0x80] sm:$0xff]
    %v1258 = vld [vmem:[#allocation10 + $0x88] sm:$0xff]
    %v1259 = vld [vmem:[#allocation10 + $0x90] sm:$0xff]
    %v1260 = vld [vmem:[#allocation10 + $0x98] sm:$0xff]
    %v1261 = vld [vmem:[#allocation10 + $0xa0] sm:$0xff]
    %v1262 = vld [vmem:[#allocation10 + $0xa8] sm:$0xff]
    %v1263 = vld [vmem:[#allocation10 + $0xb0] sm:$0xff]
    %v1264 = vld [vmem:[#allocation10 + $0xb8] sm:$0xff]
    %v1265 = vld [vmem:[#allocation10 + $0xc0] sm:$0xff]
    %v1266 = vld [vmem:[#allocation10 + $0xc8] sm:$0xff]
    %v1267 = vld [vmem:[#allocation10 + $0xd0] sm:$0xff]
    %v1268 = vld [vmem:[#allocation10 + $0xd8] sm:$0xff]
    %v1269 = vld [vmem:[#allocation10 + $0xe0] sm:$0xff]
    %v1270 = vld [vmem:[#allocation10 + $0xe8] sm:$0xff]
    %v1271 = vld [vmem:[#allocation10 + $0xf0] sm:$0xff]
    %v1272 = vld [vmem:[#allocation10 + $0xf8] sm:$0xff]
    %v1273 = vld [vmem:[#allocation10 + $0x100] sm:$0xff]
    %v1274 = vld [vmem:[#allocation10 + $0x108] sm:$0xff]
    %v1275 = vld [vmem:[#allocation10 + $0x110] sm:$0xff]
    %v1276 = vld [vmem:[#allocation10 + $0x118] sm:$0xff]
    %v1277 = vld [vmem:[#allocation10 + $0x120] sm:$0xff]
    %v1278 = vld [vmem:[#allocation10 + $0x128] sm:$0xff]
    %v1279 = vld [vmem:[#allocation10 + $0x130] sm:$0xff]
    %v1280 = vld [vmem:[#allocation10 + $0x138] sm:$0xff]
    %v1281 = vld [vmem:[#allocation10 + $0x140] sm:$0xff]
    %v1282 = vld [vmem:[#allocation10 + $0x148] sm:$0xff]
    %v1283 = vld [vmem:[#allocation10 + $0x150] sm:$0xff]
    %v1284 = vld [vmem:[#allocation10 + $0x158] sm:$0xff]
    %v1285 = vld [vmem:[#allocation10 + $0x160] sm:$0xff]
    %v1286 = vld [vmem:[#allocation10 + $0x168] sm:$0xff]
    %v1287 = vld [vmem:[#allocation10 + $0x170] sm:$0xff]
    %v1288 = vld [vmem:[#allocation10 + $0x178] sm:$0xff]
    %1289 = vmatprep.subr.mxu0 %v1242
    %1290 = vmatpush1.msra.mxu0 %v1241
    %1291 = vmatprep.subr.mxu0 %v1245
    %1292 = vmatpush1.msra.mxu0 %v1244
    %1293 = vmatprep.subr.mxu0 %v1248
    %1294 = vmatpush1.msra.mxu0 %v1247
    %1295 = vmatprep.subr.mxu0 %v1251
    %1296 = vmatpush1.msra.mxu0 %v1250
    %1297 = vmatprep.subr.mxu0 %v1254
    %1298 = vmatpush1.msra.mxu0 %v1253
    %1299 = vmatprep.subr.mxu0 %v1257
    %1300 = vmatpush1.msra.mxu0 %v1256
    %1301 = vmatprep.subr.mxu0 %v1260
    %1302 = vmatpush1.msra.mxu0 %v1259
    %1303 = vmatprep.subr.mxu0 %v1263
    %1304 = vmatpush1.msra.mxu0 %v1262
    %1305 = vmatprep.subr.mxu0 %v1266
    %1306 = vmatpush1.msra.mxu0 %v1265
    %1307 = vmatprep.subr.mxu0 %v1269
    %1308 = vmatpush1.msra.mxu0 %v1268
    %1309 = vmatprep.subr.mxu0 %v1272
    %1310 = vmatpush1.msra.mxu0 %v1271
    %1311 = vmatprep.subr.mxu0 %v1275
    %1312 = vmatpush1.msra.mxu0 %v1274
    %1313 = vmatprep.subr.mxu0 %v1278
    %1314 = vmatpush1.msra.mxu0 %v1277
    %1315 = vmatprep.subr.mxu0 %v1281
    %1316 = vmatpush1.msra.mxu0 %v1280
    %1317 = vmatprep.subr.mxu0 %v1284
    %1318 = vmatpush1.msra.mxu0 %v1283
    %1319 = vmatprep.subr.mxu0 %v1287
    %1320 = vmatpush1.msra.mxu0 %v1286
    %1321 = vmatprep.subr.mxu0 0.0
    %1322 = vmatpush1.msra.mxu0 0.0
    %1323 = vmatprep.subr.mxu0 0.0
    %1324 = vmatpush1.msra.mxu0 0.0
    %1325 = vmatprep.subr.mxu0 0.0
    %1326 = vmatpush1.msra.mxu0 0.0
    %1327 = vmatprep.subr.mxu0 0.0
    %1328 = vmatpush1.msra.mxu0 0.0
    %1329 = vmatprep.subr.mxu0 0.0
    %1330 = vmatpush1.msra.mxu0 0.0
    %1331 = vmatprep.subr.mxu0 0.0
    %1332 = vmatpush1.msra.mxu0 0.0
    %1333 = vmatprep.subr.mxu0 0.0
    %1334 = vmatpush1.msra.mxu0 0.0
    %1335 = vmatprep.subr.mxu0 0.0
    %1336 = vmatpush1.msra.mxu0 0.0
    %1337 = vmatprep.subr.mxu0 0.0
    %1338 = vmatpush1.msra.mxu0 0.0
    %1339 = vmatprep.subr.mxu0 0.0
    %1340 = vmatpush1.msra.mxu0 0.0
    %1341 = vmatprep.subr.mxu0 0.0
    %1342 = vmatpush1.msra.mxu0 0.0
    %1343 = vmatprep.subr.mxu0 0.0
    %1344 = vmatpush1.msra.mxu0 0.0
    %1345 = vmatprep.subr.mxu0 0.0
    %1346 = vmatpush1.msra.mxu0 0.0
    %1347 = vmatprep.subr.mxu0 0.0
    %1348 = vmatpush1.msra.mxu0 0.0
    %1349 = vmatprep.subr.mxu0 0.0
    %1350 = vmatpush1.msra.mxu0 0.0
    %1351 = vmatprep.subr.mxu0 0.0
    %1352 = vmatpush1.msra.mxu0 0.0
    %1353 = vmatprep.mubr.f32.mxu0 0.0
    %1354 = vmatmul.mubr.f32.gmra.mrb[0].mxu0 %v1234
    %v1355 = vpop.f32.mrb[0].mxu0
    %v1356 = vadd.f32 %v578, %v1355
    %v1357 = vpop.f32.mrb[0].mxu0
    %v1358 = vadd.f32 %v582, %v1357
    %1359 = vdwg.mxu0
    %1360 = vmatprep.subr.mxu0 0.0
    %1361 = vmatpush1.msra.mxu0 %v1243
    %1362 = vmatprep.subr.mxu0 0.0
    %1363 = vmatpush1.msra.mxu0 %v1246
    %1364 = vmatprep.subr.mxu0 0.0
    %1365 = vmatpush1.msra.mxu0 %v1249
    %1366 = vmatprep.subr.mxu0 0.0
    %1367 = vmatpush1.msra.mxu0 %v1252
    %1368 = vmatprep.subr.mxu0 0.0
    %1369 = vmatpush1.msra.mxu0 %v1255
    %1370 = vmatprep.subr.mxu0 0.0
    %1371 = vmatpush1.msra.mxu0 %v1258
    %1372 = vmatprep.subr.mxu0 0.0
    %1373 = vmatpush1.msra.mxu0 %v1261
    %1374 = vmatprep.subr.mxu0 0.0
    %1375 = vmatpush1.msra.mxu0 %v1264
    %1376 = vmatprep.subr.mxu0 0.0
    %1377 = vmatpush1.msra.mxu0 %v1267
    %1378 = vmatprep.subr.mxu0 0.0
    %1379 = vmatpush1.msra.mxu0 %v1270
    %1380 = vmatprep.subr.mxu0 0.0
    %1381 = vmatpush1.msra.mxu0 %v1273
    %1382 = vmatprep.subr.mxu0 0.0
    %1383 = vmatpush1.msra.mxu0 %v1276
    %1384 = vmatprep.subr.mxu0 0.0
    %1385 = vmatpush1.msra.mxu0 %v1279
    %1386 = vmatprep.subr.mxu0 0.0
    %1387 = vmatpush1.msra.mxu0 %v1282
    %1388 = vmatprep.subr.mxu0 0.0
    %1389 = vmatpush1.msra.mxu0 %v1285
    %1390 = vmatprep.subr.mxu0 0.0
    %1391 = vmatpush1.msra.mxu0 %v1288
    %1392 = vmatprep.subr.mxu0 0.0
    %1393 = vmatpush1.msra.mxu0 0.0
    %1394 = vmatprep.subr.mxu0 0.0
    %1395 = vmatpush1.msra.mxu0 0.0
    %1396 = vmatprep.subr.mxu0 0.0
    %1397 = vmatpush1.msra.mxu0 0.0
    %1398 = vmatprep.subr.mxu0 0.0
    %1399 = vmatpush1.msra.mxu0 0.0
    %1400 = vmatprep.subr.mxu0 0.0
    %1401 = vmatpush1.msra.mxu0 0.0
    %1402 = vmatprep.subr.mxu0 0.0
    %1403 = vmatpush1.msra.mxu0 0.0
    %1404 = vmatprep.subr.mxu0 0.0
    %1405 = vmatpush1.msra.mxu0 0.0
    %1406 = vmatprep.subr.mxu0 0.0
    %1407 = vmatpush1.msra.mxu0 0.0
    %1408 = vmatprep.subr.mxu0 0.0
    %1409 = vmatpush1.msra.mxu0 0.0
    %1410 = vmatprep.subr.mxu0 0.0
    %1411 = vmatpush1.msra.mxu0 0.0
    %1412 = vmatprep.subr.mxu0 0.0
    %1413 = vmatpush1.msra.mxu0 0.0
    %1414 = vmatprep.subr.mxu0 0.0
    %1415 = vmatpush1.msra.mxu0 0.0
    %1416 = vmatprep.subr.mxu0 0.0
    %1417 = vmatpush1.msra.mxu0 0.0
    %1418 = vmatprep.subr.mxu0 0.0
    %1419 = vmatpush1.msra.mxu0 0.0
    %1420 = vmatprep.subr.mxu0 0.0
    %1421 = vmatpush1.msra.mxu0 0.0
    %1422 = vmatprep.subr.mxu0 0.0
    %1423 = vmatpush1.msra.mxu0 0.0
    %1424 = vmatprep.mubr.f32.mxu0 0.0
    %1425 = vmatmul.mubr.f32.gmra.mrb[0].mxu0 %v1234
    %v1426 = vpop.f32.mrb[0].mxu0
    %v1427 = vadd.f32 %v586, %v1426
    %v1428 = vpop.f32.mrb[0].mxu0
    %1429 = vdwg.mxu0
    %v1430 = vadd.f32 %v1238, %v1356
    %v1431 = vxor.u32 %v1430, 2147483648
    %v1432 = vmul.f32 %v1431, 1.442695
    %v1433 = vpow.pop %v1432
    %v1434 = vadd.f32 %v1433, 1.0
    %v1435 = vrcp.pop %v1434
    %v1436 = vmul.f32 1.0, %v1435
    %v1437 = vadd.f32 %v1239, %v1358
    %v1438 = vxor.u32 %v1437, 2147483648
    %v1439 = vmul.f32 %v1438, 1.442695
    %v1440 = vpow.pop %v1439
    %v1441 = vadd.f32 %v1440, 1.0
    %v1442 = vrcp.pop %v1441
    %v1443 = vmul.f32 1.0, %v1442
    %v1444 = vmul.f32 %v1436, %v1427
    %v1445 = vadd.f32 %v1240, %v1444
    %v1446 = vtanh.pop %v1445
    %v1447 = vsub.f32 1.0, %v1443
    %v1448 = vmul.f32 %v1447, %v1446
    %v1449 = vmul.f32 %v1443, %v1234
    %v1450 = vadd.f32 %v1448, %v1449
    %s1451 = scalar_lea.vmem [#allocation3], 24
    %1452 = vst [vmem:[%s1451] sm:$0xff] %v1450
    %s1453 = scalar_lea.vmem [#allocation2], 96
    %v1454 = vld [vmem:[%s1453] sm:$0xff]
    %v1455 = vld [vmem:[%s1453 + $0x8] sm:$0xff]
    %v1456 = vld [vmem:[%s1453 + $0x10] sm:$0xff]
    %v1457 = vld [vmem:[#allocation10] sm:$0xff]
    %v1458 = vld [vmem:[#allocation10 + $0x8] sm:$0xff]
    %v1459 = vld [vmem:[#allocation10 + $0x10] sm:$0xff]
    %v1460 = vld [vmem:[#allocation10 + $0x18] sm:$0xff]
    %v1461 = vld [vmem:[#allocation10 + $0x20] sm:$0xff]
    %v1462 = vld [vmem:[#allocation10 + $0x28] sm:$0xff]
    %v1463 = vld [vmem:[#allocation10 + $0x30] sm:$0xff]
    %v1464 = vld [vmem:[#allocation10 + $0x38] sm:$0xff]
    %v1465 = vld [vmem:[#allocation10 + $0x40] sm:$0xff]
    %v1466 = vld [vmem:[#allocation10 + $0x48] sm:$0xff]
    %v1467 = vld [vmem:[#allocation10 + $0x50] sm:$0xff]
    %v1468 = vld [vmem:[#allocation10 + $0x58] sm:$0xff]
    %v1469 = vld [vmem:[#allocation10 + $0x60] sm:$0xff]
    %v1470 = vld [vmem:[#allocation10 + $0x68] sm:$0xff]
    %v1471 = vld [vmem:[#allocation10 + $0x70] sm:$0xff]
    %v1472 = vld [vmem:[#allocation10 + $0x78] sm:$0xff]
    %v1473 = vld [vmem:[#allocation10 + $0x80] sm:$0xff]
    %v1474 = vld [vmem:[#allocation10 + $0x88] sm:$0xff]
    %v1475 = vld [vmem:[#allocation10 + $0x90] sm:$0xff]
    %v1476 = vld [vmem:[#allocation10 + $0x98] sm:$0xff]
    %v1477 = vld [vmem:[#allocation10 + $0xa0] sm:$0xff]
    %v1478 = vld [vmem:[#allocation10 + $0xa8] sm:$0xff]
    %v1479 = vld [vmem:[#allocation10 + $0xb0] sm:$0xff]
    %v1480 = vld [vmem:[#allocation10 + $0xb8] sm:$0xff]
    %v1481 = vld [vmem:[#allocation10 + $0xc0] sm:$0xff]
    %v1482 = vld [vmem:[#allocation10 + $0xc8] sm:$0xff]
    %v1483 = vld [vmem:[#allocation10 + $0xd0] sm:$0xff]
    %v1484 = vld [vmem:[#allocation10 + $0xd8] sm:$0xff]
    %v1485 = vld [vmem:[#allocation10 + $0xe0] sm:$0xff]
    %v1486 = vld [vmem:[#allocation10 + $0xe8] sm:$0xff]
    %v1487 = vld [vmem:[#allocation10 + $0xf0] sm:$0xff]
    %v1488 = vld [vmem:[#allocation10 + $0xf8] sm:$0xff]
    %v1489 = vld [vmem:[#allocation10 + $0x100] sm:$0xff]
    %v1490 = vld [vmem:[#allocation10 + $0x108] sm:$0xff]
    %v1491 = vld [vmem:[#allocation10 + $0x110] sm:$0xff]
    %v1492 = vld [vmem:[#allocation10 + $0x118] sm:$0xff]
    %v1493 = vld [vmem:[#allocation10 + $0x120] sm:$0xff]
    %v1494 = vld [vmem:[#allocation10 + $0x128] sm:$0xff]
    %v1495 = vld [vmem:[#allocation10 + $0x130] sm:$0xff]
    %v1496 = vld [vmem:[#allocation10 + $0x138] sm:$0xff]
    %v1497 = vld [vmem:[#allocation10 + $0x140] sm:$0xff]
    %v1498 = vld [vmem:[#allocation10 + $0x148] sm:$0xff]
    %v1499 = vld [vmem:[#allocation10 + $0x150] sm:$0xff]
    %v1500 = vld [vmem:[#allocation10 + $0x158] sm:$0xff]
    %v1501 = vld [vmem:[#allocation10 + $0x160] sm:$0xff]
    %v1502 = vld [vmem:[#allocation10 + $0x168] sm:$0xff]
    %v1503 = vld [vmem:[#allocation10 + $0x170] sm:$0xff]
    %v1504 = vld [vmem:[#allocation10 + $0x178] sm:$0xff]
    %1505 = vmatprep.subr.mxu0 %v1458
    %1506 = vmatpush1.msra.mxu0 %v1457
    %1507 = vmatprep.subr.mxu0 %v1461
    %1508 = vmatpush1.msra.mxu0 %v1460
    %1509 = vmatprep.subr.mxu0 %v1464
    %1510 = vmatpush1.msra.mxu0 %v1463
    %1511 = vmatprep.subr.mxu0 %v1467
    %1512 = vmatpush1.msra.mxu0 %v1466
    %1513 = vmatprep.subr.mxu0 %v1470
    %1514 = vmatpush1.msra.mxu0 %v1469
    %1515 = vmatprep.subr.mxu0 %v1473
    %1516 = vmatpush1.msra.mxu0 %v1472
    %1517 = vmatprep.subr.mxu0 %v1476
    %1518 = vmatpush1.msra.mxu0 %v1475
    %1519 = vmatprep.subr.mxu0 %v1479
    %1520 = vmatpush1.msra.mxu0 %v1478
    %1521 = vmatprep.subr.mxu0 %v1482
    %1522 = vmatpush1.msra.mxu0 %v1481
    %1523 = vmatprep.subr.mxu0 %v1485
    %1524 = vmatpush1.msra.mxu0 %v1484
    %1525 = vmatprep.subr.mxu0 %v1488
    %1526 = vmatpush1.msra.mxu0 %v1487
    %1527 = vmatprep.subr.mxu0 %v1491
    %1528 = vmatpush1.msra.mxu0 %v1490
    %1529 = vmatprep.subr.mxu0 %v1494
    %1530 = vmatpush1.msra.mxu0 %v1493
    %1531 = vmatprep.subr.mxu0 %v1497
    %1532 = vmatpush1.msra.mxu0 %v1496
    %1533 = vmatprep.subr.mxu0 %v1500
    %1534 = vmatpush1.msra.mxu0 %v1499
    %1535 = vmatprep.subr.mxu0 %v1503
    %1536 = vmatpush1.msra.mxu0 %v1502
    %1537 = vmatprep.subr.mxu0 0.0
    %1538 = vmatpush1.msra.mxu0 0.0
    %1539 = vmatprep.subr.mxu0 0.0
    %1540 = vmatpush1.msra.mxu0 0.0
    %1541 = vmatprep.subr.mxu0 0.0
    %1542 = vmatpush1.msra.mxu0 0.0
    %1543 = vmatprep.subr.mxu0 0.0
    %1544 = vmatpush1.msra.mxu0 0.0
    %1545 = vmatprep.subr.mxu0 0.0
    %1546 = vmatpush1.msra.mxu0 0.0
    %1547 = vmatprep.subr.mxu0 0.0
    %1548 = vmatpush1.msra.mxu0 0.0
    %1549 = vmatprep.subr.mxu0 0.0
    %1550 = vmatpush1.msra.mxu0 0.0
    %1551 = vmatprep.subr.mxu0 0.0
    %1552 = vmatpush1.msra.mxu0 0.0
    %1553 = vmatprep.subr.mxu0 0.0
    %1554 = vmatpush1.msra.mxu0 0.0
    %1555 = vmatprep.subr.mxu0 0.0
    %1556 = vmatpush1.msra.mxu0 0.0
    %1557 = vmatprep.subr.mxu0 0.0
    %1558 = vmatpush1.msra.mxu0 0.0
    %1559 = vmatprep.subr.mxu0 0.0
    %1560 = vmatpush1.msra.mxu0 0.0
    %1561 = vmatprep.subr.mxu0 0.0
    %1562 = vmatpush1.msra.mxu0 0.0
    %1563 = vmatprep.subr.mxu0 0.0
    %1564 = vmatpush1.msra.mxu0 0.0
    %1565 = vmatprep.subr.mxu0 0.0
    %1566 = vmatpush1.msra.mxu0 0.0
    %1567 = vmatprep.subr.mxu0 0.0
    %1568 = vmatpush1.msra.mxu0 0.0
    %1569 = vmatprep.mubr.f32.mxu0 0.0
    %1570 = vmatmul.mubr.f32.gmra.mrb[0].mxu0 %v1450
    %v1571 = vpop.f32.mrb[0].mxu0
    %v1572 = vadd.f32 %v578, %v1571
    %v1573 = vpop.f32.mrb[0].mxu0
    %v1574 = vadd.f32 %v582, %v1573
    %1575 = vdwg.mxu0
    %1576 = vmatprep.subr.mxu0 0.0
    %1577 = vmatpush1.msra.mxu0 %v1459
    %1578 = vmatprep.subr.mxu0 0.0
    %1579 = vmatpush1.msra.mxu0 %v1462
    %1580 = vmatprep.subr.mxu0 0.0
    %1581 = vmatpush1.msra.mxu0 %v1465
    %1582 = vmatprep.subr.mxu0 0.0
    %1583 = vmatpush1.msra.mxu0 %v1468
    %1584 = vmatprep.subr.mxu0 0.0
    %1585 = vmatpush1.msra.mxu0 %v1471
    %1586 = vmatprep.subr.mxu0 0.0
    %1587 = vmatpush1.msra.mxu0 %v1474
    %1588 = vmatprep.subr.mxu0 0.0
    %1589 = vmatpush1.msra.mxu0 %v1477
    %1590 = vmatprep.subr.mxu0 0.0
    %1591 = vmatpush1.msra.mxu0 %v1480
    %1592 = vmatprep.subr.mxu0 0.0
    %1593 = vmatpush1.msra.mxu0 %v1483
    %1594 = vmatprep.subr.mxu0 0.0
    %1595 = vmatpush1.msra.mxu0 %v1486
    %1596 = vmatprep.subr.mxu0 0.0
    %1597 = vmatpush1.msra.mxu0 %v1489
    %1598 = vmatprep.subr.mxu0 0.0
    %1599 = vmatpush1.msra.mxu0 %v1492
    %1600 = vmatprep.subr.mxu0 0.0
    %1601 = vmatpush1.msra.mxu0 %v1495
    %1602 = vmatprep.subr.mxu0 0.0
    %1603 = vmatpush1.msra.mxu0 %v1498
    %1604 = vmatprep.subr.mxu0 0.0
    %1605 = vmatpush1.msra.mxu0 %v1501
    %1606 = vmatprep.subr.mxu0 0.0
    %1607 = vmatpush1.msra.mxu0 %v1504
    %1608 = vmatprep.subr.mxu0 0.0
    %1609 = vmatpush1.msra.mxu0 0.0
    %1610 = vmatprep.subr.mxu0 0.0
    %1611 = vmatpush1.msra.mxu0 0.0
    %1612 = vmatprep.subr.mxu0 0.0
    %1613 = vmatpush1.msra.mxu0 0.0
    %1614 = vmatprep.subr.mxu0 0.0
    %1615 = vmatpush1.msra.mxu0 0.0
    %1616 = vmatprep.subr.mxu0 0.0
    %1617 = vmatpush1.msra.mxu0 0.0
    %1618 = vmatprep.subr.mxu0 0.0
    %1619 = vmatpush1.msra.mxu0 0.0
    %1620 = vmatprep.subr.mxu0 0.0
    %1621 = vmatpush1.msra.mxu0 0.0
    %1622 = vmatprep.subr.mxu0 0.0
    %1623 = vmatpush1.msra.mxu0 0.0
    %1624 = vmatprep.subr.mxu0 0.0
    %1625 = vmatpush1.msra.mxu0 0.0
    %1626 = vmatprep.subr.mxu0 0.0
    %1627 = vmatpush1.msra.mxu0 0.0
    %1628 = vmatprep.subr.mxu0 0.0
    %1629 = vmatpush1.msra.mxu0 0.0
    %1630 = vmatprep.subr.mxu0 0.0
    %1631 = vmatpush1.msra.mxu0 0.0
    %1632 = vmatprep.subr.mxu0 0.0
    %1633 = vmatpush1.msra.mxu0 0.0
    %1634 = vmatprep.subr.mxu0 0.0
    %1635 = vmatpush1.msra.mxu0 0.0
    %1636 = vmatprep.subr.mxu0 0.0
    %1637 = vmatpush1.msra.mxu0 0.0
    %1638 = vmatprep.subr.mxu0 0.0
    %1639 = vmatpush1.msra.mxu0 0.0
    %1640 = vmatprep.mubr.f32.mxu0 0.0
    %1641 = vmatmul.mubr.f32.gmra.mrb[0].mxu0 %v1450
    %v1642 = vpop.f32.mrb[0].mxu0
    %v1643 = vadd.f32 %v586, %v1642
    %v1644 = vpop.f32.mrb[0].mxu0
    %1645 = vdwg.mxu0
    %v1646 = vadd.f32 %v1454, %v1572
    %v1647 = vxor.u32 %v1646, 2147483648
    %v1648 = vmul.f32 %v1647, 1.442695
    %v1649 = vpow.pop %v1648
    %v1650 = vadd.f32 %v1649, 1.0
    %v1651 = vrcp.pop %v1650
    %v1652 = vmul.f32 1.0, %v1651
    %v1653 = vadd.f32 %v1455, %v1574
    %v1654 = vxor.u32 %v1653, 2147483648
    %v1655 = vmul.f32 %v1654, 1.442695
    %v1656 = vpow.pop %v1655
    %v1657 = vadd.f32 %v1656, 1.0
    %v1658 = vrcp.pop %v1657
    %v1659 = vmul.f32 1.0, %v1658
    %v1660 = vmul.f32 %v1652, %v1643
    %v1661 = vadd.f32 %v1456, %v1660
    %v1662 = vtanh.pop %v1661
    %v1663 = vsub.f32 1.0, %v1659
    %v1664 = vmul.f32 %v1663, %v1662
    %v1665 = vmul.f32 %v1659, %v1450
    %v1666 = vadd.f32 %v1664, %v1665
    %s1667 = scalar_lea.vmem [#allocation3], 32
    %1668 = vst [vmem:[%s1667] sm:$0xff] %v1666
    %s1669 = scalar_lea.vmem [#allocation2], 120
    %v1670 = vld [vmem:[%s1669] sm:$0xff]
    %v1671 = vld [vmem:[%s1669 + $0x8] sm:$0xff]
    %v1672 = vld [vmem:[%s1669 + $0x10] sm:$0xff]
    %v1673 = vld [vmem:[#allocation10] sm:$0xff]
    %v1674 = vld [vmem:[#allocation10 + $0x8] sm:$0xff]
    %v1675 = vld [vmem:[#allocation10 + $0x10] sm:$0xff]
    %v1676 = vld [vmem:[#allocation10 + $0x18] sm:$0xff]
    %v1677 = vld [vmem:[#allocation10 + $0x20] sm:$0xff]
    %v1678 = vld [vmem:[#allocation10 + $0x28] sm:$0xff]
    %v1679 = vld [vmem:[#allocation10 + $0x30] sm:$0xff]
    %v1680 = vld [vmem:[#allocation10 + $0x38] sm:$0xff]
    %v1681 = vld [vmem:[#allocation10 + $0x40] sm:$0xff]
    %v1682 = vld [vmem:[#allocation10 + $0x48] sm:$0xff]
    %v1683 = vld [vmem:[#allocation10 + $0x50] sm:$0xff]
    %v1684 = vld [vmem:[#allocation10 + $0x58] sm:$0xff]
    %v1685 = vld [vmem:[#allocation10 + $0x60] sm:$0xff]
    %v1686 = vld [vmem:[#allocation10 + $0x68] sm:$0xff]
    %v1687 = vld [vmem:[#allocation10 + $0x70] sm:$0xff]
    %v1688 = vld [vmem:[#allocation10 + $0x78] sm:$0xff]
    %v1689 = vld [vmem:[#allocation10 + $0x80] sm:$0xff]
    %v1690 = vld [vmem:[#allocation10 + $0x88] sm:$0xff]
    %v1691 = vld [vmem:[#allocation10 + $0x90] sm:$0xff]
    %v1692 = vld [vmem:[#allocation10 + $0x98] sm:$0xff]
    %v1693 = vld [vmem:[#allocation10 + $0xa0] sm:$0xff]
    %v1694 = vld [vmem:[#allocation10 + $0xa8] sm:$0xff]
    %v1695 = vld [vmem:[#allocation10 + $0xb0] sm:$0xff]
    %v1696 = vld [vmem:[#allocation10 + $0xb8] sm:$0xff]
    %v1697 = vld [vmem:[#allocation10 + $0xc0] sm:$0xff]
    %v1698 = vld [vmem:[#allocation10 + $0xc8] sm:$0xff]
    %v1699 = vld [vmem:[#allocation10 + $0xd0] sm:$0xff]
    %v1700 = vld [vmem:[#allocation10 + $0xd8] sm:$0xff]
    %v1701 = vld [vmem:[#allocation10 + $0xe0] sm:$0xff]
    %v1702 = vld [vmem:[#allocation10 + $0xe8] sm:$0xff]
    %v1703 = vld [vmem:[#allocation10 + $0xf0] sm:$0xff]
    %v1704 = vld [vmem:[#allocation10 + $0xf8] sm:$0xff]
    %v1705 = vld [vmem:[#allocation10 + $0x100] sm:$0xff]
    %v1706 = vld [vmem:[#allocation10 + $0x108] sm:$0xff]
    %v1707 = vld [vmem:[#allocation10 + $0x110] sm:$0xff]
    %v1708 = vld [vmem:[#allocation10 + $0x118] sm:$0xff]
    %v1709 = vld [vmem:[#allocation10 + $0x120] sm:$0xff]
    %v1710 = vld [vmem:[#allocation10 + $0x128] sm:$0xff]
    %v1711 = vld [vmem:[#allocation10 + $0x130] sm:$0xff]
    %v1712 = vld [vmem:[#allocation10 + $0x138] sm:$0xff]
    %v1713 = vld [vmem:[#allocation10 + $0x140] sm:$0xff]
    %v1714 = vld [vmem:[#allocation10 + $0x148] sm:$0xff]
    %v1715 = vld [vmem:[#allocation10 + $0x150] sm:$0xff]
    %v1716 = vld [vmem:[#allocation10 + $0x158] sm:$0xff]
    %v1717 = vld [vmem:[#allocation10 + $0x160] sm:$0xff]
    %v1718 = vld [vmem:[#allocation10 + $0x168] sm:$0xff]
    %v1719 = vld [vmem:[#allocation10 + $0x170] sm:$0xff]
    %v1720 = vld [vmem:[#allocation10 + $0x178] sm:$0xff]
    %1721 = vmatprep.subr.mxu0 %v1674
    %1722 = vmatpush1.msra.mxu0 %v1673
    %1723 = vmatprep.subr.mxu0 %v1677
    %1724 = vmatpush1.msra.mxu0 %v1676
    %1725 = vmatprep.subr.mxu0 %v1680
    %1726 = vmatpush1.msra.mxu0 %v1679
    %1727 = vmatprep.subr.mxu0 %v1683
    %1728 = vmatpush1.msra.mxu0 %v1682
    %1729 = vmatprep.subr.mxu0 %v1686
    %1730 = vmatpush1.msra.mxu0 %v1685
    %1731 = vmatprep.subr.mxu0 %v1689
    %1732 = vmatpush1.msra.mxu0 %v1688
    %1733 = vmatprep.subr.mxu0 %v1692
    %1734 = vmatpush1.msra.mxu0 %v1691
    %1735 = vmatprep.subr.mxu0 %v1695
    %1736 = vmatpush1.msra.mxu0 %v1694
    %1737 = vmatprep.subr.mxu0 %v1698
    %1738 = vmatpush1.msra.mxu0 %v1697
    %1739 = vmatprep.subr.mxu0 %v1701
    %1740 = vmatpush1.msra.mxu0 %v1700
    %1741 = vmatprep.subr.mxu0 %v1704
    %1742 = vmatpush1.msra.mxu0 %v1703
    %1743 = vmatprep.subr.mxu0 %v1707
    %1744 = vmatpush1.msra.mxu0 %v1706
    %1745 = vmatprep.subr.mxu0 %v1710
    %1746 = vmatpush1.msra.mxu0 %v1709
    %1747 = vmatprep.subr.mxu0 %v1713
    %1748 = vmatpush1.msra.mxu0 %v1712
    %1749 = vmatprep.subr.mxu0 %v1716
    %1750 = vmatpush1.msra.mxu0 %v1715
    %1751 = vmatprep.subr.mxu0 %v1719
    %1752 = vmatpush1.msra.mxu0 %v1718
    %1753 = vmatprep.subr.mxu0 0.0
    %1754 = vmatpush1.msra.mxu0 0.0
    %1755 = vmatprep.subr.mxu0 0.0
    %1756 = vmatpush1.msra.mxu0 0.0
    %1757 = vmatprep.subr.mxu0 0.0
    %1758 = vmatpush1.msra.mxu0 0.0
    %1759 = vmatprep.subr.mxu0 0.0
    %1760 = vmatpush1.msra.mxu0 0.0
    %1761 = vmatprep.subr.mxu0 0.0
    %1762 = vmatpush1.msra.mxu0 0.0
    %1763 = vmatprep.subr.mxu0 0.0
    %1764 = vmatpush1.msra.mxu0 0.0
    %1765 = vmatprep.subr.mxu0 0.0
    %1766 = vmatpush1.msra.mxu0 0.0
    %1767 = vmatprep.subr.mxu0 0.0
    %1768 = vmatpush1.msra.mxu0 0.0
    %1769 = vmatprep.subr.mxu0 0.0
    %1770 = vmatpush1.msra.mxu0 0.0
    %1771 = vmatprep.subr.mxu0 0.0
    %1772 = vmatpush1.msra.mxu0 0.0
    %1773 = vmatprep.subr.mxu0 0.0
    %1774 = vmatpush1.msra.mxu0 0.0
    %1775 = vmatprep.subr.mxu0 0.0
    %1776 = vmatpush1.msra.mxu0 0.0
    %1777 = vmatprep.subr.mxu0 0.0
    %1778 = vmatpush1.msra.mxu0 0.0
    %1779 = vmatprep.subr.mxu0 0.0
    %1780 = vmatpush1.msra.mxu0 0.0
    %1781 = vmatprep.subr.mxu0 0.0
    %1782 = vmatpush1.msra.mxu0 0.0
    %1783 = vmatprep.subr.mxu0 0.0
    %1784 = vmatpush1.msra.mxu0 0.0
    %1785 = vmatprep.mubr.f32.mxu0 0.0
    %1786 = vmatmul.mubr.f32.gmra.mrb[0].mxu0 %v1666
    %v1787 = vpop.f32.mrb[0].mxu0
    %v1788 = vadd.f32 %v578, %v1787
    %v1789 = vpop.f32.mrb[0].mxu0
    %v1790 = vadd.f32 %v582, %v1789
    %1791 = vdwg.mxu0
    %1792 = vmatprep.subr.mxu0 0.0
    %1793 = vmatpush1.msra.mxu0 %v1675
    %1794 = vmatprep.subr.mxu0 0.0
    %1795 = vmatpush1.msra.mxu0 %v1678
    %1796 = vmatprep.subr.mxu0 0.0
    %1797 = vmatpush1.msra.mxu0 %v1681
    %1798 = vmatprep.subr.mxu0 0.0
    %1799 = vmatpush1.msra.mxu0 %v1684
    %1800 = vmatprep.subr.mxu0 0.0
    %1801 = vmatpush1.msra.mxu0 %v1687
    %1802 = vmatprep.subr.mxu0 0.0
    %1803 = vmatpush1.msra.mxu0 %v1690
    %1804 = vmatprep.subr.mxu0 0.0
    %1805 = vmatpush1.msra.mxu0 %v1693
    %1806 = vmatprep.subr.mxu0 0.0
    %1807 = vmatpush1.msra.mxu0 %v1696
    %1808 = vmatprep.subr.mxu0 0.0
    %1809 = vmatpush1.msra.mxu0 %v1699
    %1810 = vmatprep.subr.mxu0 0.0
    %1811 = vmatpush1.msra.mxu0 %v1702
    %1812 = vmatprep.subr.mxu0 0.0
    %1813 = vmatpush1.msra.mxu0 %v1705
    %1814 = vmatprep.subr.mxu0 0.0
    %1815 = vmatpush1.msra.mxu0 %v1708
    %1816 = vmatprep.subr.mxu0 0.0
    %1817 = vmatpush1.msra.mxu0 %v1711
    %1818 = vmatprep.subr.mxu0 0.0
    %1819 = vmatpush1.msra.mxu0 %v1714
    %1820 = vmatprep.subr.mxu0 0.0
    %1821 = vmatpush1.msra.mxu0 %v1717
    %1822 = vmatprep.subr.mxu0 0.0
    %1823 = vmatpush1.msra.mxu0 %v1720
    %1824 = vmatprep.subr.mxu0 0.0
    %1825 = vmatpush1.msra.mxu0 0.0
    %1826 = vmatprep.subr.mxu0 0.0
    %1827 = vmatpush1.msra.mxu0 0.0
    %1828 = vmatprep.subr.mxu0 0.0
    %1829 = vmatpush1.msra.mxu0 0.0
    %1830 = vmatprep.subr.mxu0 0.0
    %1831 = vmatpush1.msra.mxu0 0.0
    %1832 = vmatprep.subr.mxu0 0.0
    %1833 = vmatpush1.msra.mxu0 0.0
    %1834 = vmatprep.subr.mxu0 0.0
    %1835 = vmatpush1.msra.mxu0 0.0
    %1836 = vmatprep.subr.mxu0 0.0
    %1837 = vmatpush1.msra.mxu0 0.0
    %1838 = vmatprep.subr.mxu0 0.0
    %1839 = vmatpush1.msra.mxu0 0.0
    %1840 = vmatprep.subr.mxu0 0.0
    %1841 = vmatpush1.msra.mxu0 0.0
    %1842 = vmatprep.subr.mxu0 0.0
    %1843 = vmatpush1.msra.mxu0 0.0
    %1844 = vmatprep.subr.mxu0 0.0
    %1845 = vmatpush1.msra.mxu0 0.0
    %1846 = vmatprep.subr.mxu0 0.0
    %1847 = vmatpush1.msra.mxu0 0.0
    %1848 = vmatprep.subr.mxu0 0.0
    %1849 = vmatpush1.msra.mxu0 0.0
    %1850 = vmatprep.subr.mxu0 0.0
    %1851 = vmatpush1.msra.mxu0 0.0
    %1852 = vmatprep.subr.mxu0 0.0
    %1853 = vmatpush1.msra.mxu0 0.0
    %1854 = vmatprep.subr.mxu0 0.0
    %1855 = vmatpush1.msra.mxu0 0.0
    %1856 = vmatprep.mubr.f32.mxu0 0.0
    %1857 = vmatmul.mubr.f32.gmra.mrb[0].mxu0 %v1666
    %v1858 = vpop.f32.mrb[0].mxu0
    %v1859 = vadd.f32 %v586, %v1858
    %v1860 = vpop.f32.mrb[0].mxu0
    %1861 = vdwg.mxu0
    %v1862 = vadd.f32 %v1670, %v1788
    %v1863 = vxor.u32 %v1862, 2147483648
    %v1864 = vmul.f32 %v1863, 1.442695
    %v1865 = vpow.pop %v1864
    %v1866 = vadd.f32 %v1865, 1.0
    %v1867 = vrcp.pop %v1866
    %v1868 = vmul.f32 1.0, %v1867
    %v1869 = vadd.f32 %v1671, %v1790
    %v1870 = vxor.u32 %v1869, 2147483648
    %v1871 = vmul.f32 %v1870, 1.442695
    %v1872 = vpow.pop %v1871
    %v1873 = vadd.f32 %v1872, 1.0
    %v1874 = vrcp.pop %v1873
    %v1875 = vmul.f32 1.0, %v1874
    %v1876 = vmul.f32 %v1868, %v1859
    %v1877 = vadd.f32 %v1672, %v1876
    %v1878 = vtanh.pop %v1877
    %v1879 = vsub.f32 1.0, %v1875
    %v1880 = vmul.f32 %v1879, %v1878
    %v1881 = vmul.f32 %v1875, %v1666
    %v1882 = vadd.f32 %v1880, %v1881
    %s1883 = scalar_lea.vmem [#allocation3], 40
    %1884 = vst [vmem:[%s1883] sm:$0xff] %v1882
    %s1885 = scalar_lea.vmem [#allocation2], 144
    %v1886 = vld [vmem:[%s1885] sm:$0xff]
    %v1887 = vld [vmem:[%s1885 + $0x8] sm:$0xff]
    %v1888 = vld [vmem:[%s1885 + $0x10] sm:$0xff]
    %v1889 = vld [vmem:[#allocation10] sm:$0xff]
    %v1890 = vld [vmem:[#allocation10 + $0x8] sm:$0xff]
    %v1891 = vld [vmem:[#allocation10 + $0x10] sm:$0xff]
    %v1892 = vld [vmem:[#allocation10 + $0x18] sm:$0xff]
    %v1893 = vld [vmem:[#allocation10 + $0x20] sm:$0xff]
    %v1894 = vld [vmem:[#allocation10 + $0x28] sm:$0xff]
    %v1895 = vld [vmem:[#allocation10 + $0x30] sm:$0xff]
    %v1896 = vld [vmem:[#allocation10 + $0x38] sm:$0xff]
    %v1897 = vld [vmem:[#allocation10 + $0x40] sm:$0xff]
    %v1898 = vld [vmem:[#allocation10 + $0x48] sm:$0xff]
    %v1899 = vld [vmem:[#allocation10 + $0x50] sm:$0xff]
    %v1900 = vld [vmem:[#allocation10 + $0x58] sm:$0xff]
    %v1901 = vld [vmem:[#allocation10 + $0x60] sm:$0xff]
    %v1902 = vld [vmem:[#allocation10 + $0x68] sm:$0xff]
    %v1903 = vld [vmem:[#allocation10 + $0x70] sm:$0xff]
    %v1904 = vld [vmem:[#allocation10 + $0x78] sm:$0xff]
    %v1905 = vld [vmem:[#allocation10 + $0x80] sm:$0xff]
    %v1906 = vld [vmem:[#allocation10 + $0x88] sm:$0xff]
    %v1907 = vld [vmem:[#allocation10 + $0x90] sm:$0xff]
    %v1908 = vld [vmem:[#allocation10 + $0x98] sm:$0xff]
    %v1909 = vld [vmem:[#allocation10 + $0xa0] sm:$0xff]
    %v1910 = vld [vmem:[#allocation10 + $0xa8] sm:$0xff]
    %v1911 = vld [vmem:[#allocation10 + $0xb0] sm:$0xff]
    %v1912 = vld [vmem:[#allocation10 + $0xb8] sm:$0xff]
    %v1913 = vld [vmem:[#allocation10 + $0xc0] sm:$0xff]
    %v1914 = vld [vmem:[#allocation10 + $0xc8] sm:$0xff]
    %v1915 = vld [vmem:[#allocation10 + $0xd0] sm:$0xff]
    %v1916 = vld [vmem:[#allocation10 + $0xd8] sm:$0xff]
    %v1917 = vld [vmem:[#allocation10 + $0xe0] sm:$0xff]
    %v1918 = vld [vmem:[#allocation10 + $0xe8] sm:$0xff]
    %v1919 = vld [vmem:[#allocation10 + $0xf0] sm:$0xff]
    %v1920 = vld [vmem:[#allocation10 + $0xf8] sm:$0xff]
    %v1921 = vld [vmem:[#allocation10 + $0x100] sm:$0xff]
    %v1922 = vld [vmem:[#allocation10 + $0x108] sm:$0xff]
    %v1923 = vld [vmem:[#allocation10 + $0x110] sm:$0xff]
    %v1924 = vld [vmem:[#allocation10 + $0x118] sm:$0xff]
    %v1925 = vld [vmem:[#allocation10 + $0x120] sm:$0xff]
    %v1926 = vld [vmem:[#allocation10 + $0x128] sm:$0xff]
    %v1927 = vld [vmem:[#allocation10 + $0x130] sm:$0xff]
    %v1928 = vld [vmem:[#allocation10 + $0x138] sm:$0xff]
    %v1929 = vld [vmem:[#allocation10 + $0x140] sm:$0xff]
    %v1930 = vld [vmem:[#allocation10 + $0x148] sm:$0xff]
    %v1931 = vld [vmem:[#allocation10 + $0x150] sm:$0xff]
    %v1932 = vld [vmem:[#allocation10 + $0x158] sm:$0xff]
    %v1933 = vld [vmem:[#allocation10 + $0x160] sm:$0xff]
    %v1934 = vld [vmem:[#allocation10 + $0x168] sm:$0xff]
    %v1935 = vld [vmem:[#allocation10 + $0x170] sm:$0xff]
    %v1936 = vld [vmem:[#allocation10 + $0x178] sm:$0xff]
    %1937 = vmatprep.subr.mxu0 %v1890
    %1938 = vmatpush1.msra.mxu0 %v1889
    %1939 = vmatprep.subr.mxu0 %v1893
    %1940 = vmatpush1.msra.mxu0 %v1892
    %1941 = vmatprep.subr.mxu0 %v1896
    %1942 = vmatpush1.msra.mxu0 %v1895
    %1943 = vmatprep.subr.mxu0 %v1899
    %1944 = vmatpush1.msra.mxu0 %v1898
    %1945 = vmatprep.subr.mxu0 %v1902
    %1946 = vmatpush1.msra.mxu0 %v1901
    %1947 = vmatprep.subr.mxu0 %v1905
    %1948 = vmatpush1.msra.mxu0 %v1904
    %1949 = vmatprep.subr.mxu0 %v1908
    %1950 = vmatpush1.msra.mxu0 %v1907
    %1951 = vmatprep.subr.mxu0 %v1911
    %1952 = vmatpush1.msra.mxu0 %v1910
    %1953 = vmatprep.subr.mxu0 %v1914
    %1954 = vmatpush1.msra.mxu0 %v1913
    %1955 = vmatprep.subr.mxu0 %v1917
    %1956 = vmatpush1.msra.mxu0 %v1916
    %1957 = vmatprep.subr.mxu0 %v1920
    %1958 = vmatpush1.msra.mxu0 %v1919
    %1959 = vmatprep.subr.mxu0 %v1923
    %1960 = vmatpush1.msra.mxu0 %v1922
    %1961 = vmatprep.subr.mxu0 %v1926
    %1962 = vmatpush1.msra.mxu0 %v1925
    %1963 = vmatprep.subr.mxu0 %v1929
    %1964 = vmatpush1.msra.mxu0 %v1928
    %1965 = vmatprep.subr.mxu0 %v1932
    %1966 = vmatpush1.msra.mxu0 %v1931
    %1967 = vmatprep.subr.mxu0 %v1935
    %1968 = vmatpush1.msra.mxu0 %v1934
    %1969 = vmatprep.subr.mxu0 0.0
    %1970 = vmatpush1.msra.mxu0 0.0
    %1971 = vmatprep.subr.mxu0 0.0
    %1972 = vmatpush1.msra.mxu0 0.0
    %1973 = vmatprep.subr.mxu0 0.0
    %1974 = vmatpush1.msra.mxu0 0.0
    %1975 = vmatprep.subr.mxu0 0.0
    %1976 = vmatpush1.msra.mxu0 0.0
    %1977 = vmatprep.subr.mxu0 0.0
    %1978 = vmatpush1.msra.mxu0 0.0
    %1979 = vmatprep.subr.mxu0 0.0
    %1980 = vmatpush1.msra.mxu0 0.0
    %1981 = vmatprep.subr.mxu0 0.0
    %1982 = vmatpush1.msra.mxu0 0.0
    %1983 = vmatprep.subr.mxu0 0.0
    %1984 = vmatpush1.msra.mxu0 0.0
    %1985 = vmatprep.subr.mxu0 0.0
    %1986 = vmatpush1.msra.mxu0 0.0
    %1987 = vmatprep.subr.mxu0 0.0
    %1988 = vmatpush1.msra.mxu0 0.0
    %1989 = vmatprep.subr.mxu0 0.0
    %1990 = vmatpush1.msra.mxu0 0.0
    %1991 = vmatprep.subr.mxu0 0.0
    %1992 = vmatpush1.msra.mxu0 0.0
    %1993 = vmatprep.subr.mxu0 0.0
    %1994 = vmatpush1.msra.mxu0 0.0
    %1995 = vmatprep.subr.mxu0 0.0
    %1996 = vmatpush1.msra.mxu0 0.0
    %1997 = vmatprep.subr.mxu0 0.0
    %1998 = vmatpush1.msra.mxu0 0.0
    %1999 = vmatprep.subr.mxu0 0.0
    %2000 = vmatpush1.msra.mxu0 0.0
    %2001 = vmatprep.mubr.f32.mxu0 0.0
    %2002 = vmatmul.mubr.f32.gmra.mrb[0].mxu0 %v1882
    %v2003 = vpop.f32.mrb[0].mxu0
    %v2004 = vadd.f32 %v578, %v2003
    %v2005 = vpop.f32.mrb[0].mxu0
    %v2006 = vadd.f32 %v582, %v2005
    %2007 = vdwg.mxu0
    %2008 = vmatprep.subr.mxu0 0.0
    %2009 = vmatpush1.msra.mxu0 %v1891
    %2010 = vmatprep.subr.mxu0 0.0
    %2011 = vmatpush1.msra.mxu0 %v1894
    %2012 = vmatprep.subr.mxu0 0.0
    %2013 = vmatpush1.msra.mxu0 %v1897
    %2014 = vmatprep.subr.mxu0 0.0
    %2015 = vmatpush1.msra.mxu0 %v1900
    %2016 = vmatprep.subr.mxu0 0.0
    %2017 = vmatpush1.msra.mxu0 %v1903
    %2018 = vmatprep.subr.mxu0 0.0
    %2019 = vmatpush1.msra.mxu0 %v1906
    %2020 = vmatprep.subr.mxu0 0.0
    %2021 = vmatpush1.msra.mxu0 %v1909
    %2022 = vmatprep.subr.mxu0 0.0
    %2023 = vmatpush1.msra.mxu0 %v1912
    %2024 = vmatprep.subr.mxu0 0.0
    %2025 = vmatpush1.msra.mxu0 %v1915
    %2026 = vmatprep.subr.mxu0 0.0
    %2027 = vmatpush1.msra.mxu0 %v1918
    %2028 = vmatprep.subr.mxu0 0.0
    %2029 = vmatpush1.msra.mxu0 %v1921
    %2030 = vmatprep.subr.mxu0 0.0
    %2031 = vmatpush1.msra.mxu0 %v1924
    %2032 = vmatprep.subr.mxu0 0.0
    %2033 = vmatpush1.msra.mxu0 %v1927
    %2034 = vmatprep.subr.mxu0 0.0
    %2035 = vmatpush1.msra.mxu0 %v1930
    %2036 = vmatprep.subr.mxu0 0.0
    %2037 = vmatpush1.msra.mxu0 %v1933
    %2038 = vmatprep.subr.mxu0 0.0
    %2039 = vmatpush1.msra.mxu0 %v1936
    %2040 = vmatprep.subr.mxu0 0.0
    %2041 = vmatpush1.msra.mxu0 0.0
    %2042 = vmatprep.subr.mxu0 0.0
    %2043 = vmatpush1.msra.mxu0 0.0
    %2044 = vmatprep.subr.mxu0 0.0
    %2045 = vmatpush1.msra.mxu0 0.0
    %2046 = vmatprep.subr.mxu0 0.0
    %2047 = vmatpush1.msra.mxu0 0.0
    %2048 = vmatprep.subr.mxu0 0.0
    %2049 = vmatpush1.msra.mxu0 0.0
    %2050 = vmatprep.subr.mxu0 0.0
    %2051 = vmatpush1.msra.mxu0 0.0
    %2052 = vmatprep.subr.mxu0 0.0
    %2053 = vmatpush1.msra.mxu0 0.0
    %2054 = vmatprep.subr.mxu0 0.0
    %2055 = vmatpush1.msra.mxu0 0.0
    %2056 = vmatprep.subr.mxu0 0.0
    %2057 = vmatpush1.msra.mxu0 0.0
    %2058 = vmatprep.subr.mxu0 0.0
    %2059 = vmatpush1.msra.mxu0 0.0
    %2060 = vmatprep.subr.mxu0 0.0
    %2061 = vmatpush1.msra.mxu0 0.0
    %2062 = vmatprep.subr.mxu0 0.0
    %2063 = vmatpush1.msra.mxu0 0.0
    %2064 = vmatprep.subr.mxu0 0.0
    %2065 = vmatpush1.msra.mxu0 0.0
    %2066 = vmatprep.subr.mxu0 0.0
    %2067 = vmatpush1.msra.mxu0 0.0
    %2068 = vmatprep.subr.mxu0 0.0
    %2069 = vmatpush1.msra.mxu0 0.0
    %2070 = vmatprep.subr.mxu0 0.0
    %2071 = vmatpush1.msra.mxu0 0.0
    %2072 = vmatprep.mubr.f32.mxu0 0.0
    %2073 = vmatmul.mubr.f32.gmra.mrb[0].mxu0 %v1882
    %v2074 = vpop.f32.mrb[0].mxu0
    %v2075 = vadd.f32 %v586, %v2074
    %v2076 = vpop.f32.mrb[0].mxu0
    %2077 = vdwg.mxu0
    %v2078 = vadd.f32 %v1886, %v2004
    %v2079 = vxor.u32 %v2078, 2147483648
    %v2080 = vmul.f32 %v2079, 1.442695
    %v2081 = vpow.pop %v2080
    %v2082 = vadd.f32 %v2081, 1.0
    %v2083 = vrcp.pop %v2082
    %v2084 = vmul.f32 1.0, %v2083
    %v2085 = vadd.f32 %v1887, %v2006
    %v2086 = vxor.u32 %v2085, 2147483648
    %v2087 = vmul.f32 %v2086, 1.442695
    %v2088 = vpow.pop %v2087
    %v2089 = vadd.f32 %v2088, 1.0
    %v2090 = vrcp.pop %v2089
    %v2091 = vmul.f32 1.0, %v2090
    %v2092 = vmul.f32 %v2084, %v2075
    %v2093 = vadd.f32 %v1888, %v2092
    %v2094 = vtanh.pop %v2093
    %v2095 = vsub.f32 1.0, %v2091
    %v2096 = vmul.f32 %v2095, %v2094
    %v2097 = vmul.f32 %v2091, %v1882
    %v2098 = vadd.f32 %v2096, %v2097
    %s2099 = scalar_lea.vmem [#allocation3], 48
    %2100 = vst [vmem:[%s2099] sm:$0xff] %v2098
    %s2101 = scalar_lea.vmem [#allocation2], 168
    %v2102 = vld [vmem:[%s2101] sm:$0xff]
    %v2103 = vld [vmem:[%s2101 + $0x8] sm:$0xff]
    %v2104 = vld [vmem:[%s2101 + $0x10] sm:$0xff]
    %v2105 = vld [vmem:[#allocation10] sm:$0xff]
    %v2106 = vld [vmem:[#allocation10 + $0x8] sm:$0xff]
    %v2107 = vld [vmem:[#allocation10 + $0x10] sm:$0xff]
    %v2108 = vld [vmem:[#allocation10 + $0x18] sm:$0xff]
    %v2109 = vld [vmem:[#allocation10 + $0x20] sm:$0xff]
    %v2110 = vld [vmem:[#allocation10 + $0x28] sm:$0xff]
    %v2111 = vld [vmem:[#allocation10 + $0x30] sm:$0xff]
    %v2112 = vld [vmem:[#allocation10 + $0x38] sm:$0xff]
    %v2113 = vld [vmem:[#allocation10 + $0x40] sm:$0xff]
    %v2114 = vld [vmem:[#allocation10 + $0x48] sm:$0xff]
    %v2115 = vld [vmem:[#allocation10 + $0x50] sm:$0xff]
    %v2116 = vld [vmem:[#allocation10 + $0x58] sm:$0xff]
    %v2117 = vld [vmem:[#allocation10 + $0x60] sm:$0xff]
    %v2118 = vld [vmem:[#allocation10 + $0x68] sm:$0xff]
    %v2119 = vld [vmem:[#allocation10 + $0x70] sm:$0xff]
    %v2120 = vld [vmem:[#allocation10 + $0x78] sm:$0xff]
    %v2121 = vld [vmem:[#allocation10 + $0x80] sm:$0xff]
    %v2122 = vld [vmem:[#allocation10 + $0x88] sm:$0xff]
    %v2123 = vld [vmem:[#allocation10 + $0x90] sm:$0xff]
    %v2124 = vld [vmem:[#allocation10 + $0x98] sm:$0xff]
    %v2125 = vld [vmem:[#allocation10 + $0xa0] sm:$0xff]
    %v2126 = vld [vmem:[#allocation10 + $0xa8] sm:$0xff]
    %v2127 = vld [vmem:[#allocation10 + $0xb0] sm:$0xff]
    %v2128 = vld [vmem:[#allocation10 + $0xb8] sm:$0xff]
    %v2129 = vld [vmem:[#allocation10 + $0xc0] sm:$0xff]
    %v2130 = vld [vmem:[#allocation10 + $0xc8] sm:$0xff]
    %v2131 = vld [vmem:[#allocation10 + $0xd0] sm:$0xff]
    %v2132 = vld [vmem:[#allocation10 + $0xd8] sm:$0xff]
    %v2133 = vld [vmem:[#allocation10 + $0xe0] sm:$0xff]
    %v2134 = vld [vmem:[#allocation10 + $0xe8] sm:$0xff]
    %v2135 = vld [vmem:[#allocation10 + $0xf0] sm:$0xff]
    %v2136 = vld [vmem:[#allocation10 + $0xf8] sm:$0xff]
    %v2137 = vld [vmem:[#allocation10 + $0x100] sm:$0xff]
    %v2138 = vld [vmem:[#allocation10 + $0x108] sm:$0xff]
    %v2139 = vld [vmem:[#allocation10 + $0x110] sm:$0xff]
    %v2140 = vld [vmem:[#allocation10 + $0x118] sm:$0xff]
    %v2141 = vld [vmem:[#allocation10 + $0x120] sm:$0xff]
    %v2142 = vld [vmem:[#allocation10 + $0x128] sm:$0xff]
    %v2143 = vld [vmem:[#allocation10 + $0x130] sm:$0xff]
    %v2144 = vld [vmem:[#allocation10 + $0x138] sm:$0xff]
    %v2145 = vld [vmem:[#allocation10 + $0x140] sm:$0xff]
    %v2146 = vld [vmem:[#allocation10 + $0x148] sm:$0xff]
    %v2147 = vld [vmem:[#allocation10 + $0x150] sm:$0xff]
    %v2148 = vld [vmem:[#allocation10 + $0x158] sm:$0xff]
    %v2149 = vld [vmem:[#allocation10 + $0x160] sm:$0xff]
    %v2150 = vld [vmem:[#allocation10 + $0x168] sm:$0xff]
    %v2151 = vld [vmem:[#allocation10 + $0x170] sm:$0xff]
    %v2152 = vld [vmem:[#allocation10 + $0x178] sm:$0xff]
    %2153 = vmatprep.subr.mxu0 %v2106
    %2154 = vmatpush1.msra.mxu0 %v2105
    %2155 = vmatprep.subr.mxu0 %v2109
    %2156 = vmatpush1.msra.mxu0 %v2108
    %2157 = vmatprep.subr.mxu0 %v2112
    %2158 = vmatpush1.msra.mxu0 %v2111
    %2159 = vmatprep.subr.mxu0 %v2115
    %2160 = vmatpush1.msra.mxu0 %v2114
    %2161 = vmatprep.subr.mxu0 %v2118
    %2162 = vmatpush1.msra.mxu0 %v2117
    %2163 = vmatprep.subr.mxu0 %v2121
    %2164 = vmatpush1.msra.mxu0 %v2120
    %2165 = vmatprep.subr.mxu0 %v2124
    %2166 = vmatpush1.msra.mxu0 %v2123
    %2167 = vmatprep.subr.mxu0 %v2127
    %2168 = vmatpush1.msra.mxu0 %v2126
    %2169 = vmatprep.subr.mxu0 %v2130
    %2170 = vmatpush1.msra.mxu0 %v2129
    %2171 = vmatprep.subr.mxu0 %v2133
    %2172 = vmatpush1.msra.mxu0 %v2132
    %2173 = vmatprep.subr.mxu0 %v2136
    %2174 = vmatpush1.msra.mxu0 %v2135
    %2175 = vmatprep.subr.mxu0 %v2139
    %2176 = vmatpush1.msra.mxu0 %v2138
    %2177 = vmatprep.subr.mxu0 %v2142
    %2178 = vmatpush1.msra.mxu0 %v2141
    %2179 = vmatprep.subr.mxu0 %v2145
    %2180 = vmatpush1.msra.mxu0 %v2144
    %2181 = vmatprep.subr.mxu0 %v2148
    %2182 = vmatpush1.msra.mxu0 %v2147
    %2183 = vmatprep.subr.mxu0 %v2151
    %2184 = vmatpush1.msra.mxu0 %v2150
    %2185 = vmatprep.subr.mxu0 0.0
    %2186 = vmatpush1.msra.mxu0 0.0
    %2187 = vmatprep.subr.mxu0 0.0
    %2188 = vmatpush1.msra.mxu0 0.0
    %2189 = vmatprep.subr.mxu0 0.0
    %2190 = vmatpush1.msra.mxu0 0.0
    %2191 = vmatprep.subr.mxu0 0.0
    %2192 = vmatpush1.msra.mxu0 0.0
    %2193 = vmatprep.subr.mxu0 0.0
    %2194 = vmatpush1.msra.mxu0 0.0
    %2195 = vmatprep.subr.mxu0 0.0
    %2196 = vmatpush1.msra.mxu0 0.0
    %2197 = vmatprep.subr.mxu0 0.0
    %2198 = vmatpush1.msra.mxu0 0.0
    %2199 = vmatprep.subr.mxu0 0.0
    %2200 = vmatpush1.msra.mxu0 0.0
    %2201 = vmatprep.subr.mxu0 0.0
    %2202 = vmatpush1.msra.mxu0 0.0
    %2203 = vmatprep.subr.mxu0 0.0
    %2204 = vmatpush1.msra.mxu0 0.0
    %2205 = vmatprep.subr.mxu0 0.0
    %2206 = vmatpush1.msra.mxu0 0.0
    %2207 = vmatprep.subr.mxu0 0.0
    %2208 = vmatpush1.msra.mxu0 0.0
    %2209 = vmatprep.subr.mxu0 0.0
    %2210 = vmatpush1.msra.mxu0 0.0
    %2211 = vmatprep.subr.mxu0 0.0
    %2212 = vmatpush1.msra.mxu0 0.0
    %2213 = vmatprep.subr.mxu0 0.0
    %2214 = vmatpush1.msra.mxu0 0.0
    %2215 = vmatprep.subr.mxu0 0.0
    %2216 = vmatpush1.msra.mxu0 0.0
    %2217 = vmatprep.mubr.f32.mxu0 0.0
    %2218 = vmatmul.mubr.f32.gmra.mrb[0].mxu0 %v2098
    %v2219 = vpop.f32.mrb[0].mxu0
    %v2220 = vadd.f32 %v578, %v2219
    %v2221 = vpop.f32.mrb[0].mxu0
    %v2222 = vadd.f32 %v582, %v2221
    %2223 = vdwg.mxu0
    %2224 = vmatprep.subr.mxu0 0.0
    %2225 = vmatpush1.msra.mxu0 %v2107
    %2226 = vmatprep.subr.mxu0 0.0
    %2227 = vmatpush1.msra.mxu0 %v2110
    %2228 = vmatprep.subr.mxu0 0.0
    %2229 = vmatpush1.msra.mxu0 %v2113
    %2230 = vmatprep.subr.mxu0 0.0
    %2231 = vmatpush1.msra.mxu0 %v2116
    %2232 = vmatprep.subr.mxu0 0.0
    %2233 = vmatpush1.msra.mxu0 %v2119
    %2234 = vmatprep.subr.mxu0 0.0
    %2235 = vmatpush1.msra.mxu0 %v2122
    %2236 = vmatprep.subr.mxu0 0.0
    %2237 = vmatpush1.msra.mxu0 %v2125
    %2238 = vmatprep.subr.mxu0 0.0
    %2239 = vmatpush1.msra.mxu0 %v2128
    %2240 = vmatprep.subr.mxu0 0.0
    %2241 = vmatpush1.msra.mxu0 %v2131
    %2242 = vmatprep.subr.mxu0 0.0
    %2243 = vmatpush1.msra.mxu0 %v2134
    %2244 = vmatprep.subr.mxu0 0.0
    %2245 = vmatpush1.msra.mxu0 %v2137
    %2246 = vmatprep.subr.mxu0 0.0
    %2247 = vmatpush1.msra.mxu0 %v2140
    %2248 = vmatprep.subr.mxu0 0.0
    %2249 = vmatpush1.msra.mxu0 %v2143
    %2250 = vmatprep.subr.mxu0 0.0
    %2251 = vmatpush1.msra.mxu0 %v2146
    %2252 = vmatprep.subr.mxu0 0.0
    %2253 = vmatpush1.msra.mxu0 %v2149
    %2254 = vmatprep.subr.mxu0 0.0
    %2255 = vmatpush1.msra.mxu0 %v2152
    %2256 = vmatprep.subr.mxu0 0.0
    %2257 = vmatpush1.msra.mxu0 0.0
    %2258 = vmatprep.subr.mxu0 0.0
    %2259 = vmatpush1.msra.mxu0 0.0
    %2260 = vmatprep.subr.mxu0 0.0
    %2261 = vmatpush1.msra.mxu0 0.0
    %2262 = vmatprep.subr.mxu0 0.0
    %2263 = vmatpush1.msra.mxu0 0.0
    %2264 = vmatprep.subr.mxu0 0.0
    %2265 = vmatpush1.msra.mxu0 0.0
    %2266 = vmatprep.subr.mxu0 0.0
    %2267 = vmatpush1.msra.mxu0 0.0
    %2268 = vmatprep.subr.mxu0 0.0
    %2269 = vmatpush1.msra.mxu0 0.0
    %2270 = vmatprep.subr.mxu0 0.0
    %2271 = vmatpush1.msra.mxu0 0.0
    %2272 = vmatprep.subr.mxu0 0.0
    %2273 = vmatpush1.msra.mxu0 0.0
    %2274 = vmatprep.subr.mxu0 0.0
    %2275 = vmatpush1.msra.mxu0 0.0
    %2276 = vmatprep.subr.mxu0 0.0
    %2277 = vmatpush1.msra.mxu0 0.0
    %2278 = vmatprep.subr.mxu0 0.0
    %2279 = vmatpush1.msra.mxu0 0.0
    %2280 = vmatprep.subr.mxu0 0.0
    %2281 = vmatpush1.msra.mxu0 0.0
    %2282 = vmatprep.subr.mxu0 0.0
    %2283 = vmatpush1.msra.mxu0 0.0
    %2284 = vmatprep.subr.mxu0 0.0
    %2285 = vmatpush1.msra.mxu0 0.0
    %2286 = vmatprep.subr.mxu0 0.0
    %2287 = vmatpush1.msra.mxu0 0.0
    %2288 = vmatprep.mubr.f32.mxu0 0.0
    %2289 = vmatmul.mubr.f32.gmra.mrb[0].mxu0 %v2098
    %v2290 = vpop.f32.mrb[0].mxu0
    %v2291 = vadd.f32 %v586, %v2290
    %v2292 = vpop.f32.mrb[0].mxu0
    %2293 = vdwg.mxu0
    %v2294 = vadd.f32 %v2102, %v2220
    %v2295 = vxor.u32 %v2294, 2147483648
    %v2296 = vmul.f32 %v2295, 1.442695
    %v2297 = vpow.pop %v2296
    %v2298 = vadd.f32 %v2297, 1.0
    %v2299 = vrcp.pop %v2298
    %v2300 = vmul.f32 1.0, %v2299
    %v2301 = vadd.f32 %v2103, %v2222
    %v2302 = vxor.u32 %v2301, 2147483648
    %v2303 = vmul.f32 %v2302, 1.442695
    %v2304 = vpow.pop %v2303
    %v2305 = vadd.f32 %v2304, 1.0
    %v2306 = vrcp.pop %v2305
    %v2307 = vmul.f32 1.0, %v2306
    %v2308 = vmul.f32 %v2300, %v2291
    %v2309 = vadd.f32 %v2104, %v2308
    %v2310 = vtanh.pop %v2309
    %v2311 = vsub.f32 1.0, %v2307
    %v2312 = vmul.f32 %v2311, %v2310
    %v2313 = vmul.f32 %v2307, %v2098
    %v2314 = vadd.f32 %v2312, %v2313
    %s2315 = scalar_lea.vmem [#allocation3], 56
    %2316 = vst [vmem:[%s2315] sm:$0xff] %v2314
    %2317 = vst [vmem:[#allocation14] sm:$0xff] %v2314
    %v2318 = vld [vmem:[#allocation3] sm:$0xff]
    %v2319 = vld [vmem:[#allocation3 + $0x8] sm:$0xff]
    %v2320 = vld [vmem:[#allocation3 + $0x10] sm:$0xff]
    %v2321 = vld [vmem:[#allocation3 + $0x18] sm:$0xff]
    %v2322 = vld [vmem:[#allocation3 + $0x20] sm:$0xff]
    %v2323 = vld [vmem:[#allocation3 + $0x28] sm:$0xff]
    %v2324 = vld [vmem:[#allocation3 + $0x30] sm:$0xff]
    %v2325 = vld [vmem:[#allocation3 + $0x38] sm:$0xff]
    %v2326 = vld [vmem:[#allocation12] sm:$0xff]
    %v2327 = vld [vmem:[#allocation12 + $0x8] sm:$0xff]
    %v2328 = vld [vmem:[#allocation12 + $0x10] sm:$0xff]
    %v2329 = vld [vmem:[#allocation12 + $0x18] sm:$0xff]
    %v2330 = vld [vmem:[#allocation12 + $0x20] sm:$0xff]
    %v2331 = vld [vmem:[#allocation12 + $0x28] sm:$0xff]
    %v2332 = vld [vmem:[#allocation12 + $0x30] sm:$0xff]
    %v2333 = vld [vmem:[#allocation12 + $0x38] sm:$0xff]
    %v2334 = vld [vmem:[#allocation12 + $0x40] sm:$0xff]
    %v2335 = vld [vmem:[#allocation12 + $0x48] sm:$0xff]
    %v2336 = vld [vmem:[#allocation12 + $0x50] sm:$0xff]
    %v2337 = vld [vmem:[#allocation12 + $0x58] sm:$0xff]
    %v2338 = vld [vmem:[#allocation12 + $0x60] sm:$0xff]
    %v2339 = vld [vmem:[#allocation12 + $0x68] sm:$0xff]
    %v2340 = vld [vmem:[#allocation12 + $0x70] sm:$0xff]
    %v2341 = vld [vmem:[#allocation12 + $0x78] sm:$0xff]
    %v2342 = vld [vmem:[%s9] sm:$0x1]
    %v2344 = vlaneseq
    %v2345 = vshrl.u32 %v2344, 7
    %v2346 = vsub.s32 0, %v2345
    %v2347 = vrot.slane %v2342, %v2346
    %2349 = vmatprep.subr.mxu0 0.0
    %2350 = vmatpush1.msra.mxu0 %v2326
    %2351 = vmatprep.subr.mxu0 0.0
    %2352 = vmatpush1.msra.mxu0 %v2327
    %2353 = vmatprep.subr.mxu0 0.0
    %2354 = vmatpush1.msra.mxu0 %v2328
    %2355 = vmatprep.subr.mxu0 0.0
    %2356 = vmatpush1.msra.mxu0 %v2329
    %2357 = vmatprep.subr.mxu0 0.0
    %2358 = vmatpush1.msra.mxu0 %v2330
    %2359 = vmatprep.subr.mxu0 0.0
    %2360 = vmatpush1.msra.mxu0 %v2331
    %2361 = vmatprep.subr.mxu0 0.0
    %2362 = vmatpush1.msra.mxu0 %v2332
    %2363 = vmatprep.subr.mxu0 0.0
    %2364 = vmatpush1.msra.mxu0 %v2333
    %2365 = vmatprep.subr.mxu0 0.0
    %2366 = vmatpush1.msra.mxu0 %v2334
    %2367 = vmatprep.subr.mxu0 0.0
    %2368 = vmatpush1.msra.mxu0 %v2335
    %2369 = vmatprep.subr.mxu0 0.0
    %2370 = vmatpush1.msra.mxu0 %v2336
    %2371 = vmatprep.subr.mxu0 0.0
    %2372 = vmatpush1.msra.mxu0 %v2337
    %2373 = vmatprep.subr.mxu0 0.0
    %2374 = vmatpush1.msra.mxu0 %v2338
    %2375 = vmatprep.subr.mxu0 0.0
    %2376 = vmatpush1.msra.mxu0 %v2339
    %2377 = vmatprep.subr.mxu0 0.0
    %2378 = vmatpush1.msra.mxu0 %v2340
    %2379 = vmatprep.subr.mxu0 0.0
    %2380 = vmatpush1.msra.mxu0 %v2341
    %2381 = vmatprep.subr.mxu0 0.0
    %2382 = vmatpush1.msra.mxu0 0.0
    %2383 = vmatprep.subr.mxu0 0.0
    %2384 = vmatpush1.msra.mxu0 0.0
    %2385 = vmatprep.subr.mxu0 0.0
    %2386 = vmatpush1.msra.mxu0 0.0
    %2387 = vmatprep.subr.mxu0 0.0
    %2388 = vmatpush1.msra.mxu0 0.0
    %2389 = vmatprep.subr.mxu0 0.0
    %2390 = vmatpush1.msra.mxu0 0.0
    %2391 = vmatprep.subr.mxu0 0.0
    %2392 = vmatpush1.msra.mxu0 0.0
    %2393 = vmatprep.subr.mxu0 0.0
    %2394 = vmatpush1.msra.mxu0 0.0
    %2395 = vmatprep.subr.mxu0 0.0
    %2396 = vmatpush1.msra.mxu0 0.0
    %2397 = vmatprep.subr.mxu0 0.0
    %2398 = vmatpush1.msra.mxu0 0.0
    %2399 = vmatprep.subr.mxu0 0.0
    %2400 = vmatpush1.msra.mxu0 0.0
    %2401 = vmatprep.subr.mxu0 0.0
    %2402 = vmatpush1.msra.mxu0 0.0
    %2403 = vmatprep.subr.mxu0 0.0
    %2404 = vmatpush1.msra.mxu0 0.0
    %2405 = vmatprep.subr.mxu0 0.0
    %2406 = vmatpush1.msra.mxu0 0.0
    %2407 = vmatprep.subr.mxu0 0.0
    %2408 = vmatpush1.msra.mxu0 0.0
    %2409 = vmatprep.subr.mxu0 0.0
    %2410 = vmatpush1.msra.mxu0 0.0
    %2411 = vmatprep.subr.mxu0 0.0
    %2412 = vmatpush1.msra.mxu0 0.0
    %2413 = vmatprep.mubr.f32.mxu0 0.0
    %2414 = vmatmul.mubr.f32.gmra.mrb[0].mxu0 %v2318
    %v2415 = vpop.f32.mrb[0].mxu0
    %v2416 = vadd.f32 %v2347, %v2415
    %v2417 = vpop.f32.mrb[0].mxu0
    %2418 = vmatprep.mubr.f32.mxu0 0.0
    %2419 = vmatmul.mubr.f32.gmra.mrb[0].mxu0 %v2319
    %v2420 = vpop.f32.mrb[0].mxu0
    %v2421 = vadd.f32 %v2347, %v2420
    %v2422 = vpop.f32.mrb[0].mxu0
    %2423 = vmatprep.mubr.f32.mxu0 0.0
    %2424 = vmatmul.mubr.f32.gmra.mrb[0].mxu0 %v2320
    %v2425 = vpop.f32.mrb[0].mxu0
    %v2426 = vadd.f32 %v2347, %v2425
    %v2427 = vpop.f32.mrb[0].mxu0
    %2428 = vmatprep.mubr.f32.mxu0 0.0
    %2429 = vmatmul.mubr.f32.gmra.mrb[0].mxu0 %v2321
    %v2430 = vpop.f32.mrb[0].mxu0
    %v2431 = vadd.f32 %v2347, %v2430
    %v2432 = vpop.f32.mrb[0].mxu0
    %2433 = vmatprep.mubr.f32.mxu0 0.0
    %2434 = vmatmul.mubr.f32.gmra.mrb[0].mxu0 %v2322
    %v2435 = vpop.f32.mrb[0].mxu0
    %v2436 = vadd.f32 %v2347, %v2435
    %v2437 = vpop.f32.mrb[0].mxu0
    %2438 = vmatprep.mubr.f32.mxu0 0.0
    %2439 = vmatmul.mubr.f32.gmra.mrb[0].mxu0 %v2323
    %v2440 = vpop.f32.mrb[0].mxu0
    %v2441 = vadd.f32 %v2347, %v2440
    %v2442 = vpop.f32.mrb[0].mxu0
    %2443 = vmatprep.mubr.f32.mxu0 0.0
    %2444 = vmatmul.mubr.f32.gmra.mrb[0].mxu0 %v2324
    %v2445 = vpop.f32.mrb[0].mxu0
    %v2446 = vadd.f32 %v2347, %v2445
    %v2447 = vpop.f32.mrb[0].mxu0
    %2448 = vmatprep.mubr.f32.mxu0 0.0
    %2449 = vmatmul.mubr.f32.gmra.mrb[0].mxu0 %v2325
    %v2450 = vpop.f32.mrb[0].mxu0
    %v2451 = vadd.f32 %v2347, %v2450
    %v2452 = vpop.f32.mrb[0].mxu0
    %2453 = vdwg.mxu0
    %2454 = vst [vmem:[#allocation13] sm:$0xff] %v2416
    %2455 = vst [vmem:[#allocation13 + $0x8] sm:$0xff] %v2421
    %2456 = vst [vmem:[#allocation13 + $0x10] sm:$0xff] %v2426
    %2457 = vst [vmem:[#allocation13 + $0x18] sm:$0xff] %v2431
    %2458 = vst [vmem:[#allocation13 + $0x20] sm:$0xff] %v2436
    %2459 = vst [vmem:[#allocation13 + $0x28] sm:$0xff] %v2441
    %2460 = vst [vmem:[#allocation13 + $0x30] sm:$0xff] %v2446
    %2461 = vst [vmem:[#allocation13 + $0x38] sm:$0xff] %v2451
    // Predicated region
    $region66: #{tpu_custom_call.1} parent=1 // pred_check
      _
    $region67: #{tpu_custom_call.1} parent=1 // pred_check_branch
      %2463 = sbr.rel (0) target = $region69
    $region68: #{tpu_custom_call.1} parent=1 // pred_region
      %s2465 = ssub.s32 1024, 1024
      %2466 = vsyncadd [#allocation6], %s2465
      %s2467 = sshll.u32 [#allocation13], 4
      %s2468 = int_to_ptr.vmem [resolvable:$true] %s2467
      %2473 = dma.vmem_to_hbm [thread:$0]  %s2468, 1024, %s10, [#allocation6], 128, 128, 8
    $region69: #{tpu_custom_call.1} parent=1 // pred_fallthru
      _
    // Predicated region
    $region70: #{tpu_custom_call.1} parent=1 // pred_check
      _
    $region71: #{tpu_custom_call.1} parent=1 // pred_check_branch
      %2475 = sbr.rel (0) target = $region73
    $region72: #{tpu_custom_call.1} parent=1 // pred_region
      %s2477 = ssub.s32 128, 128
      %2478 = vsyncadd [#allocation15], %s2477
      %s2480 = sshll.u32 [#allocation14], 4
      %s2481 = int_to_ptr.vmem [resolvable:$true] %s2480
      %2483 = dma.vmem_to_hbm [thread:$0]  %s2481, 128, %s11, [#allocation15]
    $region73: #{tpu_custom_call.1} parent=1 // pred_fallthru
      _
    // Predicated region
    $region74: #{tpu_custom_call.1} parent=1 // pred_check
      _
    $region75: #{tpu_custom_call.1} parent=1 // pred_check_branch
      %2485 = sbr.rel (0) target = $region77
    $region76: #{tpu_custom_call.1} parent=1 // pred_region
      %2486 = dma.done [#allocation6], 1024
    $region77: #{tpu_custom_call.1} parent=1 // pred_fallthru
      _
    // Predicated region
    $region78: #{tpu_custom_call.1} parent=1 // pred_check
      _
    $region79: #{tpu_custom_call.1} parent=1 // pred_check_branch
      %2488 = sbr.rel (0) target = $region81
    $region80: #{tpu_custom_call.1} parent=1 // pred_region
      %2489 = dma.done [#allocation15], 128
    $region81: #{tpu_custom_call.1} parent=1 // pred_fallthru
      _
    %2490 = vsyncpa [#allocation5], 1
    %2491 = vsyncpa [#allocation8], 1
    %2492 = vsyncpa [#allocation11], 1
    %2493 = vsyncpa [#allocation6], 1
    %2494 = vsyncpa [#allocation15], 1

</llo_original>
